<compile_context>
chip_gen: v5e
topology: v5e:2x2
jax: 0.10.0
libtpu: 0.0.40
codegen_flags: <defaults>
</compile_context>

<pallas_src>
import numpy as np
import jax
import jax.numpy as jnp
from jax.experimental import pallas as pl
from jax.experimental.pallas import tpu as pltpu

# ---------------- small synthetic config (same structure as GPTNeoConfig) ----
VOCAB = 256          # vocab_size (small synthetic)
MAX_POS = 32         # max_position_embeddings
HIDDEN = 64          # hidden_size
N_LAYERS = 2         # num_layers
N_HEADS = 4          # num_heads
HEAD_DIM = HIDDEN // N_HEADS
INTER = 128          # intermediate_size
LN_EPS = 1e-5
B, S = 2, 8

_MASK_VALUE = float(np.finfo(np.float32).min)


# ---------------- in-kernel helpers ------------------------------------------
def _layer_norm_custom(x, w, b):
    # matches the reference layer_norm: (x - mean) / (std + 1e-5) * w + b  (ddof=0)
    mean = jnp.mean(x, axis=-1, keepdims=True)
    var = jnp.mean((x - mean) ** 2, axis=-1, keepdims=True)
    return (x - mean) / (jnp.sqrt(var) + 1e-5) * w + b


def _gelu_tanh(x):
    # matches reference gelu: 0.5*x*(1+tanh(0.797885*(x+0.044715*x^3)))
    return 0.5 * x * (1.0 + jnp.tanh(0.797885 * (x + 0.044715 * x ** 3)))


# ---------------- fused per-batch forward kernel ------------------------------
def gptneo_forward_kernel(x_ref, mask_ref,
                          ln1w_ref, ln1b_ref, wqkv_ref, wo_ref, bo_ref,
                          ln2w_ref, ln2b_ref, wfc_ref, bfc_ref, wproj_ref, bproj_ref,
                          lnfw_ref, lnfb_ref, wlm_ref,
                          out_ref):
    x = x_ref[...]                                   # (S, H) f32 residual stream
    # combined causal + padding additive mask, broadcast over heads ONCE (hoisted)
    mask_h = jnp.broadcast_to(mask_ref[...][None, :, :], (N_HEADS, S, S))

    # TODO(synk): replace the unrolled layer loop with a layer grid axis / fori_loop
    #             over the stacked weight refs once N_LAYERS grows beyond a few.
    for l in range(N_LAYERS):
        # ---- LN1 + attention ----
        x_ln1 = _layer_norm_custom(x, ln1w_ref[l], ln1b_ref[l]).astype(jnp.bfloat16)

        # Fused, head-batched QKV: one batched MXU contraction, q/k/v come out
        # already split per head -> no lane-offset slicing / concatenation needed.
        xb = jnp.broadcast_to(x_ln1[None, :, :], (3 * N_HEADS, S, HIDDEN))
        qkv = jnp.einsum('gsh,ghd->gsd', xb, wqkv_ref[l],
                         preferred_element_type=jnp.float32)        # (3*NH, S, HD)
        q = qkv[:N_HEADS]                                           # (NH, S, HD)
        k = qkv[N_HEADS:2 * N_HEADS]
        v = qkv[2 * N_HEADS:]

        # batched scores / context over heads (no 1/sqrt(hd) scale: reference omits it)
        scores = jnp.einsum('hqd,hkd->hqk',
                            q.astype(jnp.bfloat16), k.astype(jnp.bfloat16),
                            preferred_element_type=jnp.float32)     # (NH, S, S)
        scores = scores + mask_h
        scores = scores - jnp.max(scores, axis=-1, keepdims=True)
        p = jnp.exp(scores)
        p = p * pl.reciprocal(jnp.sum(p, axis=-1, keepdims=True), approx=True)
        ctx = jnp.einsum('hqk,hkd->hqd',
                         p.astype(jnp.bfloat16), v.astype(jnp.bfloat16),
                         preferred_element_type=jnp.float32)        # (NH, S, HD)

        # out-projection consumes the head-batched layout directly:
        # sum_h ctx_h @ Wo_h  ==  concat_heads(ctx) @ Wo.T   -> no head reassembly
        attn = jnp.einsum('hqd,hdo->hqo', ctx.astype(jnp.bfloat16), wo_ref[l],
                          preferred_element_type=jnp.float32).sum(axis=0)
        attn = attn + bo_ref[l]
        x = x + attn

        # ---- LN2 + MLP ----
        x_ln2 = _layer_norm_custom(x, ln2w_ref[l], ln2b_ref[l]).astype(jnp.bfloat16)
        h1 = jnp.dot(x_ln2, wfc_ref[l], preferred_element_type=jnp.float32) + bfc_ref[l]
        h1 = _gelu_tanh(h1)
        h2 = jnp.dot(h1.astype(jnp.bfloat16), wproj_ref[l],
                     preferred_element_type=jnp.float32) + bproj_ref[l]
        x = x + h2

    # ---- final nn.LayerNorm ((x-mean)/sqrt(var+eps)) + LM head ----
    mean = jnp.mean(x, axis=-1, keepdims=True)
    var = jnp.mean((x - mean) ** 2, axis=-1, keepdims=True)
    hf = (x - mean) * jax.lax.rsqrt(var + LN_EPS) * lnfw_ref[...] + lnfb_ref[...]
    # TODO(synk): tile the LM head over a vocab grid axis once VOCAB >> 256.
    out_ref[...] = jnp.dot(hf.astype(jnp.bfloat16), wlm_ref[...],
                           preferred_element_type=jnp.float32)      # (S, VOCAB) lane-dense


# ---------------- wrapper ------------------------------------------------------
def gptneo_pallas_forward(input_ids, attention_mask, params):
    (wte, wpe, ln1w, ln1b, wqkv, wo3, bo, ln2w, ln2b,
     wfc, bfc, wproj, bproj, lnf_w, lnf_b, lm_wt) = params
    Bsz, Slen = input_ids.shape

    # embedding gather is plain-JAX glue (data-dependent)
    pos = jnp.arange(Slen, dtype=jnp.int32)
    hidden = wte[input_ids] + wpe[pos][None, :, :]                  # (B, S, H) f32

    # combined causal + padding additive mask (B, S, S); avoids MIN+MIN -> -inf hazard
    causal = jnp.tril(jnp.ones((Slen, Slen), dtype=bool))
    keep = causal[None, :, :] & (attention_mask[:, None, :] > 0.5)
    mask3 = jnp.where(keep, 0.0, _MASK_VALUE).astype(jnp.float32)

    weights = (ln1w, ln1b, wqkv, wo3, bo, ln2w, ln2b,
               wfc, bfc, wproj, bproj, lnf_w, lnf_b, lm_wt)

    # weights: whole-array blocks with constant index maps -> fetched once, VMEM-resident
    def full_spec(a):
        nd = a.ndim
        return pl.BlockSpec(tuple(a.shape), lambda b, _nd=nd: (0,) * _nd)

    # advisory cost estimate for XLA scheduling
    flops = Bsz * Slen * (
        N_LAYERS * (2 * HIDDEN * 3 * HIDDEN          # QKV
                    + 4 * Slen * HIDDEN              # scores + ctx
                    + 2 * HIDDEN * HIDDEN            # out proj
                    + 4 * HIDDEN * INTER)            # fc + proj
        + 2 * HIDDEN * VOCAB)                        # LM head
    transcendentals = Bsz * Slen * N_LAYERS * (INTER + N_HEADS * Slen)
    bytes_accessed = (sum(int(np.prod(a.shape)) * a.dtype.itemsize
                          for a in (hidden, mask3) + weights)
                      + Bsz * Slen * VOCAB * 4)

    logits = pl.pallas_call(
        gptneo_forward_kernel,
        out_shape=jax.ShapeDtypeStruct((Bsz, Slen, VOCAB), jnp.float32),
        grid=(Bsz,),
        in_specs=[pl.BlockSpec((None, Slen, HIDDEN), lambda b: (b, 0, 0)),   # hidden
                  pl.BlockSpec((None, Slen, Slen), lambda b: (b, 0, 0)),     # mask
                  *[full_spec(w) for w in weights]],
        out_specs=pl.BlockSpec((None, Slen, VOCAB), lambda b: (b, 0, 0)),
        compiler_params=pltpu.CompilerParams(
            dimension_semantics=("parallel",),          # lets v7x use both TensorCores
            vmem_limit_bytes=32 * 1024 * 1024),
        cost_estimate=pl.CostEstimate(flops=flops,
                                      transcendentals=transcendentals,
                                      bytes_accessed=bytes_accessed),
    )(hidden, mask3, *weights)

    return logits


# ---------------- parameter construction (deterministic) ---------------------
def make_params(key):
    keys = iter(jax.random.split(key, N_LAYERS * 6 + 3))
    nrm = lambda shape: jax.random.normal(next(keys), shape, dtype=jnp.float32)

    wte = nrm((VOCAB, HIDDEN))            # nn.Embedding weights ~ N(0, 1)
    wpe = nrm((MAX_POS, HIDDEN))

    ln1w = jnp.ones((N_LAYERS, 1, HIDDEN), jnp.float32)
    ln1b = jnp.zeros((N_LAYERS, 1, HIDDEN), jnp.float32)
    ln2w = jnp.ones((N_LAYERS, 1, HIDDEN), jnp.float32)
    ln2b = jnp.zeros((N_LAYERS, 1, HIDDEN), jnp.float32)
    bo = jnp.zeros((N_LAYERS, 1, HIDDEN), jnp.float32)
    bfc = jnp.zeros((N_LAYERS, 1, INTER), jnp.float32)
    bproj = jnp.zeros((N_LAYERS, 1, HIDDEN), jnp.float32)

    # reference stores [out, in]; kernel wants per-head [in, head_dim] stacks.
    def to_heads_in_out(w):                       # (H,H)[out,in] -> (NH, H_in, HD)
        return jnp.transpose(w.T.reshape(HIDDEN, N_HEADS, HEAD_DIM), (1, 0, 2))

    wqkv_l, wo_l, wfc_l, wproj_l = [], [], [], []
    for _ in range(N_LAYERS):
        wq = nrm((HIDDEN, HIDDEN))
        wk = nrm((HIDDEN, HIDDEN))
        wv = nrm((HIDDEN, HIDDEN))
        wo_ = nrm((HIDDEN, HIDDEN))
        wfc_ = nrm((INTER, HIDDEN))
        wproj_ = nrm((HIDDEN, INTER))
        # fused, head-batched QKV weight: (3*NH, H, HD), group-major [Q heads|K heads|V heads]
        wqkv_l.append(jnp.concatenate([to_heads_in_out(wq),
                                       to_heads_in_out(wk),
                                       to_heads_in_out(wv)], axis=0))
        # out-proj split per head: (NH, HD, H)  (== Wo.T grouped by input head)
        wo_l.append(wo_.T.reshape(N_HEADS, HEAD_DIM, HIDDEN))
        wfc_l.append(wfc_.T)                                        # (H, INTER)
        wproj_l.append(wproj_.T)                                    # (INTER, H)

    # matmul weights in bf16 (MXU-native); LN params / biases stay f32
    wqkv = jnp.stack(wqkv_l).astype(jnp.bfloat16)     # (L, 3*NH, H, HD)
    wo3 = jnp.stack(wo_l).astype(jnp.bfloat16)        # (L, NH, HD, H)
    wfc = jnp.stack(wfc_l).astype(jnp.bfloat16)       # (L, H, INTER)
    wproj = jnp.stack(wproj_l).astype(jnp.bfloat16)   # (L, INTER, H)

    lnf_w = jnp.ones((1, HIDDEN), jnp.float32)
    lnf_b = jnp.zeros((1, HIDDEN), jnp.float32)
    # nn.Linear default init is uniform(+-1/sqrt(H)); deterministic small normal instead.
    lm_wt = ((nrm((VOCAB, HIDDEN)) * (1.0 / np.sqrt(HIDDEN))).T).astype(jnp.bfloat16)  # (H, V)

    return (wte, wpe, ln1w, ln1b, wqkv, wo3, bo, ln2w, ln2b,
            wfc, bfc, wproj, bproj, lnf_w, lnf_b, lm_wt)


if __name__ == "__main__":
    key = jax.random.PRNGKey(0)
    k_ids, k_params = jax.random.split(key)

    input_ids = jax.random.randint(k_ids, (B, S), 0, VOCAB, dtype=jnp.int32)
    attention_mask = jnp.ones((B, S), dtype=jnp.float32)   # reference: ones_like(inputs)

    params = make_params(k_params)
    logits = jax.jit(gptneo_pallas_forward)(input_ids, attention_mask, params)
    jax.block_until_ready(logits)

    assert logits.shape == (B, S, VOCAB) and logits.dtype == jnp.float32
    assert bool(jnp.all(jnp.isfinite(logits)))
    print("KERNEL_OK")
</pallas_src>

<mosaic_0001>
module attributes {stable_mosaic.version = 11 : i64} {
  func.func @gptneo_forward_kernel(%arg0: i32, %arg1: memref<1x8x64xf32, #tpu.memory_space<vmem>>, %arg2: memref<1x8x8xf32, #tpu.memory_space<vmem>>, %arg3: memref<2x1x64xf32, #tpu.memory_space<vmem>>, %arg4: memref<2x1x64xf32, #tpu.memory_space<vmem>>, %arg5: memref<2x12x64x16xbf16, #tpu.memory_space<vmem>>, %arg6: memref<2x4x16x64xbf16, #tpu.memory_space<vmem>>, %arg7: memref<2x1x64xf32, #tpu.memory_space<vmem>>, %arg8: memref<2x1x64xf32, #tpu.memory_space<vmem>>, %arg9: memref<2x1x64xf32, #tpu.memory_space<vmem>>, %arg10: memref<2x64x128xbf16, #tpu.memory_space<vmem>>, %arg11: memref<2x1x128xf32, #tpu.memory_space<vmem>>, %arg12: memref<2x128x64xbf16, #tpu.memory_space<vmem>>, %arg13: memref<2x1x64xf32, #tpu.memory_space<vmem>>, %arg14: memref<1x64xf32, #tpu.memory_space<vmem>>, %arg15: memref<1x64xf32, #tpu.memory_space<vmem>>, %arg16: memref<64x256xbf16, #tpu.memory_space<vmem>>, %arg17: memref<1x8x256xf32, #tpu.memory_space<vmem>>) attributes {dimension_semantics = [#tpu.dimension_semantics<parallel>], iteration_bounds = array<i64: 2>, scalar_prefetch = 0 : i64, scratch_operands = 0 : i64, tpu.core_type = #tpu.core_type<tc>, window_params = [{transform_indices = @transform_0, window_bounds = array<i64: 1, 8, 64>}, {transform_indices = @transform_1, window_bounds = array<i64: 1, 8, 8>}, {pipeline_mode = #tpu.pipeline_mode<synchronous>, transform_indices = @transform_2, window_bounds = array<i64: 2, 1, 64>}, {pipeline_mode = #tpu.pipeline_mode<synchronous>, transform_indices = @transform_3, window_bounds = array<i64: 2, 1, 64>}, {pipeline_mode = #tpu.pipeline_mode<synchronous>, transform_indices = @transform_4, window_bounds = array<i64: 2, 12, 64, 16>}, {pipeline_mode = #tpu.pipeline_mode<synchronous>, transform_indices = @transform_5, window_bounds = array<i64: 2, 4, 16, 64>}, {pipeline_mode = #tpu.pipeline_mode<synchronous>, transform_indices = @transform_6, window_bounds = array<i64: 2, 1, 64>}, {pipeline_mode = #tpu.pipeline_mode<synchronous>, transform_indices = @transform_7, window_bounds = array<i64: 2, 1, 64>}, {pipeline_mode = #tpu.pipeline_mode<synchronous>, transform_indices = @transform_8, window_bounds = array<i64: 2, 1, 64>}, {pipeline_mode = #tpu.pipeline_mode<synchronous>, transform_indices = @transform_9, window_bounds = array<i64: 2, 64, 128>}, {pipeline_mode = #tpu.pipeline_mode<synchronous>, transform_indices = @transform_10, window_bounds = array<i64: 2, 1, 128>}, {pipeline_mode = #tpu.pipeline_mode<synchronous>, transform_indices = @transform_11, window_bounds = array<i64: 2, 128, 64>}, {pipeline_mode = #tpu.pipeline_mode<synchronous>, transform_indices = @transform_12, window_bounds = array<i64: 2, 1, 64>}, {pipeline_mode = #tpu.pipeline_mode<synchronous>, transform_indices = @transform_13, window_bounds = array<i64: 1, 64>}, {pipeline_mode = #tpu.pipeline_mode<synchronous>, transform_indices = @transform_14, window_bounds = array<i64: 1, 64>}, {pipeline_mode = #tpu.pipeline_mode<synchronous>, transform_indices = @transform_15, window_bounds = array<i64: 64, 256>}, {transform_indices = @transform_16, window_bounds = array<i64: 1, 8, 256>}]} {
    %c0 = arith.constant 0 : index
    %c0_0 = arith.constant 0 : index
    %c0_1 = arith.constant 0 : index
    %0 = vector.load %arg1[%c0, %c0_0, %c0_1] : memref<1x8x64xf32, #tpu.memory_space<vmem>>, vector<1x8x64xf32>
    %1 = vector.shape_cast %0 : vector<1x8x64xf32> to vector<8x64xf32>
    %c0_2 = arith.constant 0 : index
    %c0_3 = arith.constant 0 : index
    %c0_4 = arith.constant 0 : index
    %2 = vector.load %arg2[%c0_2, %c0_3, %c0_4] : memref<1x8x8xf32, #tpu.memory_space<vmem>>, vector<1x8x8xf32>
    %3 = vector.shape_cast %2 : vector<1x8x8xf32> to vector<8x8xf32>
    %4 = vector.shape_cast %3 : vector<8x8xf32> to vector<1x8x8xf32>
    %5 = vector.shape_cast %4 : vector<1x8x8xf32> to vector<1x8x8xf32>
    %6 = vector.broadcast %5 : vector<1x8x8xf32> to vector<4x8x8xf32>
    %c0_5 = arith.constant 0 : index
    %c0_6 = arith.constant 0 : index
    %c0_7 = arith.constant 0 : index
    %7 = vector.load %arg3[%c0_5, %c0_6, %c0_7] : memref<2x1x64xf32, #tpu.memory_space<vmem>>, vector<1x1x64xf32>
    %8 = vector.shape_cast %7 : vector<1x1x64xf32> to vector<1x64xf32>
    %c0_8 = arith.constant 0 : index
    %c0_9 = arith.constant 0 : index
    %c0_10 = arith.constant 0 : index
    %9 = vector.load %arg4[%c0_8, %c0_9, %c0_10] : memref<2x1x64xf32, #tpu.memory_space<vmem>>, vector<1x1x64xf32>
    %10 = vector.shape_cast %9 : vector<1x1x64xf32> to vector<1x64xf32>
    %cst = arith.constant dense<0.000000e+00> : vector<8xf32>
    %11 = vector.multi_reduction <add>, %1, %cst [1] : vector<8x64xf32> to vector<8xf32>
    %12 = vector.shape_cast %11 : vector<8xf32> to vector<8x1xf32>
    %cst_11 = arith.constant 6.400000e+01 : f32
    %13 = vector.broadcast %cst_11 : f32 to vector<8x1xf32>
    %14 = arith.divf %12, %13 : vector<8x1xf32>
    %15 = vector.broadcast %14 : vector<8x1xf32> to vector<8x64xf32>
    %16 = arith.subf %1, %15 : vector<8x64xf32>
    %17 = arith.mulf %16, %16 : vector<8x64xf32>
    %cst_12 = arith.constant dense<0.000000e+00> : vector<8xf32>
    %18 = vector.multi_reduction <add>, %17, %cst_12 [1] : vector<8x64xf32> to vector<8xf32>
    %19 = vector.shape_cast %18 : vector<8xf32> to vector<8x1xf32>
    %cst_13 = arith.constant 6.400000e+01 : f32
    %20 = vector.broadcast %cst_13 : f32 to vector<8x1xf32>
    %21 = arith.divf %19, %20 : vector<8x1xf32>
    %22 = vector.broadcast %14 : vector<8x1xf32> to vector<8x64xf32>
    %23 = arith.subf %1, %22 : vector<8x64xf32>
    %24 = math.sqrt %21 : vector<8x1xf32>
    %cst_14 = arith.constant 9.99999974E-6 : f32
    %25 = vector.broadcast %cst_14 : f32 to vector<8x1xf32>
    %26 = arith.addf %24, %25 : vector<8x1xf32>
    %27 = vector.broadcast %26 : vector<8x1xf32> to vector<8x64xf32>
    %28 = arith.divf %23, %27 : vector<8x64xf32>
    %29 = vector.broadcast %8 : vector<1x64xf32> to vector<8x64xf32>
    %30 = arith.mulf %28, %29 : vector<8x64xf32>
    %31 = vector.broadcast %10 : vector<1x64xf32> to vector<8x64xf32>
    %32 = arith.addf %30, %31 : vector<8x64xf32>
    %33 = arith.truncf %32 : vector<8x64xf32> to vector<8x64xbf16>
    %34 = vector.shape_cast %33 : vector<8x64xbf16> to vector<1x8x64xbf16>
    %35 = vector.shape_cast %34 : vector<1x8x64xbf16> to vector<1x8x64xbf16>
    %36 = vector.broadcast %35 : vector<1x8x64xbf16> to vector<12x8x64xbf16>
    %c0_15 = arith.constant 0 : index
    %c0_16 = arith.constant 0 : index
    %c0_17 = arith.constant 0 : index
    %c0_18 = arith.constant 0 : index
    %37 = vector.load %arg5[%c0_15, %c0_16, %c0_17, %c0_18] : memref<2x12x64x16xbf16, #tpu.memory_space<vmem>>, vector<1x12x64x16xbf16>
    %38 = vector.shape_cast %37 : vector<1x12x64x16xbf16> to vector<12x64x16xbf16>
    "tpu.trace_start"() <{level = 10 : i32, message = "gsh,ghd->gsd"}> : () -> ()
    %cst_19 = arith.constant dense<0.000000e+00> : vector<12x8x16xf32>
    %39 = tpu.matmul %36, %38, %cst_19 {dimension_numbers = #tpu.dot_dimension_numbers<[2], [1], [1], [2], [0, 0, 0, 1, 1, 2], [0], [0]>} : vector<12x8x64xbf16>, vector<12x64x16xbf16>, vector<12x8x16xf32> -> vector<12x8x16xf32>
    "tpu.trace_stop"() : () -> ()
    %40 = vector.extract_strided_slice %39 {offsets = [0, 0, 0], sizes = [4, 8, 16], strides = [1, 1, 1]} : vector<12x8x16xf32> to vector<4x8x16xf32>
    %41 = vector.extract_strided_slice %39 {offsets = [4, 0, 0], sizes = [4, 8, 16], strides = [1, 1, 1]} : vector<12x8x16xf32> to vector<4x8x16xf32>
    %42 = vector.extract_strided_slice %39 {offsets = [8, 0, 0], sizes = [4, 8, 16], strides = [1, 1, 1]} : vector<12x8x16xf32> to vector<4x8x16xf32>
    %43 = arith.truncf %40 : vector<4x8x16xf32> to vector<4x8x16xbf16>
    %44 = arith.truncf %41 : vector<4x8x16xf32> to vector<4x8x16xbf16>
    "tpu.trace_start"() <{level = 10 : i32, message = "hqd,hkd->hqk"}> : () -> ()
    %cst_20 = arith.constant dense<0.000000e+00> : vector<4x8x8xf32>
    %45 = tpu.matmul %43, %44, %cst_20 {dimension_numbers = #tpu.dot_dimension_numbers<[2], [2], [1], [1], [0, 0, 0, 1, 1, 1], [0], [0]>} : vector<4x8x16xbf16>, vector<4x8x16xbf16>, vector<4x8x8xf32> -> vector<4x8x8xf32>
    "tpu.trace_stop"() : () -> ()
    %46 = arith.addf %45, %6 : vector<4x8x8xf32>
    %cst_21 = arith.constant dense<0xFF800000> : vector<4x8xf32>
    %47 = vector.multi_reduction <maximumf>, %46, %cst_21 [2] : vector<4x8x8xf32> to vector<4x8xf32>
    %48 = vector.shape_cast %47 : vector<4x8xf32> to vector<4x8x1xf32>
    %49 = vector.broadcast %48 : vector<4x8x1xf32> to vector<4x8x8xf32>
    %50 = arith.subf %46, %49 : vector<4x8x8xf32>
    %51 = math.exp %50 : vector<4x8x8xf32>
    %cst_22 = arith.constant dense<0.000000e+00> : vector<4x8xf32>
    %52 = vector.multi_reduction <add>, %51, %cst_22 [2] : vector<4x8x8xf32> to vector<4x8xf32>
    %53 = vector.shape_cast %52 : vector<4x8xf32> to vector<4x8x1xf32>
    %54 = tpu.reciprocal %53 {approx = true} : vector<4x8x1xf32> -> vector<4x8x1xf32>
    %55 = vector.broadcast %54 : vector<4x8x1xf32> to vector<4x8x8xf32>
    %56 = arith.mulf %51, %55 : vector<4x8x8xf32>
    %57 = arith.truncf %56 : vector<4x8x8xf32> to vector<4x8x8xbf16>
    %58 = arith.truncf %42 : vector<4x8x16xf32> to vector<4x8x16xbf16>
    "tpu.trace_start"() <{level = 10 : i32, message = "hqk,hkd->hqd"}> : () -> ()
    %cst_23 = arith.constant dense<0.000000e+00> : vector<4x8x16xf32>
    %59 = tpu.matmul %57, %58, %cst_23 {dimension_numbers = #tpu.dot_dimension_numbers<[2], [1], [1], [2], [0, 0, 0, 1, 1, 2], [0], [0]>} : vector<4x8x8xbf16>, vector<4x8x16xbf16>, vector<4x8x16xf32> -> vector<4x8x16xf32>
    "tpu.trace_stop"() : () -> ()
    %60 = arith.truncf %59 : vector<4x8x16xf32> to vector<4x8x16xbf16>
    %c0_24 = arith.constant 0 : index
    %c0_25 = arith.constant 0 : index
    %c0_26 = arith.constant 0 : index
    %c0_27 = arith.constant 0 : index
    %61 = vector.load %arg6[%c0_24, %c0_25, %c0_26, %c0_27] : memref<2x4x16x64xbf16, #tpu.memory_space<vmem>>, vector<1x4x16x64xbf16>
    %62 = vector.shape_cast %61 : vector<1x4x16x64xbf16> to vector<4x16x64xbf16>
    "tpu.trace_start"() <{level = 10 : i32, message = "hqd,hdo->hqo"}> : () -> ()
    %cst_28 = arith.constant dense<0.000000e+00> : vector<4x8x64xf32>
    %63 = tpu.matmul %60, %62, %cst_28 {dimension_numbers = #tpu.dot_dimension_numbers<[2], [1], [1], [2], [0, 0, 0, 1, 1, 2], [0], [0]>} : vector<4x8x16xbf16>, vector<4x16x64xbf16>, vector<4x8x64xf32> -> vector<4x8x64xf32>
    "tpu.trace_stop"() : () -> ()
    %cst_29 = arith.constant dense<0.000000e+00> : vector<8x64xf32>
    %64 = vector.multi_reduction <add>, %63, %cst_29 [0] : vector<4x8x64xf32> to vector<8x64xf32>
    %c0_30 = arith.constant 0 : index
    %c0_31 = arith.constant 0 : index
    %c0_32 = arith.constant 0 : index
    %65 = vector.load %arg7[%c0_30, %c0_31, %c0_32] : memref<2x1x64xf32, #tpu.memory_space<vmem>>, vector<1x1x64xf32>
    %66 = vector.shape_cast %65 : vector<1x1x64xf32> to vector<1x64xf32>
    %67 = vector.broadcast %66 : vector<1x64xf32> to vector<8x64xf32>
    %68 = arith.addf %64, %67 : vector<8x64xf32>
    %69 = arith.addf %1, %68 : vector<8x64xf32>
    %c0_33 = arith.constant 0 : index
    %c0_34 = arith.constant 0 : index
    %c0_35 = arith.constant 0 : index
    %70 = vector.load %arg8[%c0_33, %c0_34, %c0_35] : memref<2x1x64xf32, #tpu.memory_space<vmem>>, vector<1x1x64xf32>
    %71 = vector.shape_cast %70 : vector<1x1x64xf32> to vector<1x64xf32>
    %c0_36 = arith.constant 0 : index
    %c0_37 = arith.constant 0 : index
    %c0_38 = arith.constant 0 : index
    %72 = vector.load %arg9[%c0_36, %c0_37, %c0_38] : memref<2x1x64xf32, #tpu.memory_space<vmem>>, vector<1x1x64xf32>
    %73 = vector.shape_cast %72 : vector<1x1x64xf32> to vector<1x64xf32>
    %cst_39 = arith.constant dense<0.000000e+00> : vector<8xf32>
    %74 = vector.multi_reduction <add>, %69, %cst_39 [1] : vector<8x64xf32> to vector<8xf32>
    %75 = vector.shape_cast %74 : vector<8xf32> to vector<8x1xf32>
    %cst_40 = arith.constant 6.400000e+01 : f32
    %76 = vector.broadcast %cst_40 : f32 to vector<8x1xf32>
    %77 = arith.divf %75, %76 : vector<8x1xf32>
    %78 = vector.broadcast %77 : vector<8x1xf32> to vector<8x64xf32>
    %79 = arith.subf %69, %78 : vector<8x64xf32>
    %80 = arith.mulf %79, %79 : vector<8x64xf32>
    %cst_41 = arith.constant dense<0.000000e+00> : vector<8xf32>
    %81 = vector.multi_reduction <add>, %80, %cst_41 [1] : vector<8x64xf32> to vector<8xf32>
    %82 = vector.shape_cast %81 : vector<8xf32> to vector<8x1xf32>
    %cst_42 = arith.constant 6.400000e+01 : f32
    %83 = vector.broadcast %cst_42 : f32 to vector<8x1xf32>
    %84 = arith.divf %82, %83 : vector<8x1xf32>
    %85 = vector.broadcast %77 : vector<8x1xf32> to vector<8x64xf32>
    %86 = arith.subf %69, %85 : vector<8x64xf32>
    %87 = math.sqrt %84 : vector<8x1xf32>
    %cst_43 = arith.constant 9.99999974E-6 : f32
    %88 = vector.broadcast %cst_43 : f32 to vector<8x1xf32>
    %89 = arith.addf %87, %88 : vector<8x1xf32>
    %90 = vector.broadcast %89 : vector<8x1xf32> to vector<8x64xf32>
    %91 = arith.divf %86, %90 : vector<8x64xf32>
    %92 = vector.broadcast %71 : vector<1x64xf32> to vector<8x64xf32>
    %93 = arith.mulf %91, %92 : vector<8x64xf32>
    %94 = vector.broadcast %73 : vector<1x64xf32> to vector<8x64xf32>
    %95 = arith.addf %93, %94 : vector<8x64xf32>
    %96 = arith.truncf %95 : vector<8x64xf32> to vector<8x64xbf16>
    %c0_44 = arith.constant 0 : index
    %c0_45 = arith.constant 0 : index
    %c0_46 = arith.constant 0 : index
    %97 = vector.load %arg10[%c0_44, %c0_45, %c0_46] : memref<2x64x128xbf16, #tpu.memory_space<vmem>>, vector<1x64x128xbf16>
    %98 = vector.shape_cast %97 : vector<1x64x128xbf16> to vector<64x128xbf16>
    %cst_47 = arith.constant dense<0.000000e+00> : vector<8x128xf32>
    %99 = tpu.matmul %96, %98, %cst_47 {dimension_numbers = #tpu.dot_dimension_numbers<[1], [0], [0], [1], [0, 0, 1, 1], [], []>} : vector<8x64xbf16>, vector<64x128xbf16>, vector<8x128xf32> -> vector<8x128xf32>
    %c0_48 = arith.constant 0 : index
    %c0_49 = arith.constant 0 : index
    %c0_50 = arith.constant 0 : index
    %100 = vector.load %arg11[%c0_48, %c0_49, %c0_50] : memref<2x1x128xf32, #tpu.memory_space<vmem>>, vector<1x1x128xf32>
    %101 = vector.shape_cast %100 : vector<1x1x128xf32> to vector<1x128xf32>
    %102 = vector.broadcast %101 : vector<1x128xf32> to vector<8x128xf32>
    %103 = arith.addf %99, %102 : vector<8x128xf32>
    %cst_51 = arith.constant 5.000000e-01 : f32
    %104 = vector.broadcast %cst_51 : f32 to vector<8x128xf32>
    %105 = arith.mulf %104, %103 : vector<8x128xf32>
    %106 = arith.mulf %103, %103 : vector<8x128xf32>
    %107 = arith.mulf %103, %106 : vector<8x128xf32>
    %cst_52 = arith.constant 4.471500e-02 : f32
    %108 = vector.broadcast %cst_52 : f32 to vector<8x128xf32>
    %109 = arith.mulf %108, %107 : vector<8x128xf32>
    %110 = arith.addf %103, %109 : vector<8x128xf32>
    %cst_53 = arith.constant 7.978850e-01 : f32
    %111 = vector.broadcast %cst_53 : f32 to vector<8x128xf32>
    %112 = arith.mulf %111, %110 : vector<8x128xf32>
    %113 = math.tanh %112 : vector<8x128xf32>
    %cst_54 = arith.constant 1.000000e+00 : f32
    %114 = vector.broadcast %cst_54 : f32 to vector<8x128xf32>
    %115 = arith.addf %114, %113 : vector<8x128xf32>
    %116 = arith.mulf %105, %115 : vector<8x128xf32>
    %117 = arith.truncf %116 : vector<8x128xf32> to vector<8x128xbf16>
    %c0_55 = arith.constant 0 : index
    %c0_56 = arith.constant 0 : index
    %c0_57 = arith.constant 0 : index
    %118 = vector.load %arg12[%c0_55, %c0_56, %c0_57] : memref<2x128x64xbf16, #tpu.memory_space<vmem>>, vector<1x128x64xbf16>
    %119 = vector.shape_cast %118 : vector<1x128x64xbf16> to vector<128x64xbf16>
    %cst_58 = arith.constant dense<0.000000e+00> : vector<8x64xf32>
    %120 = tpu.matmul %117, %119, %cst_58 {dimension_numbers = #tpu.dot_dimension_numbers<[1], [0], [0], [1], [0, 0, 1, 1], [], []>} : vector<8x128xbf16>, vector<128x64xbf16>, vector<8x64xf32> -> vector<8x64xf32>
    %c0_59 = arith.constant 0 : index
    %c0_60 = arith.constant 0 : index
    %c0_61 = arith.constant 0 : index
    %121 = vector.load %arg13[%c0_59, %c0_60, %c0_61] : memref<2x1x64xf32, #tpu.memory_space<vmem>>, vector<1x1x64xf32>
    %122 = vector.shape_cast %121 : vector<1x1x64xf32> to vector<1x64xf32>
    %123 = vector.broadcast %122 : vector<1x64xf32> to vector<8x64xf32>
    %124 = arith.addf %120, %123 : vector<8x64xf32>
    %125 = arith.addf %69, %124 : vector<8x64xf32>
    %c1 = arith.constant 1 : index
    %c0_62 = arith.constant 0 : index
    %c0_63 = arith.constant 0 : index
    %126 = vector.load %arg3[%c1, %c0_62, %c0_63] : memref<2x1x64xf32, #tpu.memory_space<vmem>>, vector<1x1x64xf32>
    %127 = vector.shape_cast %126 : vector<1x1x64xf32> to vector<1x64xf32>
    %c1_64 = arith.constant 1 : index
    %c0_65 = arith.constant 0 : index
    %c0_66 = arith.constant 0 : index
    %128 = vector.load %arg4[%c1_64, %c0_65, %c0_66] : memref<2x1x64xf32, #tpu.memory_space<vmem>>, vector<1x1x64xf32>
    %129 = vector.shape_cast %128 : vector<1x1x64xf32> to vector<1x64xf32>
    %cst_67 = arith.constant dense<0.000000e+00> : vector<8xf32>
    %130 = vector.multi_reduction <add>, %125, %cst_67 [1] : vector<8x64xf32> to vector<8xf32>
    %131 = vector.shape_cast %130 : vector<8xf32> to vector<8x1xf32>
    %cst_68 = arith.constant 6.400000e+01 : f32
    %132 = vector.broadcast %cst_68 : f32 to vector<8x1xf32>
    %133 = arith.divf %131, %132 : vector<8x1xf32>
    %134 = vector.broadcast %133 : vector<8x1xf32> to vector<8x64xf32>
    %135 = arith.subf %125, %134 : vector<8x64xf32>
    %136 = arith.mulf %135, %135 : vector<8x64xf32>
    %cst_69 = arith.constant dense<0.000000e+00> : vector<8xf32>
    %137 = vector.multi_reduction <add>, %136, %cst_69 [1] : vector<8x64xf32> to vector<8xf32>
    %138 = vector.shape_cast %137 : vector<8xf32> to vector<8x1xf32>
    %cst_70 = arith.constant 6.400000e+01 : f32
    %139 = vector.broadcast %cst_70 : f32 to vector<8x1xf32>
    %140 = arith.divf %138, %139 : vector<8x1xf32>
    %141 = vector.broadcast %133 : vector<8x1xf32> to vector<8x64xf32>
    %142 = arith.subf %125, %141 : vector<8x64xf32>
    %143 = math.sqrt %140 : vector<8x1xf32>
    %cst_71 = arith.constant 9.99999974E-6 : f32
    %144 = vector.broadcast %cst_71 : f32 to vector<8x1xf32>
    %145 = arith.addf %143, %144 : vector<8x1xf32>
    %146 = vector.broadcast %145 : vector<8x1xf32> to vector<8x64xf32>
    %147 = arith.divf %142, %146 : vector<8x64xf32>
    %148 = vector.broadcast %127 : vector<1x64xf32> to vector<8x64xf32>
    %149 = arith.mulf %147, %148 : vector<8x64xf32>
    %150 = vector.broadcast %129 : vector<1x64xf32> to vector<8x64xf32>
    %151 = arith.addf %149, %150 : vector<8x64xf32>
    %152 = arith.truncf %151 : vector<8x64xf32> to vector<8x64xbf16>
    %153 = vector.shape_cast %152 : vector<8x64xbf16> to vector<1x8x64xbf16>
    %154 = vector.shape_cast %153 : vector<1x8x64xbf16> to vector<1x8x64xbf16>
    %155 = vector.broadcast %154 : vector<1x8x64xbf16> to vector<12x8x64xbf16>
    %c1_72 = arith.constant 1 : index
    %c0_73 = arith.constant 0 : index
    %c0_74 = arith.constant 0 : index
    %c0_75 = arith.constant 0 : index
    %156 = vector.load %arg5[%c1_72, %c0_73, %c0_74, %c0_75] : memref<2x12x64x16xbf16, #tpu.memory_space<vmem>>, vector<1x12x64x16xbf16>
    %157 = vector.shape_cast %156 : vector<1x12x64x16xbf16> to vector<12x64x16xbf16>
    "tpu.trace_start"() <{level = 10 : i32, message = "gsh,ghd->gsd"}> : () -> ()
    %cst_76 = arith.constant dense<0.000000e+00> : vector<12x8x16xf32>
    %158 = tpu.matmul %155, %157, %cst_76 {dimension_numbers = #tpu.dot_dimension_numbers<[2], [1], [1], [2], [0, 0, 0, 1, 1, 2], [0], [0]>} : vector<12x8x64xbf16>, vector<12x64x16xbf16>, vector<12x8x16xf32> -> vector<12x8x16xf32>
    "tpu.trace_stop"() : () -> ()
    %159 = vector.extract_strided_slice %158 {offsets = [0, 0, 0], sizes = [4, 8, 16], strides = [1, 1, 1]} : vector<12x8x16xf32> to vector<4x8x16xf32>
    %160 = vector.extract_strided_slice %158 {offsets = [4, 0, 0], sizes = [4, 8, 16], strides = [1, 1, 1]} : vector<12x8x16xf32> to vector<4x8x16xf32>
    %161 = vector.extract_strided_slice %158 {offsets = [8, 0, 0], sizes = [4, 8, 16], strides = [1, 1, 1]} : vector<12x8x16xf32> to vector<4x8x16xf32>
    %162 = arith.truncf %159 : vector<4x8x16xf32> to vector<4x8x16xbf16>
    %163 = arith.truncf %160 : vector<4x8x16xf32> to vector<4x8x16xbf16>
    "tpu.trace_start"() <{level = 10 : i32, message = "hqd,hkd->hqk"}> : () -> ()
    %cst_77 = arith.constant dense<0.000000e+00> : vector<4x8x8xf32>
    %164 = tpu.matmul %162, %163, %cst_77 {dimension_numbers = #tpu.dot_dimension_numbers<[2], [2], [1], [1], [0, 0, 0, 1, 1, 1], [0], [0]>} : vector<4x8x16xbf16>, vector<4x8x16xbf16>, vector<4x8x8xf32> -> vector<4x8x8xf32>
    "tpu.trace_stop"() : () -> ()
    %165 = arith.addf %164, %6 : vector<4x8x8xf32>
    %cst_78 = arith.constant dense<0xFF800000> : vector<4x8xf32>
    %166 = vector.multi_reduction <maximumf>, %165, %cst_78 [2] : vector<4x8x8xf32> to vector<4x8xf32>
    %167 = vector.shape_cast %166 : vector<4x8xf32> to vector<4x8x1xf32>
    %168 = vector.broadcast %167 : vector<4x8x1xf32> to vector<4x8x8xf32>
    %169 = arith.subf %165, %168 : vector<4x8x8xf32>
    %170 = math.exp %169 : vector<4x8x8xf32>
    %cst_79 = arith.constant dense<0.000000e+00> : vector<4x8xf32>
    %171 = vector.multi_reduction <add>, %170, %cst_79 [2] : vector<4x8x8xf32> to vector<4x8xf32>
    %172 = vector.shape_cast %171 : vector<4x8xf32> to vector<4x8x1xf32>
    %173 = tpu.reciprocal %172 {approx = true} : vector<4x8x1xf32> -> vector<4x8x1xf32>
    %174 = vector.broadcast %173 : vector<4x8x1xf32> to vector<4x8x8xf32>
    %175 = arith.mulf %170, %174 : vector<4x8x8xf32>
    %176 = arith.truncf %175 : vector<4x8x8xf32> to vector<4x8x8xbf16>
    %177 = arith.truncf %161 : vector<4x8x16xf32> to vector<4x8x16xbf16>
    "tpu.trace_start"() <{level = 10 : i32, message = "hqk,hkd->hqd"}> : () -> ()
    %cst_80 = arith.constant dense<0.000000e+00> : vector<4x8x16xf32>
    %178 = tpu.matmul %176, %177, %cst_80 {dimension_numbers = #tpu.dot_dimension_numbers<[2], [1], [1], [2], [0, 0, 0, 1, 1, 2], [0], [0]>} : vector<4x8x8xbf16>, vector<4x8x16xbf16>, vector<4x8x16xf32> -> vector<4x8x16xf32>
    "tpu.trace_stop"() : () -> ()
    %179 = arith.truncf %178 : vector<4x8x16xf32> to vector<4x8x16xbf16>
    %c1_81 = arith.constant 1 : index
    %c0_82 = arith.constant 0 : index
    %c0_83 = arith.constant 0 : index
    %c0_84 = arith.constant 0 : index
    %180 = vector.load %arg6[%c1_81, %c0_82, %c0_83, %c0_84] : memref<2x4x16x64xbf16, #tpu.memory_space<vmem>>, vector<1x4x16x64xbf16>
    %181 = vector.shape_cast %180 : vector<1x4x16x64xbf16> to vector<4x16x64xbf16>
    "tpu.trace_start"() <{level = 10 : i32, message = "hqd,hdo->hqo"}> : () -> ()
    %cst_85 = arith.constant dense<0.000000e+00> : vector<4x8x64xf32>
    %182 = tpu.matmul %179, %181, %cst_85 {dimension_numbers = #tpu.dot_dimension_numbers<[2], [1], [1], [2], [0, 0, 0, 1, 1, 2], [0], [0]>} : vector<4x8x16xbf16>, vector<4x16x64xbf16>, vector<4x8x64xf32> -> vector<4x8x64xf32>
    "tpu.trace_stop"() : () -> ()
    %cst_86 = arith.constant dense<0.000000e+00> : vector<8x64xf32>
    %183 = vector.multi_reduction <add>, %182, %cst_86 [0] : vector<4x8x64xf32> to vector<8x64xf32>
    %c1_87 = arith.constant 1 : index
    %c0_88 = arith.constant 0 : index
    %c0_89 = arith.constant 0 : index
    %184 = vector.load %arg7[%c1_87, %c0_88, %c0_89] : memref<2x1x64xf32, #tpu.memory_space<vmem>>, vector<1x1x64xf32>
    %185 = vector.shape_cast %184 : vector<1x1x64xf32> to vector<1x64xf32>
    %186 = vector.broadcast %185 : vector<1x64xf32> to vector<8x64xf32>
    %187 = arith.addf %183, %186 : vector<8x64xf32>
    %188 = arith.addf %125, %187 : vector<8x64xf32>
    %c1_90 = arith.constant 1 : index
    %c0_91 = arith.constant 0 : index
    %c0_92 = arith.constant 0 : index
    %189 = vector.load %arg8[%c1_90, %c0_91, %c0_92] : memref<2x1x64xf32, #tpu.memory_space<vmem>>, vector<1x1x64xf32>
    %190 = vector.shape_cast %189 : vector<1x1x64xf32> to vector<1x64xf32>
    %c1_93 = arith.constant 1 : index
    %c0_94 = arith.constant 0 : index
    %c0_95 = arith.constant 0 : index
    %191 = vector.load %arg9[%c1_93, %c0_94, %c0_95] : memref<2x1x64xf32, #tpu.memory_space<vmem>>, vector<1x1x64xf32>
    %192 = vector.shape_cast %191 : vector<1x1x64xf32> to vector<1x64xf32>
    %cst_96 = arith.constant dense<0.000000e+00> : vector<8xf32>
    %193 = vector.multi_reduction <add>, %188, %cst_96 [1] : vector<8x64xf32> to vector<8xf32>
    %194 = vector.shape_cast %193 : vector<8xf32> to vector<8x1xf32>
    %cst_97 = arith.constant 6.400000e+01 : f32
    %195 = vector.broadcast %cst_97 : f32 to vector<8x1xf32>
    %196 = arith.divf %194, %195 : vector<8x1xf32>
    %197 = vector.broadcast %196 : vector<8x1xf32> to vector<8x64xf32>
    %198 = arith.subf %188, %197 : vector<8x64xf32>
    %199 = arith.mulf %198, %198 : vector<8x64xf32>
    %cst_98 = arith.constant dense<0.000000e+00> : vector<8xf32>
    %200 = vector.multi_reduction <add>, %199, %cst_98 [1] : vector<8x64xf32> to vector<8xf32>
    %201 = vector.shape_cast %200 : vector<8xf32> to vector<8x1xf32>
    %cst_99 = arith.constant 6.400000e+01 : f32
    %202 = vector.broadcast %cst_99 : f32 to vector<8x1xf32>
    %203 = arith.divf %201, %202 : vector<8x1xf32>
    %204 = vector.broadcast %196 : vector<8x1xf32> to vector<8x64xf32>
    %205 = arith.subf %188, %204 : vector<8x64xf32>
    %206 = math.sqrt %203 : vector<8x1xf32>
    %cst_100 = arith.constant 9.99999974E-6 : f32
    %207 = vector.broadcast %cst_100 : f32 to vector<8x1xf32>
    %208 = arith.addf %206, %207 : vector<8x1xf32>
    %209 = vector.broadcast %208 : vector<8x1xf32> to vector<8x64xf32>
    %210 = arith.divf %205, %209 : vector<8x64xf32>
    %211 = vector.broadcast %190 : vector<1x64xf32> to vector<8x64xf32>
    %212 = arith.mulf %210, %211 : vector<8x64xf32>
    %213 = vector.broadcast %192 : vector<1x64xf32> to vector<8x64xf32>
    %214 = arith.addf %212, %213 : vector<8x64xf32>
    %215 = arith.truncf %214 : vector<8x64xf32> to vector<8x64xbf16>
    %c1_101 = arith.constant 1 : index
    %c0_102 = arith.constant 0 : index
    %c0_103 = arith.constant 0 : index
    %216 = vector.load %arg10[%c1_101, %c0_102, %c0_103] : memref<2x64x128xbf16, #tpu.memory_space<vmem>>, vector<1x64x128xbf16>
    %217 = vector.shape_cast %216 : vector<1x64x128xbf16> to vector<64x128xbf16>
    %cst_104 = arith.constant dense<0.000000e+00> : vector<8x128xf32>
    %218 = tpu.matmul %215, %217, %cst_104 {dimension_numbers = #tpu.dot_dimension_numbers<[1], [0], [0], [1], [0, 0, 1, 1], [], []>} : vector<8x64xbf16>, vector<64x128xbf16>, vector<8x128xf32> -> vector<8x128xf32>
    %c1_105 = arith.constant 1 : index
    %c0_106 = arith.constant 0 : index
    %c0_107 = arith.constant 0 : index
    %219 = vector.load %arg11[%c1_105, %c0_106, %c0_107] : memref<2x1x128xf32, #tpu.memory_space<vmem>>, vector<1x1x128xf32>
    %220 = vector.shape_cast %219 : vector<1x1x128xf32> to vector<1x128xf32>
    %221 = vector.broadcast %220 : vector<1x128xf32> to vector<8x128xf32>
    %222 = arith.addf %218, %221 : vector<8x128xf32>
    %cst_108 = arith.constant 5.000000e-01 : f32
    %223 = vector.broadcast %cst_108 : f32 to vector<8x128xf32>
    %224 = arith.mulf %223, %222 : vector<8x128xf32>
    %225 = arith.mulf %222, %222 : vector<8x128xf32>
    %226 = arith.mulf %222, %225 : vector<8x128xf32>
    %cst_109 = arith.constant 4.471500e-02 : f32
    %227 = vector.broadcast %cst_109 : f32 to vector<8x128xf32>
    %228 = arith.mulf %227, %226 : vector<8x128xf32>
    %229 = arith.addf %222, %228 : vector<8x128xf32>
    %cst_110 = arith.constant 7.978850e-01 : f32
    %230 = vector.broadcast %cst_110 : f32 to vector<8x128xf32>
    %231 = arith.mulf %230, %229 : vector<8x128xf32>
    %232 = math.tanh %231 : vector<8x128xf32>
    %cst_111 = arith.constant 1.000000e+00 : f32
    %233 = vector.broadcast %cst_111 : f32 to vector<8x128xf32>
    %234 = arith.addf %233, %232 : vector<8x128xf32>
    %235 = arith.mulf %224, %234 : vector<8x128xf32>
    %236 = arith.truncf %235 : vector<8x128xf32> to vector<8x128xbf16>
    %c1_112 = arith.constant 1 : index
    %c0_113 = arith.constant 0 : index
    %c0_114 = arith.constant 0 : index
    %237 = vector.load %arg12[%c1_112, %c0_113, %c0_114] : memref<2x128x64xbf16, #tpu.memory_space<vmem>>, vector<1x128x64xbf16>
    %238 = vector.shape_cast %237 : vector<1x128x64xbf16> to vector<128x64xbf16>
    %cst_115 = arith.constant dense<0.000000e+00> : vector<8x64xf32>
    %239 = tpu.matmul %236, %238, %cst_115 {dimension_numbers = #tpu.dot_dimension_numbers<[1], [0], [0], [1], [0, 0, 1, 1], [], []>} : vector<8x128xbf16>, vector<128x64xbf16>, vector<8x64xf32> -> vector<8x64xf32>
    %c1_116 = arith.constant 1 : index
    %c0_117 = arith.constant 0 : index
    %c0_118 = arith.constant 0 : index
    %240 = vector.load %arg13[%c1_116, %c0_117, %c0_118] : memref<2x1x64xf32, #tpu.memory_space<vmem>>, vector<1x1x64xf32>
    %241 = vector.shape_cast %240 : vector<1x1x64xf32> to vector<1x64xf32>
    %242 = vector.broadcast %241 : vector<1x64xf32> to vector<8x64xf32>
    %243 = arith.addf %239, %242 : vector<8x64xf32>
    %244 = arith.addf %188, %243 : vector<8x64xf32>
    %cst_119 = arith.constant dense<0.000000e+00> : vector<8xf32>
    %245 = vector.multi_reduction <add>, %244, %cst_119 [1] : vector<8x64xf32> to vector<8xf32>
    %246 = vector.shape_cast %245 : vector<8xf32> to vector<8x1xf32>
    %cst_120 = arith.constant 6.400000e+01 : f32
    %247 = vector.broadcast %cst_120 : f32 to vector<8x1xf32>
    %248 = arith.divf %246, %247 : vector<8x1xf32>
    %249 = vector.broadcast %248 : vector<8x1xf32> to vector<8x64xf32>
    %250 = arith.subf %244, %249 : vector<8x64xf32>
    %251 = arith.mulf %250, %250 : vector<8x64xf32>
    %cst_121 = arith.constant dense<0.000000e+00> : vector<8xf32>
    %252 = vector.multi_reduction <add>, %251, %cst_121 [1] : vector<8x64xf32> to vector<8xf32>
    %253 = vector.shape_cast %252 : vector<8xf32> to vector<8x1xf32>
    %cst_122 = arith.constant 6.400000e+01 : f32
    %254 = vector.broadcast %cst_122 : f32 to vector<8x1xf32>
    %255 = arith.divf %253, %254 : vector<8x1xf32>
    %256 = vector.broadcast %248 : vector<8x1xf32> to vector<8x64xf32>
    %257 = arith.subf %244, %256 : vector<8x64xf32>
    %cst_123 = arith.constant 9.99999974E-6 : f32
    %258 = vector.broadcast %cst_123 : f32 to vector<8x1xf32>
    %259 = arith.addf %255, %258 : vector<8x1xf32>
    %260 = math.rsqrt %259 : vector<8x1xf32>
    %261 = vector.broadcast %260 : vector<8x1xf32> to vector<8x64xf32>
    %262 = arith.mulf %257, %261 : vector<8x64xf32>
    %c0_124 = arith.constant 0 : index
    %c0_125 = arith.constant 0 : index
    %263 = vector.load %arg14[%c0_124, %c0_125] : memref<1x64xf32, #tpu.memory_space<vmem>>, vector<1x64xf32>
    %264 = vector.broadcast %263 : vector<1x64xf32> to vector<8x64xf32>
    %265 = arith.mulf %262, %264 : vector<8x64xf32>
    %c0_126 = arith.constant 0 : index
    %c0_127 = arith.constant 0 : index
    %266 = vector.load %arg15[%c0_126, %c0_127] : memref<1x64xf32, #tpu.memory_space<vmem>>, vector<1x64xf32>
    %267 = vector.broadcast %266 : vector<1x64xf32> to vector<8x64xf32>
    %268 = arith.addf %265, %267 : vector<8x64xf32>
    %269 = arith.truncf %268 : vector<8x64xf32> to vector<8x64xbf16>
    %c0_128 = arith.constant 0 : index
    %c0_129 = arith.constant 0 : index
    %270 = vector.load %arg16[%c0_128, %c0_129] : memref<64x256xbf16, #tpu.memory_space<vmem>>, vector<64x256xbf16>
    %cst_130 = arith.constant dense<0.000000e+00> : vector<8x256xf32>
    %271 = tpu.matmul %269, %270, %cst_130 {dimension_numbers = #tpu.dot_dimension_numbers<[1], [0], [0], [1], [0, 0, 1, 1], [], []>} : vector<8x64xbf16>, vector<64x256xbf16>, vector<8x256xf32> -> vector<8x256xf32>
    %c0_131 = arith.constant 0 : index
    %c0_132 = arith.constant 0 : index
    %c0_133 = arith.constant 0 : index
    %272 = vector.load %arg17[%c0_131, %c0_132, %c0_133] : memref<1x8x256xf32, #tpu.memory_space<vmem>>, vector<1x8x256xf32>
    %273 = vector.shape_cast %272 : vector<1x8x256xf32> to vector<8x256xf32>
    %274 = vector.shape_cast %271 : vector<8x256xf32> to vector<1x8x256xf32>
    tpu.vector_store %arg17[%c0_131, %c0_132, %c0_133], %274 {strides = array<i32>} : memref<1x8x256xf32, #tpu.memory_space<vmem>>, vector<1x8x256xf32>,
    return
  }
  func.func @transform_0(%arg0: i32) -> (i32, i32, i32) {
    %c0_i32 = arith.constant 0 : i32
    %c0_i32_0 = arith.constant 0 : i32
    %c0_i32_1 = arith.constant 0 : i32
    return %arg0, %c0_i32, %c0_i32_0 : i32, i32, i32
  }
  func.func @transform_1(%arg0: i32) -> (i32, i32, i32) {
    %c0_i32 = arith.constant 0 : i32
    %c0_i32_0 = arith.constant 0 : i32
    %c0_i32_1 = arith.constant 0 : i32
    return %arg0, %c0_i32, %c0_i32_0 : i32, i32, i32
  }
  func.func @transform_2(%arg0: i32) -> (i32, i32, i32) {
    %c0_i32 = arith.constant 0 : i32
    %c0_i32_0 = arith.constant 0 : i32
    %c0_i32_1 = arith.constant 0 : i32
    %c0_i32_2 = arith.constant 0 : i32
    return %c0_i32, %c0_i32_0, %c0_i32_1 : i32, i32, i32
  }
  func.func @transform_3(%arg0: i32) -> (i32, i32, i32) {
    %c0_i32 = arith.constant 0 : i32
    %c0_i32_0 = arith.constant 0 : i32
    %c0_i32_1 = arith.constant 0 : i32
    %c0_i32_2 = arith.constant 0 : i32
    return %c0_i32, %c0_i32_0, %c0_i32_1 : i32, i32, i32
  }
  func.func @transform_4(%arg0: i32) -> (i32, i32, i32, i32) {
    %c0_i32 = arith.constant 0 : i32
    %c0_i32_0 = arith.constant 0 : i32
    %c0_i32_1 = arith.constant 0 : i32
    %c0_i32_2 = arith.constant 0 : i32
    %c0_i32_3 = arith.constant 0 : i32
    return %c0_i32, %c0_i32_0, %c0_i32_1, %c0_i32_2 : i32, i32, i32, i32
  }
  func.func @transform_5(%arg0: i32) -> (i32, i32, i32, i32) {
    %c0_i32 = arith.constant 0 : i32
    %c0_i32_0 = arith.constant 0 : i32
    %c0_i32_1 = arith.constant 0 : i32
    %c0_i32_2 = arith.constant 0 : i32
    %c0_i32_3 = arith.constant 0 : i32
    return %c0_i32, %c0_i32_0, %c0_i32_1, %c0_i32_2 : i32, i32, i32, i32
  }
  func.func @transform_6(%arg0: i32) -> (i32, i32, i32) {
    %c0_i32 = arith.constant 0 : i32
    %c0_i32_0 = arith.constant 0 : i32
    %c0_i32_1 = arith.constant 0 : i32
    %c0_i32_2 = arith.constant 0 : i32
    return %c0_i32, %c0_i32_0, %c0_i32_1 : i32, i32, i32
  }
  func.func @transform_7(%arg0: i32) -> (i32, i32, i32) {
    %c0_i32 = arith.constant 0 : i32
    %c0_i32_0 = arith.constant 0 : i32
    %c0_i32_1 = arith.constant 0 : i32
    %c0_i32_2 = arith.constant 0 : i32
    return %c0_i32, %c0_i32_0, %c0_i32_1 : i32, i32, i32
  }
  func.func @transform_8(%arg0: i32) -> (i32, i32, i32) {
    %c0_i32 = arith.constant 0 : i32
    %c0_i32_0 = arith.constant 0 : i32
    %c0_i32_1 = arith.constant 0 : i32
    %c0_i32_2 = arith.constant 0 : i32
    return %c0_i32, %c0_i32_0, %c0_i32_1 : i32, i32, i32
  }
  func.func @transform_9(%arg0: i32) -> (i32, i32, i32) {
    %c0_i32 = arith.constant 0 : i32
    %c0_i32_0 = arith.constant 0 : i32
    %c0_i32_1 = arith.constant 0 : i32
    %c0_i32_2 = arith.constant 0 : i32
    return %c0_i32, %c0_i32_0, %c0_i32_1 : i32, i32, i32
  }
  func.func @transform_10(%arg0: i32) -> (i32, i32, i32) {
    %c0_i32 = arith.constant 0 : i32
    %c0_i32_0 = arith.constant 0 : i32
    %c0_i32_1 = arith.constant 0 : i32
    %c0_i32_2 = arith.constant 0 : i32
    return %c0_i32, %c0_i32_0, %c0_i32_1 : i32, i32, i32
  }
  func.func @transform_11(%arg0: i32) -> (i32, i32, i32) {
    %c0_i32 = arith.constant 0 : i32
    %c0_i32_0 = arith.constant 0 : i32
    %c0_i32_1 = arith.constant 0 : i32
    %c0_i32_2 = arith.constant 0 : i32
    return %c0_i32, %c0_i32_0, %c0_i32_1 : i32, i32, i32
  }
  func.func @transform_12(%arg0: i32) -> (i32, i32, i32) {
    %c0_i32 = arith.constant 0 : i32
    %c0_i32_0 = arith.constant 0 : i32
    %c0_i32_1 = arith.constant 0 : i32
    %c0_i32_2 = arith.constant 0 : i32
    return %c0_i32, %c0_i32_0, %c0_i32_1 : i32, i32, i32
  }
  func.func @transform_13(%arg0: i32) -> (i32, i32) {
    %c0_i32 = arith.constant 0 : i32
    %c0_i32_0 = arith.constant 0 : i32
    %c0_i32_1 = arith.constant 0 : i32
    return %c0_i32, %c0_i32_0 : i32, i32
  }
  func.func @transform_14(%arg0: i32) -> (i32, i32) {
    %c0_i32 = arith.constant 0 : i32
    %c0_i32_0 = arith.constant 0 : i32
    %c0_i32_1 = arith.constant 0 : i32
    return %c0_i32, %c0_i32_0 : i32, i32
  }
  func.func @transform_15(%arg0: i32) -> (i32, i32) {
    %c0_i32 = arith.constant 0 : i32
    %c0_i32_0 = arith.constant 0 : i32
    %c0_i32_1 = arith.constant 0 : i32
    return %c0_i32, %c0_i32_0 : i32, i32
  }
  func.func @transform_16(%arg0: i32) -> (i32, i32, i32) {
    %c0_i32 = arith.constant 0 : i32
    %c0_i32_0 = arith.constant 0 : i32
    %c0_i32_1 = arith.constant 0 : i32
    return %arg0, %c0_i32, %c0_i32_0 : i32, i32, i32
  }
}

</mosaic_0001>

<llo_original>
// kernel: gptneo_pallas_forward.1
$region0: #{gptneo_pallas_forward.1}
  #allocation0 [shape = 'u32[]', space=smem, size = 0x4, offset = 0x4, fixed_abs, tag = 'smem constant byte address 0x4 - core index']
  #allocation1 [shape = 'u32[72,128]{1,0:T(1,128)}', space=vmem, size = 0x9000, scoped, tag = 'internal scratch']
  %s0 = inlined_call_operand.vmem [shape: f32[2,8,64], index: 0, kind: input, shape index: {}]
  %s1 = inlined_call_operand.vmem [shape: f32[2,8,8], index: 1, kind: input, shape index: {}]
  %s2 = inlined_call_operand.vmem [shape: f32[2,1,64], index: 2, kind: input, shape index: {}]
  %s3 = inlined_call_operand.vmem [shape: f32[2,1,64], index: 3, kind: input, shape index: {}]
  %s4 = inlined_call_operand.vmem [shape: bf16[2,12,64,16], index: 4, kind: input, shape index: {}]
  %s5 = inlined_call_operand.vmem [shape: bf16[2,4,16,64], index: 5, kind: input, shape index: {}]
  %s6 = inlined_call_operand.vmem [shape: f32[2,1,64], index: 6, kind: input, shape index: {}]
  %s7 = inlined_call_operand.vmem [shape: f32[2,1,64], index: 7, kind: input, shape index: {}]
  %s8 = inlined_call_operand.vmem [shape: f32[2,1,64], index: 8, kind: input, shape index: {}]
  %s9 = inlined_call_operand.vmem [shape: bf16[2,64,128], index: 9, kind: input, shape index: {}]
  %s10 = inlined_call_operand.vmem [shape: f32[2,1,128], index: 10, kind: input, shape index: {}]
  %s11 = inlined_call_operand.vmem [shape: bf16[2,128,64], index: 11, kind: input, shape index: {}]
  %s12 = inlined_call_operand.vmem [shape: f32[2,1,64], index: 12, kind: input, shape index: {}]
  %s13 = inlined_call_operand.vmem [shape: f32[1,64], index: 13, kind: input, shape index: {}]
  %s14 = inlined_call_operand.vmem [shape: f32[1,64], index: 14, kind: input, shape index: {}]
  %s15 = inlined_call_operand.vmem [shape: bf16[64,256], index: 15, kind: input, shape index: {}]
  %s16 = inlined_call_operand.hbm [shape: f32[2,8,256], index: 16, kind: output, shape index: {}]
  %s17 = sld [smem:[#allocation0]]
  $region97: #{gptneo_pallas_forward.1} parent=0
    _
  %s19 = ssub.s32 1, %s17
  %s20 = scalar_select 0, %s19, %s17
  $region1: #{gptneo_pallas_forward.1} parent=0
    #allocation2 [shape = 'u8[16384]{0}', space=vmem, size = 0x4000, scoped, tag = 'output window, operand 0']
    #allocation3 [shape = 's32[2]{0}', space=sflag, size = 0x8, scoped, tag = 'scoped memory for gptneo_pallas_forward.1']
    %21 = vsyncpa [#allocation3], 0
    %s22 = scalar_lea.sflag [#allocation3], 1
    %23 = vsyncpa %s22, 0
    loop: start=0, step=1, limit=4
    $region2: #{gptneo_pallas_forward.1} parent=1 // loop_pre_header
      _
    $region3: #{gptneo_pallas_forward.1} parent=1 // loop_header
      %s25 = sphi 0, %s29
      %p26 = scmp.ge.s32.totalorder %s25, 4
      %s35 = sphi 0, %s37
      %s38 = sphi 0, %s35
      %s39 = sphi 0, %s38
      %s55 = sphi 0, %s39
      %s61 = sphi 0, %s63
      %s64 = sphi 0, %s61
      %s65 = sphi 0, %s64
      %s81 = sphi 0, %s65
      %s85 = sphi 0, %s85
      %s87 = sphi 0, %s85
      %s88 = sphi 0, %s87
      %s102 = sphi 0, %s88
      %s106 = sphi 0, %s106
      %s108 = sphi 0, %s106
      %s109 = sphi 0, %s108
      %s123 = sphi 0, %s109
      %s127 = sphi 0, %s127
      %s129 = sphi 0, %s127
      %s130 = sphi 0, %s129
      %s144 = sphi 0, %s130
      %s148 = sphi 0, %s148
      %s150 = sphi 0, %s148
      %s151 = sphi 0, %s150
      %s165 = sphi 0, %s151
      %s169 = sphi 0, %s169
      %s171 = sphi 0, %s169
      %s172 = sphi 0, %s171
      %s186 = sphi 0, %s172
      %s190 = sphi 0, %s190
      %s192 = sphi 0, %s190
      %s193 = sphi 0, %s192
      %s207 = sphi 0, %s193
      %s211 = sphi 0, %s211
      %s213 = sphi 0, %s211
      %s214 = sphi 0, %s213
      %s228 = sphi 0, %s214
      %s232 = sphi 0, %s232
      %s234 = sphi 0, %s232
      %s235 = sphi 0, %s234
      %s249 = sphi 0, %s235
      %s253 = sphi 0, %s253
      %s255 = sphi 0, %s253
      %s256 = sphi 0, %s255
      %s270 = sphi 0, %s256
      %s274 = sphi 0, %s274
      %s276 = sphi 0, %s274
      %s277 = sphi 0, %s276
      %s291 = sphi 0, %s277
      %s295 = sphi 0, %s295
      %s297 = sphi 0, %s295
      %s298 = sphi 0, %s297
      %s312 = sphi 0, %s298
      %s316 = sphi 0, %s316
      %s318 = sphi 0, %s316
      %s319 = sphi 0, %s318
      %s333 = sphi 0, %s319
      %s337 = sphi 0, %s337
      %s339 = sphi 0, %s337
      %s340 = sphi 0, %s339
      %s354 = sphi 0, %s340
      %s358 = sphi 0, %s358
      %s360 = sphi 0, %s358
      %s361 = sphi 0, %s360
      %s375 = sphi 0, %s361
      %s381 = sphi 0, %s383
      %s384 = sphi 0, %s381
      %s385 = sphi 0, %s384
      %s401 = sphi 0, %s385
    $region4: #{gptneo_pallas_forward.1} parent=1 // loop_header_branch
      %28 = sbr.rel (%p26) target = $region8
    $region5: #{gptneo_pallas_forward.1} parent=1 // loop_body
      %s30 = ssub.s32 %s25, 1
      %s31 = ssub.s32 %s25, 2
      %s32 = sadd.s32 %s25, 1
      %s33 = ssub.s32 %s25, %s32
      %p34 = scmp.eq.s32.totalorder %s33, 0
      %s36 = sadd.s32 %s35, 1
      %s37 = scalar_select %p34, %s35, %s36
      %p40 = pneg %p34
      %p41 = scmp.eq.s32.totalorder %s25, 1
      %p42 = por %p40, %p41
      %p43 = scmp.ne.s32.totalorder %s35, %s38
      %p44 = scmp.eq.s32.totalorder %s25, 0
      %p45 = por %p43, %p44
      %p46 = scmp.ne.s32.totalorder %s35, %s38
      %p47 = scmp.eq.s32.totalorder %s30, 1
      %p48 = por %p46, %p47
      %p49 = scmp.ne.s32.totalorder %s38, %s39
      %p50 = scmp.eq.s32.totalorder %s30, 0
      %p51 = por %p49, %p50
      %p52 = scmp.ne.s32.totalorder %s38, %s39
      %p53 = scmp.eq.s32.totalorder %s31, 1
      %p54 = por %p52, %p53
      %p56 = scmp.ne.s32.totalorder %s39, %s55
      %p57 = scmp.eq.s32.totalorder %s31, 0
      %p58 = por %p56, %p57
      %s59 = ssub.s32 %s25, %s32
      %p60 = scmp.eq.s32.totalorder %s59, 0
      %s62 = sadd.s32 %s61, 1
      %s63 = scalar_select %p60, %s61, %s62
      %p66 = pneg %p60
      %p67 = scmp.eq.s32.totalorder %s25, 1
      %p68 = por %p66, %p67
      %p69 = scmp.ne.s32.totalorder %s61, %s64
      %p70 = scmp.eq.s32.totalorder %s25, 0
      %p71 = por %p69, %p70
      %p72 = scmp.ne.s32.totalorder %s61, %s64
      %p73 = scmp.eq.s32.totalorder %s30, 1
      %p74 = por %p72, %p73
      %p75 = scmp.ne.s32.totalorder %s64, %s65
      %p76 = scmp.eq.s32.totalorder %s30, 0
      %p77 = por %p75, %p76
      %p78 = scmp.ne.s32.totalorder %s64, %s65
      %p79 = scmp.eq.s32.totalorder %s31, 1
      %p80 = por %p78, %p79
      %p82 = scmp.ne.s32.totalorder %s65, %s81
      %p83 = scmp.eq.s32.totalorder %s31, 0
      %p84 = por %p82, %p83
      %s86 = sadd.s32 %s85, 1
      %p89 = scmp.eq.s32.totalorder %s25, 1
      %p90 = scmp.ne.s32.totalorder %s85, %s87
      %p91 = scmp.eq.s32.totalorder %s25, 0
      %p92 = por %p90, %p91
      %p93 = scmp.ne.s32.totalorder %s85, %s87
      %p94 = scmp.eq.s32.totalorder %s30, 1
      %p95 = por %p93, %p94
      %p96 = scmp.ne.s32.totalorder %s87, %s88
      %p97 = scmp.eq.s32.totalorder %s30, 0
      %p98 = por %p96, %p97
      %p99 = scmp.ne.s32.totalorder %s87, %s88
      %p100 = scmp.eq.s32.totalorder %s31, 1
      %p101 = por %p99, %p100
      %p103 = scmp.ne.s32.totalorder %s88, %s102
      %p104 = scmp.eq.s32.totalorder %s31, 0
      %p105 = por %p103, %p104
      %s107 = sadd.s32 %s106, 1
      %p110 = scmp.eq.s32.totalorder %s25, 1
      %p111 = scmp.ne.s32.totalorder %s106, %s108
      %p112 = scmp.eq.s32.totalorder %s25, 0
      %p113 = por %p111, %p112
      %p114 = scmp.ne.s32.totalorder %s106, %s108
      %p115 = scmp.eq.s32.totalorder %s30, 1
      %p116 = por %p114, %p115
      %p117 = scmp.ne.s32.totalorder %s108, %s109
      %p118 = scmp.eq.s32.totalorder %s30, 0
      %p119 = por %p117, %p118
      %p120 = scmp.ne.s32.totalorder %s108, %s109
      %p121 = scmp.eq.s32.totalorder %s31, 1
      %p122 = por %p120, %p121
      %p124 = scmp.ne.s32.totalorder %s109, %s123
      %p125 = scmp.eq.s32.totalorder %s31, 0
      %p126 = por %p124, %p125
      %s128 = sadd.s32 %s127, 1
      %p131 = scmp.eq.s32.totalorder %s25, 1
      %p132 = scmp.ne.s32.totalorder %s127, %s129
      %p133 = scmp.eq.s32.totalorder %s25, 0
      %p134 = por %p132, %p133
      %p135 = scmp.ne.s32.totalorder %s127, %s129
      %p136 = scmp.eq.s32.totalorder %s30, 1
      %p137 = por %p135, %p136
      %p138 = scmp.ne.s32.totalorder %s129, %s130
      %p139 = scmp.eq.s32.totalorder %s30, 0
      %p140 = por %p138, %p139
      %p141 = scmp.ne.s32.totalorder %s129, %s130
      %p142 = scmp.eq.s32.totalorder %s31, 1
      %p143 = por %p141, %p142
      %p145 = scmp.ne.s32.totalorder %s130, %s144
      %p146 = scmp.eq.s32.totalorder %s31, 0
      %p147 = por %p145, %p146
      %s149 = sadd.s32 %s148, 1
      %p152 = scmp.eq.s32.totalorder %s25, 1
      %p153 = scmp.ne.s32.totalorder %s148, %s150
      %p154 = scmp.eq.s32.totalorder %s25, 0
      %p155 = por %p153, %p154
      %p156 = scmp.ne.s32.totalorder %s148, %s150
      %p157 = scmp.eq.s32.totalorder %s30, 1
      %p158 = por %p156, %p157
      %p159 = scmp.ne.s32.totalorder %s150, %s151
      %p160 = scmp.eq.s32.totalorder %s30, 0
      %p161 = por %p159, %p160
      %p162 = scmp.ne.s32.totalorder %s150, %s151
      %p163 = scmp.eq.s32.totalorder %s31, 1
      %p164 = por %p162, %p163
      %p166 = scmp.ne.s32.totalorder %s151, %s165
      %p167 = scmp.eq.s32.totalorder %s31, 0
      %p168 = por %p166, %p167
      %s170 = sadd.s32 %s169, 1
      %p173 = scmp.eq.s32.totalorder %s25, 1
      %p174 = scmp.ne.s32.totalorder %s169, %s171
      %p175 = scmp.eq.s32.totalorder %s25, 0
      %p176 = por %p174, %p175
      %p177 = scmp.ne.s32.totalorder %s169, %s171
      %p178 = scmp.eq.s32.totalorder %s30, 1
      %p179 = por %p177, %p178
      %p180 = scmp.ne.s32.totalorder %s171, %s172
      %p181 = scmp.eq.s32.totalorder %s30, 0
      %p182 = por %p180, %p181
      %p183 = scmp.ne.s32.totalorder %s171, %s172
      %p184 = scmp.eq.s32.totalorder %s31, 1
      %p185 = por %p183, %p184
      %p187 = scmp.ne.s32.totalorder %s172, %s186
      %p188 = scmp.eq.s32.totalorder %s31, 0
      %p189 = por %p187, %p188
      %s191 = sadd.s32 %s190, 1
      %p194 = scmp.eq.s32.totalorder %s25, 1
      %p195 = scmp.ne.s32.totalorder %s190, %s192
      %p196 = scmp.eq.s32.totalorder %s25, 0
      %p197 = por %p195, %p196
      %p198 = scmp.ne.s32.totalorder %s190, %s192
      %p199 = scmp.eq.s32.totalorder %s30, 1
      %p200 = por %p198, %p199
      %p201 = scmp.ne.s32.totalorder %s192, %s193
      %p202 = scmp.eq.s32.totalorder %s30, 0
      %p203 = por %p201, %p202
      %p204 = scmp.ne.s32.totalorder %s192, %s193
      %p205 = scmp.eq.s32.totalorder %s31, 1
      %p206 = por %p204, %p205
      %p208 = scmp.ne.s32.totalorder %s193, %s207
      %p209 = scmp.eq.s32.totalorder %s31, 0
      %p210 = por %p208, %p209
      %s212 = sadd.s32 %s211, 1
      %p215 = scmp.eq.s32.totalorder %s25, 1
      %p216 = scmp.ne.s32.totalorder %s211, %s213
      %p217 = scmp.eq.s32.totalorder %s25, 0
      %p218 = por %p216, %p217
      %p219 = scmp.ne.s32.totalorder %s211, %s213
      %p220 = scmp.eq.s32.totalorder %s30, 1
      %p221 = por %p219, %p220
      %p222 = scmp.ne.s32.totalorder %s213, %s214
      %p223 = scmp.eq.s32.totalorder %s30, 0
      %p224 = por %p222, %p223
      %p225 = scmp.ne.s32.totalorder %s213, %s214
      %p226 = scmp.eq.s32.totalorder %s31, 1
      %p227 = por %p225, %p226
      %p229 = scmp.ne.s32.totalorder %s214, %s228
      %p230 = scmp.eq.s32.totalorder %s31, 0
      %p231 = por %p229, %p230
      %s233 = sadd.s32 %s232, 1
      %p236 = scmp.eq.s32.totalorder %s25, 1
      %p237 = scmp.ne.s32.totalorder %s232, %s234
      %p238 = scmp.eq.s32.totalorder %s25, 0
      %p239 = por %p237, %p238
      %p240 = scmp.ne.s32.totalorder %s232, %s234
      %p241 = scmp.eq.s32.totalorder %s30, 1
      %p242 = por %p240, %p241
      %p243 = scmp.ne.s32.totalorder %s234, %s235
      %p244 = scmp.eq.s32.totalorder %s30, 0
      %p245 = por %p243, %p244
      %p246 = scmp.ne.s32.totalorder %s234, %s235
      %p247 = scmp.eq.s32.totalorder %s31, 1
      %p248 = por %p246, %p247
      %p250 = scmp.ne.s32.totalorder %s235, %s249
      %p251 = scmp.eq.s32.totalorder %s31, 0
      %p252 = por %p250, %p251
      %s254 = sadd.s32 %s253, 1
      %p257 = scmp.eq.s32.totalorder %s25, 1
      %p258 = scmp.ne.s32.totalorder %s253, %s255
      %p259 = scmp.eq.s32.totalorder %s25, 0
      %p260 = por %p258, %p259
      %p261 = scmp.ne.s32.totalorder %s253, %s255
      %p262 = scmp.eq.s32.totalorder %s30, 1
      %p263 = por %p261, %p262
      %p264 = scmp.ne.s32.totalorder %s255, %s256
      %p265 = scmp.eq.s32.totalorder %s30, 0
      %p266 = por %p264, %p265
      %p267 = scmp.ne.s32.totalorder %s255, %s256
      %p268 = scmp.eq.s32.totalorder %s31, 1
      %p269 = por %p267, %p268
      %p271 = scmp.ne.s32.totalorder %s256, %s270
      %p272 = scmp.eq.s32.totalorder %s31, 0
      %p273 = por %p271, %p272
      %s275 = sadd.s32 %s274, 1
      %p278 = scmp.eq.s32.totalorder %s25, 1
      %p279 = scmp.ne.s32.totalorder %s274, %s276
      %p280 = scmp.eq.s32.totalorder %s25, 0
      %p281 = por %p279, %p280
      %p282 = scmp.ne.s32.totalorder %s274, %s276
      %p283 = scmp.eq.s32.totalorder %s30, 1
      %p284 = por %p282, %p283
      %p285 = scmp.ne.s32.totalorder %s276, %s277
      %p286 = scmp.eq.s32.totalorder %s30, 0
      %p287 = por %p285, %p286
      %p288 = scmp.ne.s32.totalorder %s276, %s277
      %p289 = scmp.eq.s32.totalorder %s31, 1
      %p290 = por %p288, %p289
      %p292 = scmp.ne.s32.totalorder %s277, %s291
      %p293 = scmp.eq.s32.totalorder %s31, 0
      %p294 = por %p292, %p293
      %s296 = sadd.s32 %s295, 1
      %p299 = scmp.eq.s32.totalorder %s25, 1
      %p300 = scmp.ne.s32.totalorder %s295, %s297
      %p301 = scmp.eq.s32.totalorder %s25, 0
      %p302 = por %p300, %p301
      %p303 = scmp.ne.s32.totalorder %s295, %s297
      %p304 = scmp.eq.s32.totalorder %s30, 1
      %p305 = por %p303, %p304
      %p306 = scmp.ne.s32.totalorder %s297, %s298
      %p307 = scmp.eq.s32.totalorder %s30, 0
      %p308 = por %p306, %p307
      %p309 = scmp.ne.s32.totalorder %s297, %s298
      %p310 = scmp.eq.s32.totalorder %s31, 1
      %p311 = por %p309, %p310
      %p313 = scmp.ne.s32.totalorder %s298, %s312
      %p314 = scmp.eq.s32.totalorder %s31, 0
      %p315 = por %p313, %p314
      %s317 = sadd.s32 %s316, 1
      %p320 = scmp.eq.s32.totalorder %s25, 1
      %p321 = scmp.ne.s32.totalorder %s316, %s318
      %p322 = scmp.eq.s32.totalorder %s25, 0
      %p323 = por %p321, %p322
      %p324 = scmp.ne.s32.totalorder %s316, %s318
      %p325 = scmp.eq.s32.totalorder %s30, 1
      %p326 = por %p324, %p325
      %p327 = scmp.ne.s32.totalorder %s318, %s319
      %p328 = scmp.eq.s32.totalorder %s30, 0
      %p329 = por %p327, %p328
      %p330 = scmp.ne.s32.totalorder %s318, %s319
      %p331 = scmp.eq.s32.totalorder %s31, 1
      %p332 = por %p330, %p331
      %p334 = scmp.ne.s32.totalorder %s319, %s333
      %p335 = scmp.eq.s32.totalorder %s31, 0
      %p336 = por %p334, %p335
      %s338 = sadd.s32 %s337, 1
      %p341 = scmp.eq.s32.totalorder %s25, 1
      %p342 = scmp.ne.s32.totalorder %s337, %s339
      %p343 = scmp.eq.s32.totalorder %s25, 0
      %p344 = por %p342, %p343
      %p345 = scmp.ne.s32.totalorder %s337, %s339
      %p346 = scmp.eq.s32.totalorder %s30, 1
      %p347 = por %p345, %p346
      %p348 = scmp.ne.s32.totalorder %s339, %s340
      %p349 = scmp.eq.s32.totalorder %s30, 0
      %p350 = por %p348, %p349
      %p351 = scmp.ne.s32.totalorder %s339, %s340
      %p352 = scmp.eq.s32.totalorder %s31, 1
      %p353 = por %p351, %p352
      %p355 = scmp.ne.s32.totalorder %s340, %s354
      %p356 = scmp.eq.s32.totalorder %s31, 0
      %p357 = por %p355, %p356
      %s359 = sadd.s32 %s358, 1
      %p362 = scmp.eq.s32.totalorder %s25, 1
      %p363 = scmp.ne.s32.totalorder %s358, %s360
      %p364 = scmp.eq.s32.totalorder %s25, 0
      %p365 = por %p363, %p364
      %p366 = scmp.ne.s32.totalorder %s358, %s360
      %p367 = scmp.eq.s32.totalorder %s30, 1
      %p368 = por %p366, %p367
      %p369 = scmp.ne.s32.totalorder %s360, %s361
      %p370 = scmp.eq.s32.totalorder %s30, 0
      %p371 = por %p369, %p370
      %p372 = scmp.ne.s32.totalorder %s360, %s361
      %p373 = scmp.eq.s32.totalorder %s31, 1
      %p374 = por %p372, %p373
      %p376 = scmp.ne.s32.totalorder %s361, %s375
      %p377 = scmp.eq.s32.totalorder %s31, 0
      %p378 = por %p376, %p377
      %s379 = ssub.s32 %s25, %s32
      %p380 = scmp.eq.s32.totalorder %s379, 0
      %s382 = sadd.s32 %s381, 1
      %s383 = scalar_select %p380, %s381, %s382
      %p386 = pneg %p380
      %p387 = scmp.eq.s32.totalorder %s25, 1
      %p388 = por %p386, %p387
      %p389 = scmp.ne.s32.totalorder %s381, %s384
      %p390 = scmp.eq.s32.totalorder %s25, 0
      %p391 = por %p389, %p390
      %p392 = scmp.ne.s32.totalorder %s381, %s384
      %p393 = scmp.eq.s32.totalorder %s30, 1
      %p394 = por %p392, %p393
      %p395 = scmp.ne.s32.totalorder %s384, %s385
      %p396 = scmp.eq.s32.totalorder %s30, 0
      %p397 = por %p395, %p396
      %p398 = scmp.ne.s32.totalorder %s384, %s385
      %p399 = scmp.eq.s32.totalorder %s31, 1
      %p400 = por %p398, %p399
      %p402 = scmp.ne.s32.totalorder %s385, %s401
      %p403 = scmp.eq.s32.totalorder %s31, 0
      %p404 = por %p402, %p403
      %p405 = scmp.le.s32.totalorder 1, %s25
      %p406 = scmp.lt.s32.totalorder %s25, 3
      %p407 = pnand %p405, %p406
      %p408 = pneg %p407
      // Predicated region
      $region9: #{gptneo_pallas_forward.1} parent=5 // pred_check
        _
      $region10: #{gptneo_pallas_forward.1} parent=5 // pred_check_branch
        %410 = sbr.rel (%p407) target = $region12
      $region11: #{gptneo_pallas_forward.1} parent=5 // pred_region
        %s411 = ssub.s32 %s25, 1
        // Predicated region
        $region13: #{gptneo_pallas_forward.1} parent=11 // pred_check
          %p412 = pneg %p98
        $region14: #{gptneo_pallas_forward.1} parent=11 // pred_check_branch
          %414 = sbr.rel (%p412) target = $region16
        $region15: #{gptneo_pallas_forward.1} parent=11 // pred_region
          _
        $region16: #{gptneo_pallas_forward.1} parent=11 // pred_fallthru
          _
        // Predicated region
        $region17: #{gptneo_pallas_forward.1} parent=11 // pred_check
          %p415 = pneg %p119
        $region18: #{gptneo_pallas_forward.1} parent=11 // pred_check_branch
          %417 = sbr.rel (%p415) target = $region20
        $region19: #{gptneo_pallas_forward.1} parent=11 // pred_region
          _
        $region20: #{gptneo_pallas_forward.1} parent=11 // pred_fallthru
          _
        // Predicated region
        $region21: #{gptneo_pallas_forward.1} parent=11 // pred_check
          %p418 = pneg %p140
        $region22: #{gptneo_pallas_forward.1} parent=11 // pred_check_branch
          %420 = sbr.rel (%p418) target = $region24
        $region23: #{gptneo_pallas_forward.1} parent=11 // pred_region
          _
        $region24: #{gptneo_pallas_forward.1} parent=11 // pred_fallthru
          _
        // Predicated region
        $region25: #{gptneo_pallas_forward.1} parent=11 // pred_check
          %p421 = pneg %p161
        $region26: #{gptneo_pallas_forward.1} parent=11 // pred_check_branch
          %423 = sbr.rel (%p421) target = $region28
        $region27: #{gptneo_pallas_forward.1} parent=11 // pred_region
          _
        $region28: #{gptneo_pallas_forward.1} parent=11 // pred_fallthru
          _
        // Predicated region
        $region29: #{gptneo_pallas_forward.1} parent=11 // pred_check
          %p424 = pneg %p182
        $region30: #{gptneo_pallas_forward.1} parent=11 // pred_check_branch
          %426 = sbr.rel (%p424) target = $region32
        $region31: #{gptneo_pallas_forward.1} parent=11 // pred_region
          _
        $region32: #{gptneo_pallas_forward.1} parent=11 // pred_fallthru
          _
        // Predicated region
        $region33: #{gptneo_pallas_forward.1} parent=11 // pred_check
          %p427 = pneg %p203
        $region34: #{gptneo_pallas_forward.1} parent=11 // pred_check_branch
          %429 = sbr.rel (%p427) target = $region36
        $region35: #{gptneo_pallas_forward.1} parent=11 // pred_region
          _
        $region36: #{gptneo_pallas_forward.1} parent=11 // pred_fallthru
          _
        // Predicated region
        $region37: #{gptneo_pallas_forward.1} parent=11 // pred_check
          %p430 = pneg %p224
        $region38: #{gptneo_pallas_forward.1} parent=11 // pred_check_branch
          %432 = sbr.rel (%p430) target = $region40
        $region39: #{gptneo_pallas_forward.1} parent=11 // pred_region
          _
        $region40: #{gptneo_pallas_forward.1} parent=11 // pred_fallthru
          _
        // Predicated region
        $region41: #{gptneo_pallas_forward.1} parent=11 // pred_check
          %p433 = pneg %p245
        $region42: #{gptneo_pallas_forward.1} parent=11 // pred_check_branch
          %435 = sbr.rel (%p433) target = $region44
        $region43: #{gptneo_pallas_forward.1} parent=11 // pred_region
          _
        $region44: #{gptneo_pallas_forward.1} parent=11 // pred_fallthru
          _
        // Predicated region
        $region45: #{gptneo_pallas_forward.1} parent=11 // pred_check
          %p436 = pneg %p266
        $region46: #{gptneo_pallas_forward.1} parent=11 // pred_check_branch
          %438 = sbr.rel (%p436) target = $region48
        $region47: #{gptneo_pallas_forward.1} parent=11 // pred_region
          _
        $region48: #{gptneo_pallas_forward.1} parent=11 // pred_fallthru
          _
        // Predicated region
        $region49: #{gptneo_pallas_forward.1} parent=11 // pred_check
          %p439 = pneg %p287
        $region50: #{gptneo_pallas_forward.1} parent=11 // pred_check_branch
          %441 = sbr.rel (%p439) target = $region52
        $region51: #{gptneo_pallas_forward.1} parent=11 // pred_region
          _
        $region52: #{gptneo_pallas_forward.1} parent=11 // pred_fallthru
          _
        // Predicated region
        $region53: #{gptneo_pallas_forward.1} parent=11 // pred_check
          %p442 = pneg %p308
        $region54: #{gptneo_pallas_forward.1} parent=11 // pred_check_branch
          %444 = sbr.rel (%p442) target = $region56
        $region55: #{gptneo_pallas_forward.1} parent=11 // pred_region
          _
        $region56: #{gptneo_pallas_forward.1} parent=11 // pred_fallthru
          _
        // Predicated region
        $region57: #{gptneo_pallas_forward.1} parent=11 // pred_check
          %p445 = pneg %p329
        $region58: #{gptneo_pallas_forward.1} parent=11 // pred_check_branch
          %447 = sbr.rel (%p445) target = $region60
        $region59: #{gptneo_pallas_forward.1} parent=11 // pred_region
          _
        $region60: #{gptneo_pallas_forward.1} parent=11 // pred_fallthru
          _
        // Predicated region
        $region61: #{gptneo_pallas_forward.1} parent=11 // pred_check
          %p448 = pneg %p350
        $region62: #{gptneo_pallas_forward.1} parent=11 // pred_check_branch
          %450 = sbr.rel (%p448) target = $region64
        $region63: #{gptneo_pallas_forward.1} parent=11 // pred_region
          _
        $region64: #{gptneo_pallas_forward.1} parent=11 // pred_fallthru
          _
        // Predicated region
        $region65: #{gptneo_pallas_forward.1} parent=11 // pred_check
          %p451 = pneg %p371
        $region66: #{gptneo_pallas_forward.1} parent=11 // pred_check_branch
          %453 = sbr.rel (%p451) target = $region68
        $region67: #{gptneo_pallas_forward.1} parent=11 // pred_region
          _
        $region68: #{gptneo_pallas_forward.1} parent=11 // pred_fallthru
          _
      $region12: #{gptneo_pallas_forward.1} parent=5 // pred_fallthru
        _
      %p454 = scmp.lt.s32.totalorder %s25, 2
      // Predicated region
      $region69: #{gptneo_pallas_forward.1} parent=5 // pred_check
        %p455 = pneg %p454
      $region70: #{gptneo_pallas_forward.1} parent=5 // pred_check_branch
        %457 = sbr.rel (%p455) target = $region72
      $region71: #{gptneo_pallas_forward.1} parent=5 // pred_region
        // Predicated region
        $region73: #{gptneo_pallas_forward.1} parent=71 // pred_check
          %p458 = pneg %p45
        $region74: #{gptneo_pallas_forward.1} parent=71 // pred_check_branch
          %460 = sbr.rel (%p458) target = $region76
        $region75: #{gptneo_pallas_forward.1} parent=71 // pred_region
          %p461 = scmp.lt.s32.totalorder %s25, 1
          %s462 = scalar_select %p461, %s25, 1
          %s463 = smul.addr %s462, 8
          %s464 = scalar_lea.vmem %s0, %s463
        $region76: #{gptneo_pallas_forward.1} parent=71 // pred_fallthru
          _
        // Predicated region
        $region77: #{gptneo_pallas_forward.1} parent=71 // pred_check
          %p465 = pneg %p71
        $region78: #{gptneo_pallas_forward.1} parent=71 // pred_check_branch
          %467 = sbr.rel (%p465) target = $region80
        $region79: #{gptneo_pallas_forward.1} parent=71 // pred_region
          %p468 = scmp.lt.s32.totalorder %s25, 1
          %s469 = scalar_select %p468, %s25, 1
          %s470 = smul.addr %s469, 8
          %s471 = scalar_lea.vmem %s1, %s470
        $region80: #{gptneo_pallas_forward.1} parent=71 // pred_fallthru
          _
      $region72: #{gptneo_pallas_forward.1} parent=5 // pred_fallthru
        _
      %p472 = scmp.le.s32.totalorder 1, %s25
      %p473 = scmp.lt.s32.totalorder %s25, 3
      %p474 = pnand %p472, %p473
      %p475 = pneg %p474
      // Predicated region
      $region81: #{gptneo_pallas_forward.1} parent=5 // pred_check
        _
      $region82: #{gptneo_pallas_forward.1} parent=5 // pred_check_branch
        %477 = sbr.rel (%p474) target = $region84
      $region83: #{gptneo_pallas_forward.1} parent=5 // pred_region
        %s478 = ssub.s32 %s25, 1
        %p479 = scmp.lt.s32.totalorder %s30, 1
        %s480 = scalar_select %p479, %s30, 1
        %s481 = smul.addr %s480, 8
        %s482 = scalar_lea.vmem %s0, %s481
        %p483 = pneg %p51
        %p484 = pneg %p48
        %p485 = scmp.lt.s32.totalorder %s30, 1
        %s486 = scalar_select %p485, %s30, 1
        %s487 = smul.addr %s486, 8
        %s488 = scalar_lea.vmem %s1, %s487
        %p489 = pneg %p77
        %p490 = pneg %p74
        %p491 = pneg %p98
        %p492 = pneg %p95
        %p493 = pneg %p119
        %p494 = pneg %p116
        %p495 = pneg %p140
        %p496 = pneg %p137
        %p497 = pneg %p161
        %p498 = pneg %p158
        %p499 = pneg %p182
        %p500 = pneg %p179
        %p501 = pneg %p203
        %p502 = pneg %p200
        %p503 = pneg %p224
        %p504 = pneg %p221
        %p505 = pneg %p245
        %p506 = pneg %p242
        %p507 = pneg %p266
        %p508 = pneg %p263
        %p509 = pneg %p287
        %p510 = pneg %p284
        %p511 = pneg %p308
        %p512 = pneg %p305
        %p513 = pneg %p329
        %p514 = pneg %p326
        %p515 = pneg %p350
        %p516 = pneg %p347
        %p517 = pneg %p371
        %p518 = pneg %p368
        %p519 = pneg %p397
        %p520 = pneg %p394
        %s521 = sand.u32 %s384, 1
        %s522 = scalar_lea.sflag [#allocation3], %s521
        %s523 = sand.u32 %s384, 1
        %s524 = smul.addr %s523, 16
        %s525 = scalar_lea.vmem [#allocation2], %s524
        %p526 = scmp.lt.s32.totalorder %s30, 1
        %s527 = scalar_select %p526, %s30, 1
        %s528 = smul.addr %s527, 8
        %s529 = scalar_lea.vmem %s0, %s528
        %p530 = scmp.lt.s32.totalorder %s30, 1
        %s531 = scalar_select %p530, %s30, 1
        %s532 = smul.addr %s531, 8
        %s533 = scalar_lea.vmem %s1, %s532
        %v535 = vld [vmem:[%s529] sm:$0xff]
        %v536 = vld [vmem:[%s533] sm:$0xff]
        %v537 = vld [vmem:[%s2] sm:$0x1]
        %v538 = vld [vmem:[%s3] sm:$0x1]
        %vm539 = vcmask 523264
        %v540 = vsel %vm539, %v535, 0.0
        %541 = vadd.xlane.f32.xlu0 %v540
        %v542 = vpop.xlane.xlu0 %541
        %v543 = vrcp.pop 64.0
        %v544 = vmul.f32 64.0, %v543
        %v545 = vsub.f32 1.0, %v544
        %v546 = vmul.f32 %v543, %v545
        %v547 = vadd.f32 %v543, %v546
        %vm548 = vweird.f32 %v543
        %v549 = vsel %vm548, %v543, %v547
        %v550 = vmul.f32 %v542, %v549
        %v551 = vsub.f32 %v535, %v550
        %v552 = vmul.f32 %v551, %v551
        %v553 = vsel %vm539, %v552, 0.0
        %554 = vadd.xlane.f32.xlu0 %v553
        %v555 = vpop.xlane.xlu0 %554
        %v556 = vmul.f32 %v555, %v549
        %v557 = vrsqrt.pop %v556
        %v558 = vmul.f32 %v557, %v556
        %v559 = vmul.f32 %v558, %v557
        %v560 = vmul.f32 0.5, %v559
        %v561 = vsub.f32 1.5, %v560
        %v562 = vmul.f32 %v557, %v561
        %v563 = vmul.f32 %v556, %v562
        %vm564 = vcmp.eq.f32.partialorder %v556, inf
        %v565 = vsel %vm564, %v556, %v563
        %vm566 = vcmp.eq.f32.partialorder %v556, 0.0
        %v567 = vand.u32 %v556, 2147483648
        %v568 = vsel %vm566, %v567, %v565
        %v569 = vadd.f32 %v568, 1e-05
        %v570 = vrcp.pop %v569
        %v571 = vmul.f32 %v569, %v570
        %v572 = vsub.f32 1.0, %v571
        %v573 = vmul.f32 %v570, %v572
        %v574 = vadd.f32 %v570, %v573
        %vm575 = vweird.f32 %v569
        %vm576 = vweird.f32 %v570
        %vm577 = vmor %vm575, %vm576
        %v578 = vsel %vm577, %v570, %v574
        %v579 = vand.u32 2147483647, %v569
        %vm580 = vcmp.eq.f32.partialorder %v579, 8.507059e+37
        %v581 = vand.u32 %v569, 2147483648
        %v582 = vor.u32 1.1754944e-38, %v581
        %v583 = vsel %vm580, %v582, %v578
        %v584 = vmul.f32 %v551, %v583
        %v586 = vperm.slane %v537, 0
        %v588 = vmul.f32 %v584, %v586
        %v590 = vperm.slane %v538, 0
        %v592 = vadd.f32 %v588, %v590
        %v593 = vpack.c.bf16 %v592, %v592
        %v594 = vld [vmem:[%s4] sm:$0xf]
        %v595 = vld [vmem:[%s4 + $0x4] sm:$0xf]
        %v596 = vld [vmem:[%s4 + $0x8] sm:$0xf]
        %v597 = vld [vmem:[%s4 + $0xc] sm:$0xf]
        %v598 = vld [vmem:[%s4 + $0x10] sm:$0xf]
        %v599 = vld [vmem:[%s4 + $0x14] sm:$0xf]
        %v600 = vld [vmem:[%s4 + $0x18] sm:$0xf]
        %v601 = vld [vmem:[%s4 + $0x1c] sm:$0xf]
        %v602 = vld [vmem:[%s4 + $0x20] sm:$0xf]
        %v603 = vld [vmem:[%s4 + $0x24] sm:$0xf]
        %v604 = vld [vmem:[%s4 + $0x28] sm:$0xf]
        %v605 = vld [vmem:[%s4 + $0x2c] sm:$0xf]
        %v606 = vld [vmem:[%s4 + $0x30] sm:$0xf]
        %v607 = vld [vmem:[%s4 + $0x34] sm:$0xf]
        %v608 = vld [vmem:[%s4 + $0x38] sm:$0xf]
        %v609 = vld [vmem:[%s4 + $0x3c] sm:$0xf]
        %v610 = vld [vmem:[%s4 + $0x40] sm:$0xf]
        %v611 = vld [vmem:[%s4 + $0x44] sm:$0xf]
        %v612 = vld [vmem:[%s4 + $0x48] sm:$0xf]
        %v613 = vld [vmem:[%s4 + $0x4c] sm:$0xf]
        %v614 = vld [vmem:[%s4 + $0x50] sm:$0xf]
        %v615 = vld [vmem:[%s4 + $0x54] sm:$0xf]
        %v616 = vld [vmem:[%s4 + $0x58] sm:$0xf]
        %v617 = vld [vmem:[%s4 + $0x5c] sm:$0xf]
        %v618 = vld [vmem:[%s4 + $0x60] sm:$0xf]
        %v619 = vld [vmem:[%s4 + $0x64] sm:$0xf]
        %v620 = vld [vmem:[%s4 + $0x68] sm:$0xf]
        %v621 = vld [vmem:[%s4 + $0x6c] sm:$0xf]
        %v622 = vld [vmem:[%s4 + $0x70] sm:$0xf]
        %v623 = vld [vmem:[%s4 + $0x74] sm:$0xf]
        %v624 = vld [vmem:[%s4 + $0x78] sm:$0xf]
        %v625 = vld [vmem:[%s4 + $0x7c] sm:$0xf]
        %v626 = vld [vmem:[%s4 + $0x80] sm:$0xf]
        %v627 = vld [vmem:[%s4 + $0x84] sm:$0xf]
        %v628 = vld [vmem:[%s4 + $0x88] sm:$0xf]
        %v629 = vld [vmem:[%s4 + $0x8c] sm:$0xf]
        %v630 = vld [vmem:[%s4 + $0x90] sm:$0xf]
        %v631 = vld [vmem:[%s4 + $0x94] sm:$0xf]
        %v632 = vld [vmem:[%s4 + $0x98] sm:$0xf]
        %v633 = vld [vmem:[%s4 + $0x9c] sm:$0xf]
        %v634 = vld [vmem:[%s4 + $0xa0] sm:$0xf]
        %v635 = vld [vmem:[%s4 + $0xa4] sm:$0xf]
        %v636 = vld [vmem:[%s4 + $0xa8] sm:$0xf]
        %v637 = vld [vmem:[%s4 + $0xac] sm:$0xf]
        %v638 = vld [vmem:[%s4 + $0xb0] sm:$0xf]
        %v639 = vld [vmem:[%s4 + $0xb4] sm:$0xf]
        %v640 = vld [vmem:[%s4 + $0xb8] sm:$0xf]
        %v641 = vld [vmem:[%s4 + $0xbc] sm:$0xf]
        %v642 = vld [vmem:[%s4 + $0xc0] sm:$0xf]
        %v643 = vld [vmem:[%s4 + $0xc4] sm:$0xf]
        %v644 = vld [vmem:[%s4 + $0xc8] sm:$0xf]
        %v645 = vld [vmem:[%s4 + $0xcc] sm:$0xf]
        %v646 = vld [vmem:[%s4 + $0xd0] sm:$0xf]
        %v647 = vld [vmem:[%s4 + $0xd4] sm:$0xf]
        %v648 = vld [vmem:[%s4 + $0xd8] sm:$0xf]
        %v649 = vld [vmem:[%s4 + $0xdc] sm:$0xf]
        %v650 = vld [vmem:[%s4 + $0xe0] sm:$0xf]
        %v651 = vld [vmem:[%s4 + $0xe4] sm:$0xf]
        %v652 = vld [vmem:[%s4 + $0xe8] sm:$0xf]
        %v653 = vld [vmem:[%s4 + $0xec] sm:$0xf]
        %v654 = vld [vmem:[%s4 + $0xf0] sm:$0xf]
        %v655 = vld [vmem:[%s4 + $0xf4] sm:$0xf]
        %v656 = vld [vmem:[%s4 + $0xf8] sm:$0xf]
        %v657 = vld [vmem:[%s4 + $0xfc] sm:$0xf]
        %v658 = vld [vmem:[%s4 + $0x100] sm:$0xf]
        %v659 = vld [vmem:[%s4 + $0x104] sm:$0xf]
        %v660 = vld [vmem:[%s4 + $0x108] sm:$0xf]
        %v661 = vld [vmem:[%s4 + $0x10c] sm:$0xf]
        %v662 = vld [vmem:[%s4 + $0x110] sm:$0xf]
        %v663 = vld [vmem:[%s4 + $0x114] sm:$0xf]
        %v664 = vld [vmem:[%s4 + $0x118] sm:$0xf]
        %v665 = vld [vmem:[%s4 + $0x11c] sm:$0xf]
        %v666 = vld [vmem:[%s4 + $0x120] sm:$0xf]
        %v667 = vld [vmem:[%s4 + $0x124] sm:$0xf]
        %v668 = vld [vmem:[%s4 + $0x128] sm:$0xf]
        %v669 = vld [vmem:[%s4 + $0x12c] sm:$0xf]
        %v670 = vld [vmem:[%s4 + $0x130] sm:$0xf]
        %v671 = vld [vmem:[%s4 + $0x134] sm:$0xf]
        %v672 = vld [vmem:[%s4 + $0x138] sm:$0xf]
        %v673 = vld [vmem:[%s4 + $0x13c] sm:$0xf]
        %v674 = vld [vmem:[%s4 + $0x140] sm:$0xf]
        %v675 = vld [vmem:[%s4 + $0x144] sm:$0xf]
        %v676 = vld [vmem:[%s4 + $0x148] sm:$0xf]
        %v677 = vld [vmem:[%s4 + $0x14c] sm:$0xf]
        %v678 = vld [vmem:[%s4 + $0x150] sm:$0xf]
        %v679 = vld [vmem:[%s4 + $0x154] sm:$0xf]
        %v680 = vld [vmem:[%s4 + $0x158] sm:$0xf]
        %v681 = vld [vmem:[%s4 + $0x15c] sm:$0xf]
        %v682 = vld [vmem:[%s4 + $0x160] sm:$0xf]
        %v683 = vld [vmem:[%s4 + $0x164] sm:$0xf]
        %v684 = vld [vmem:[%s4 + $0x168] sm:$0xf]
        %v685 = vld [vmem:[%s4 + $0x16c] sm:$0xf]
        %v686 = vld [vmem:[%s4 + $0x170] sm:$0xf]
        %v687 = vld [vmem:[%s4 + $0x174] sm:$0xf]
        %v688 = vld [vmem:[%s4 + $0x178] sm:$0xf]
        %v689 = vld [vmem:[%s4 + $0x17c] sm:$0xf]
        %v698 = vunpack.c.l.b16 %v594
        %v699 = vunpack.c.l.b16 %v595
        %v700 = vunpack.c.l.b16 %v596
        %v701 = vunpack.c.l.b16 %v597
        %v702 = vunpack.c.l.b16 %v598
        %v703 = vunpack.c.l.b16 %v599
        %v704 = vunpack.c.l.b16 %v600
        %v705 = vunpack.c.l.b16 %v601
        %v706 = vpack.c.b16 %v699, %v698
        %v707 = vpack.c.b16 %v701, %v700
        %v708 = vpack.c.b16 %v703, %v702
        %v709 = vpack.c.b16 %v705, %v704
        %v715 = vsel %vm539, %v593, 0
        %717 = vmatpush.bf16.msra.mxu0 0
        %718 = vmatpush.bf16.msra.mxu0 0
        %719 = vmatpush.bf16.msra.mxu0 0
        %720 = vmatpush.bf16.msra.mxu0 0
        %721 = vmatpush.bf16.msra.mxu0 %v709
        %722 = vmatpush.bf16.msra.mxu0 %v708
        %723 = vmatpush.bf16.msra.mxu0 %v707
        %724 = vmatpush.bf16.msra.mxu0 %v706
        %725 = vmatmul.bf16.gmra.mxu0 %v715
        %v726 = vpop.f32.mrf.mxu0
        %v727 = vadd.f32 0.0, %v726
        %v728 = vpop.f32.mrf.mxu0
        %729 = vdwg.mxu0
        %v738 = vunpack.c.l.b16 %v602
        %v739 = vunpack.c.l.b16 %v603
        %v740 = vunpack.c.l.b16 %v604
        %v741 = vunpack.c.l.b16 %v605
        %v742 = vunpack.c.l.b16 %v606
        %v743 = vunpack.c.l.b16 %v607
        %v744 = vunpack.c.l.b16 %v608
        %v745 = vunpack.c.l.b16 %v609
        %v746 = vpack.c.b16 %v739, %v738
        %v747 = vpack.c.b16 %v741, %v740
        %v748 = vpack.c.b16 %v743, %v742
        %v749 = vpack.c.b16 %v745, %v744
        %754 = vmatpush.bf16.msra.mxu0 0
        %755 = vmatpush.bf16.msra.mxu0 0
        %756 = vmatpush.bf16.msra.mxu0 0
        %757 = vmatpush.bf16.msra.mxu0 0
        %758 = vmatpush.bf16.msra.mxu0 %v749
        %759 = vmatpush.bf16.msra.mxu0 %v748
        %760 = vmatpush.bf16.msra.mxu0 %v747
        %761 = vmatpush.bf16.msra.mxu0 %v746
        %762 = vmatmul.bf16.gmra.mxu0 %v715
        %v763 = vpop.f32.mrf.mxu0
        %v764 = vadd.f32 0.0, %v763
        %v765 = vpop.f32.mrf.mxu0
        %766 = vdwg.mxu0
        %v775 = vunpack.c.l.b16 %v610
        %v776 = vunpack.c.l.b16 %v611
        %v777 = vunpack.c.l.b16 %v612
        %v778 = vunpack.c.l.b16 %v613
        %v779 = vunpack.c.l.b16 %v614
        %v780 = vunpack.c.l.b16 %v615
        %v781 = vunpack.c.l.b16 %v616
        %v782 = vunpack.c.l.b16 %v617
        %v783 = vpack.c.b16 %v776, %v775
        %v784 = vpack.c.b16 %v778, %v777
        %v785 = vpack.c.b16 %v780, %v779
        %v786 = vpack.c.b16 %v782, %v781
        %791 = vmatpush.bf16.msra.mxu0 0
        %792 = vmatpush.bf16.msra.mxu0 0
        %793 = vmatpush.bf16.msra.mxu0 0
        %794 = vmatpush.bf16.msra.mxu0 0
        %795 = vmatpush.bf16.msra.mxu0 %v786
        %796 = vmatpush.bf16.msra.mxu0 %v785
        %797 = vmatpush.bf16.msra.mxu0 %v784
        %798 = vmatpush.bf16.msra.mxu0 %v783
        %799 = vmatmul.bf16.gmra.mxu0 %v715
        %v800 = vpop.f32.mrf.mxu0
        %v801 = vadd.f32 0.0, %v800
        %v802 = vpop.f32.mrf.mxu0
        %803 = vdwg.mxu0
        %v812 = vunpack.c.l.b16 %v618
        %v813 = vunpack.c.l.b16 %v619
        %v814 = vunpack.c.l.b16 %v620
        %v815 = vunpack.c.l.b16 %v621
        %v816 = vunpack.c.l.b16 %v622
        %v817 = vunpack.c.l.b16 %v623
        %v818 = vunpack.c.l.b16 %v624
        %v819 = vunpack.c.l.b16 %v625
        %v820 = vpack.c.b16 %v813, %v812
        %v821 = vpack.c.b16 %v815, %v814
        %v822 = vpack.c.b16 %v817, %v816
        %v823 = vpack.c.b16 %v819, %v818
        %828 = vmatpush.bf16.msra.mxu0 0
        %829 = vmatpush.bf16.msra.mxu0 0
        %830 = vmatpush.bf16.msra.mxu0 0
        %831 = vmatpush.bf16.msra.mxu0 0
        %832 = vmatpush.bf16.msra.mxu0 %v823
        %833 = vmatpush.bf16.msra.mxu0 %v822
        %834 = vmatpush.bf16.msra.mxu0 %v821
        %835 = vmatpush.bf16.msra.mxu0 %v820
        %836 = vmatmul.bf16.gmra.mxu0 %v715
        %v837 = vpop.f32.mrf.mxu0
        %v838 = vadd.f32 0.0, %v837
        %v839 = vpop.f32.mrf.mxu0
        %840 = vdwg.mxu0
        %v849 = vunpack.c.l.b16 %v626
        %v850 = vunpack.c.l.b16 %v627
        %v851 = vunpack.c.l.b16 %v628
        %v852 = vunpack.c.l.b16 %v629
        %v853 = vunpack.c.l.b16 %v630
        %v854 = vunpack.c.l.b16 %v631
        %v855 = vunpack.c.l.b16 %v632
        %v856 = vunpack.c.l.b16 %v633
        %v857 = vpack.c.b16 %v850, %v849
        %v858 = vpack.c.b16 %v852, %v851
        %v859 = vpack.c.b16 %v854, %v853
        %v860 = vpack.c.b16 %v856, %v855
        %865 = vmatpush.bf16.msra.mxu0 0
        %866 = vmatpush.bf16.msra.mxu0 0
        %867 = vmatpush.bf16.msra.mxu0 0
        %868 = vmatpush.bf16.msra.mxu0 0
        %869 = vmatpush.bf16.msra.mxu0 %v860
        %870 = vmatpush.bf16.msra.mxu0 %v859
        %871 = vmatpush.bf16.msra.mxu0 %v858
        %872 = vmatpush.bf16.msra.mxu0 %v857
        %873 = vmatmul.bf16.gmra.mxu0 %v715
        %v874 = vpop.f32.mrf.mxu0
        %v875 = vadd.f32 0.0, %v874
        %v876 = vpop.f32.mrf.mxu0
        %877 = vdwg.mxu0
        %v886 = vunpack.c.l.b16 %v634
        %v887 = vunpack.c.l.b16 %v635
        %v888 = vunpack.c.l.b16 %v636
        %v889 = vunpack.c.l.b16 %v637
        %v890 = vunpack.c.l.b16 %v638
        %v891 = vunpack.c.l.b16 %v639
        %v892 = vunpack.c.l.b16 %v640
        %v893 = vunpack.c.l.b16 %v641
        %v894 = vpack.c.b16 %v887, %v886
        %v895 = vpack.c.b16 %v889, %v888
        %v896 = vpack.c.b16 %v891, %v890
        %v897 = vpack.c.b16 %v893, %v892
        %902 = vmatpush.bf16.msra.mxu0 0
        %903 = vmatpush.bf16.msra.mxu0 0
        %904 = vmatpush.bf16.msra.mxu0 0
        %905 = vmatpush.bf16.msra.mxu0 0
        %906 = vmatpush.bf16.msra.mxu0 %v897
        %907 = vmatpush.bf16.msra.mxu0 %v896
        %908 = vmatpush.bf16.msra.mxu0 %v895
        %909 = vmatpush.bf16.msra.mxu0 %v894
        %910 = vmatmul.bf16.gmra.mxu0 %v715
        %v911 = vpop.f32.mrf.mxu0
        %v912 = vadd.f32 0.0, %v911
        %v913 = vpop.f32.mrf.mxu0
        %914 = vdwg.mxu0
        %v923 = vunpack.c.l.b16 %v642
        %v924 = vunpack.c.l.b16 %v643
        %v925 = vunpack.c.l.b16 %v644
        %v926 = vunpack.c.l.b16 %v645
        %v927 = vunpack.c.l.b16 %v646
        %v928 = vunpack.c.l.b16 %v647
        %v929 = vunpack.c.l.b16 %v648
        %v930 = vunpack.c.l.b16 %v649
        %v931 = vpack.c.b16 %v924, %v923
        %v932 = vpack.c.b16 %v926, %v925
        %v933 = vpack.c.b16 %v928, %v927
        %v934 = vpack.c.b16 %v930, %v929
        %939 = vmatpush.bf16.msra.mxu0 0
        %940 = vmatpush.bf16.msra.mxu0 0
        %941 = vmatpush.bf16.msra.mxu0 0
        %942 = vmatpush.bf16.msra.mxu0 0
        %943 = vmatpush.bf16.msra.mxu0 %v934
        %944 = vmatpush.bf16.msra.mxu0 %v933
        %945 = vmatpush.bf16.msra.mxu0 %v932
        %946 = vmatpush.bf16.msra.mxu0 %v931
        %947 = vmatmul.bf16.gmra.mxu0 %v715
        %v948 = vpop.f32.mrf.mxu0
        %v949 = vadd.f32 0.0, %v948
        %v950 = vpop.f32.mrf.mxu0
        %951 = vdwg.mxu0
        %v960 = vunpack.c.l.b16 %v650
        %v961 = vunpack.c.l.b16 %v651
        %v962 = vunpack.c.l.b16 %v652
        %v963 = vunpack.c.l.b16 %v653
        %v964 = vunpack.c.l.b16 %v654
        %v965 = vunpack.c.l.b16 %v655
        %v966 = vunpack.c.l.b16 %v656
        %v967 = vunpack.c.l.b16 %v657
        %v968 = vpack.c.b16 %v961, %v960
        %v969 = vpack.c.b16 %v963, %v962
        %v970 = vpack.c.b16 %v965, %v964
        %v971 = vpack.c.b16 %v967, %v966
        %976 = vmatpush.bf16.msra.mxu0 0
        %977 = vmatpush.bf16.msra.mxu0 0
        %978 = vmatpush.bf16.msra.mxu0 0
        %979 = vmatpush.bf16.msra.mxu0 0
        %980 = vmatpush.bf16.msra.mxu0 %v971
        %981 = vmatpush.bf16.msra.mxu0 %v970
        %982 = vmatpush.bf16.msra.mxu0 %v969
        %983 = vmatpush.bf16.msra.mxu0 %v968
        %984 = vmatmul.bf16.gmra.mxu0 %v715
        %v985 = vpop.f32.mrf.mxu0
        %v986 = vadd.f32 0.0, %v985
        %v987 = vpop.f32.mrf.mxu0
        %988 = vdwg.mxu0
        %v997 = vunpack.c.l.b16 %v658
        %v998 = vunpack.c.l.b16 %v659
        %v999 = vunpack.c.l.b16 %v660
        %v1000 = vunpack.c.l.b16 %v661
        %v1001 = vunpack.c.l.b16 %v662
        %v1002 = vunpack.c.l.b16 %v663
        %v1003 = vunpack.c.l.b16 %v664
        %v1004 = vunpack.c.l.b16 %v665
        %v1005 = vpack.c.b16 %v998, %v997
        %v1006 = vpack.c.b16 %v1000, %v999
        %v1007 = vpack.c.b16 %v1002, %v1001
        %v1008 = vpack.c.b16 %v1004, %v1003
        %1013 = vmatpush.bf16.msra.mxu0 0
        %1014 = vmatpush.bf16.msra.mxu0 0
        %1015 = vmatpush.bf16.msra.mxu0 0
        %1016 = vmatpush.bf16.msra.mxu0 0
        %1017 = vmatpush.bf16.msra.mxu0 %v1008
        %1018 = vmatpush.bf16.msra.mxu0 %v1007
        %1019 = vmatpush.bf16.msra.mxu0 %v1006
        %1020 = vmatpush.bf16.msra.mxu0 %v1005
        %1021 = vmatmul.bf16.gmra.mxu0 %v715
        %v1022 = vpop.f32.mrf.mxu0
        %v1023 = vadd.f32 0.0, %v1022
        %v1024 = vpop.f32.mrf.mxu0
        %1025 = vdwg.mxu0
        %v1034 = vunpack.c.l.b16 %v666
        %v1035 = vunpack.c.l.b16 %v667
        %v1036 = vunpack.c.l.b16 %v668
        %v1037 = vunpack.c.l.b16 %v669
        %v1038 = vunpack.c.l.b16 %v670
        %v1039 = vunpack.c.l.b16 %v671
        %v1040 = vunpack.c.l.b16 %v672
        %v1041 = vunpack.c.l.b16 %v673
        %v1042 = vpack.c.b16 %v1035, %v1034
        %v1043 = vpack.c.b16 %v1037, %v1036
        %v1044 = vpack.c.b16 %v1039, %v1038
        %v1045 = vpack.c.b16 %v1041, %v1040
        %1050 = vmatpush.bf16.msra.mxu0 0
        %1051 = vmatpush.bf16.msra.mxu0 0
        %1052 = vmatpush.bf16.msra.mxu0 0
        %1053 = vmatpush.bf16.msra.mxu0 0
        %1054 = vmatpush.bf16.msra.mxu0 %v1045
        %1055 = vmatpush.bf16.msra.mxu0 %v1044
        %1056 = vmatpush.bf16.msra.mxu0 %v1043
        %1057 = vmatpush.bf16.msra.mxu0 %v1042
        %1058 = vmatmul.bf16.gmra.mxu0 %v715
        %v1059 = vpop.f32.mrf.mxu0
        %v1060 = vadd.f32 0.0, %v1059
        %v1061 = vpop.f32.mrf.mxu0
        %1062 = vdwg.mxu0
        %v1071 = vunpack.c.l.b16 %v674
        %v1072 = vunpack.c.l.b16 %v675
        %v1073 = vunpack.c.l.b16 %v676
        %v1074 = vunpack.c.l.b16 %v677
        %v1075 = vunpack.c.l.b16 %v678
        %v1076 = vunpack.c.l.b16 %v679
        %v1077 = vunpack.c.l.b16 %v680
        %v1078 = vunpack.c.l.b16 %v681
        %v1079 = vpack.c.b16 %v1072, %v1071
        %v1080 = vpack.c.b16 %v1074, %v1073
        %v1081 = vpack.c.b16 %v1076, %v1075
        %v1082 = vpack.c.b16 %v1078, %v1077
        %1087 = vmatpush.bf16.msra.mxu0 0
        %1088 = vmatpush.bf16.msra.mxu0 0
        %1089 = vmatpush.bf16.msra.mxu0 0
        %1090 = vmatpush.bf16.msra.mxu0 0
        %1091 = vmatpush.bf16.msra.mxu0 %v1082
        %1092 = vmatpush.bf16.msra.mxu0 %v1081
        %1093 = vmatpush.bf16.msra.mxu0 %v1080
        %1094 = vmatpush.bf16.msra.mxu0 %v1079
        %1095 = vmatmul.bf16.gmra.mxu0 %v715
        %v1096 = vpop.f32.mrf.mxu0
        %v1097 = vadd.f32 0.0, %v1096
        %v1098 = vpop.f32.mrf.mxu0
        %1099 = vdwg.mxu0
        %v1108 = vunpack.c.l.b16 %v682
        %v1109 = vunpack.c.l.b16 %v683
        %v1110 = vunpack.c.l.b16 %v684
        %v1111 = vunpack.c.l.b16 %v685
        %v1112 = vunpack.c.l.b16 %v686
        %v1113 = vunpack.c.l.b16 %v687
        %v1114 = vunpack.c.l.b16 %v688
        %v1115 = vunpack.c.l.b16 %v689
        %v1116 = vpack.c.b16 %v1109, %v1108
        %v1117 = vpack.c.b16 %v1111, %v1110
        %v1118 = vpack.c.b16 %v1113, %v1112
        %v1119 = vpack.c.b16 %v1115, %v1114
        %1124 = vmatpush.bf16.msra.mxu0 0
        %1125 = vmatpush.bf16.msra.mxu0 0
        %1126 = vmatpush.bf16.msra.mxu0 0
        %1127 = vmatpush.bf16.msra.mxu0 0
        %1128 = vmatpush.bf16.msra.mxu0 %v1119
        %1129 = vmatpush.bf16.msra.mxu0 %v1118
        %1130 = vmatpush.bf16.msra.mxu0 %v1117
        %1131 = vmatpush.bf16.msra.mxu0 %v1116
        %1132 = vmatmul.bf16.gmra.mxu0 %v715
        %v1133 = vpop.f32.mrf.mxu0
        %v1134 = vadd.f32 0.0, %v1133
        %v1135 = vpop.f32.mrf.mxu0
        %1136 = vdwg.mxu0
        %v1137 = vpack.c.bf16 %v727, %v727
        %v1138 = vpack.c.bf16 %v764, %v764
        %v1139 = vpack.c.bf16 %v801, %v801
        %v1140 = vpack.c.bf16 %v838, %v838
        %v1141 = vpack.c.bf16 %v875, %v875
        %v1142 = vpack.c.bf16 %v912, %v912
        %v1143 = vpack.c.bf16 %v949, %v949
        %v1144 = vpack.c.bf16 %v986, %v986
        %vm1145 = vcmask 130048
        %v1147 = vsel %vm1145, %v1137, 0
        %v1150 = vsel %vm1145, %v1141, 0
        %1152 = vmatpush.bf16.xpose.msra.mxu0 0
        %1153 = vmatpush.bf16.xpose.msra.mxu0 0
        %1154 = vmatpush.bf16.xpose.msra.mxu0 0
        %1155 = vmatpush.bf16.xpose.msra.mxu0 0
        %1156 = vmatpush.bf16.xpose.msra.mxu0 0
        %1157 = vmatpush.bf16.xpose.msra.mxu0 0
        %1158 = vmatpush.bf16.xpose.msra.mxu0 0
        %1159 = vmatpush.bf16.xpose.msra.mxu0 %v1150
        %1160 = vmatmul.bf16.gmra.mxu0 %v1147
        %v1161 = vpop.f32.mrf.mxu0
        %v1162 = vadd.f32 %v536, %v1161
        %v1163 = vpop.f32.mrf.mxu0
        %1164 = vdwg.mxu0
        %v1166 = vsel %vm1145, %v1138, 0
        %v1169 = vsel %vm1145, %v1142, 0
        %1171 = vmatpush.bf16.xpose.msra.mxu0 0
        %1172 = vmatpush.bf16.xpose.msra.mxu0 0
        %1173 = vmatpush.bf16.xpose.msra.mxu0 0
        %1174 = vmatpush.bf16.xpose.msra.mxu0 0
        %1175 = vmatpush.bf16.xpose.msra.mxu0 0
        %1176 = vmatpush.bf16.xpose.msra.mxu0 0
        %1177 = vmatpush.bf16.xpose.msra.mxu0 0
        %1178 = vmatpush.bf16.xpose.msra.mxu0 %v1169
        %1179 = vmatmul.bf16.gmra.mxu0 %v1166
        %v1180 = vpop.f32.mrf.mxu0
        %v1181 = vadd.f32 %v536, %v1180
        %v1182 = vpop.f32.mrf.mxu0
        %1183 = vdwg.mxu0
        %v1185 = vsel %vm1145, %v1139, 0
        %v1188 = vsel %vm1145, %v1143, 0
        %1190 = vmatpush.bf16.xpose.msra.mxu0 0
        %1191 = vmatpush.bf16.xpose.msra.mxu0 0
        %1192 = vmatpush.bf16.xpose.msra.mxu0 0
        %1193 = vmatpush.bf16.xpose.msra.mxu0 0
        %1194 = vmatpush.bf16.xpose.msra.mxu0 0
        %1195 = vmatpush.bf16.xpose.msra.mxu0 0
        %1196 = vmatpush.bf16.xpose.msra.mxu0 0
        %1197 = vmatpush.bf16.xpose.msra.mxu0 %v1188
        %1198 = vmatmul.bf16.gmra.mxu0 %v1185
        %v1199 = vpop.f32.mrf.mxu0
        %v1200 = vadd.f32 %v536, %v1199
        %v1201 = vpop.f32.mrf.mxu0
        %1202 = vdwg.mxu0
        %v1204 = vsel %vm1145, %v1140, 0
        %v1207 = vsel %vm1145, %v1144, 0
        %1209 = vmatpush.bf16.xpose.msra.mxu0 0
        %1210 = vmatpush.bf16.xpose.msra.mxu0 0
        %1211 = vmatpush.bf16.xpose.msra.mxu0 0
        %1212 = vmatpush.bf16.xpose.msra.mxu0 0
        %1213 = vmatpush.bf16.xpose.msra.mxu0 0
        %1214 = vmatpush.bf16.xpose.msra.mxu0 0
        %1215 = vmatpush.bf16.xpose.msra.mxu0 0
        %1216 = vmatpush.bf16.xpose.msra.mxu0 %v1207
        %1217 = vmatmul.bf16.gmra.mxu0 %v1204
        %v1218 = vpop.f32.mrf.mxu0
        %v1219 = vadd.f32 %v536, %v1218
        %v1220 = vpop.f32.mrf.mxu0
        %1221 = vdwg.mxu0
        %vm1222 = vcmask 64512
        %v1223 = vsel %vm1222, %v1162, -inf
        %1224 = vmax.xlane.f32.xlu0 %v1223
        %v1225 = vpop.xlane.xlu0 %1224
        %v1226 = vsel %vm1222, %v1181, -inf
        %1227 = vmax.xlane.f32.xlu0 %v1226
        %v1228 = vpop.xlane.xlu0 %1227
        %v1229 = vsel %vm1222, %v1200, -inf
        %1230 = vmax.xlane.f32.xlu0 %v1229
        %v1231 = vpop.xlane.xlu0 %1230
        %v1232 = vsel %vm1222, %v1219, -inf
        %1233 = vmax.xlane.f32.xlu0 %v1232
        %v1234 = vpop.xlane.xlu0 %1233
        %v1235 = vsub.f32 %v1162, %v1225
        %v1236 = vsub.f32 %v1181, %v1228
        %v1237 = vsub.f32 %v1200, %v1231
        %v1238 = vsub.f32 %v1219, %v1234
        %v1239 = vmul.f32 %v1235, 1.442695
        %v1240 = vpow.pop %v1239
        %v1241 = vmul.f32 %v1236, 1.442695
        %v1242 = vpow.pop %v1241
        %v1243 = vmul.f32 %v1237, 1.442695
        %v1244 = vpow.pop %v1243
        %v1245 = vmul.f32 %v1238, 1.442695
        %v1246 = vpow.pop %v1245
        %v1247 = vsel %vm1222, %v1240, 0.0
        %1248 = vadd.xlane.f32.xlu0 %v1247
        %v1249 = vpop.xlane.xlu0 %1248
        %v1250 = vsel %vm1222, %v1242, 0.0
        %1251 = vadd.xlane.f32.xlu0 %v1250
        %v1252 = vpop.xlane.xlu0 %1251
        %v1253 = vsel %vm1222, %v1244, 0.0
        %1254 = vadd.xlane.f32.xlu0 %v1253
        %v1255 = vpop.xlane.xlu0 %1254
        %v1256 = vsel %vm1222, %v1246, 0.0
        %1257 = vadd.xlane.f32.xlu0 %v1256
        %v1258 = vpop.xlane.xlu0 %1257
        %v1259 = vrcp.pop %v1249
        %v1260 = vrcp.pop %v1252
        %v1261 = vrcp.pop %v1255
        %v1262 = vrcp.pop %v1258
        %v1263 = vmul.f32 %v1240, %v1259
        %v1264 = vmul.f32 %v1242, %v1260
        %v1265 = vmul.f32 %v1244, %v1261
        %v1266 = vmul.f32 %v1246, %v1262
        %v1267 = vpack.c.bf16 %v1263, %v1263
        %v1268 = vpack.c.bf16 %v1264, %v1264
        %v1269 = vpack.c.bf16 %v1265, %v1265
        %v1270 = vpack.c.bf16 %v1266, %v1266
        %v1271 = vpack.c.bf16 %v1023, %v1023
        %v1272 = vpack.c.bf16 %v1060, %v1060
        %v1273 = vpack.c.bf16 %v1097, %v1097
        %v1274 = vpack.c.bf16 %v1134, %v1134
        %v1276 = vsel %vm1222, %v1267, 0
        %vm1278 = vcmask 1043456
        %v1280 = vsel %vm1278, %v1271, 0
        %1282 = vmatpush.bf16.msra.mxu0 0
        %1283 = vmatpush.bf16.msra.mxu0 0
        %1284 = vmatpush.bf16.msra.mxu0 0
        %1285 = vmatpush.bf16.msra.mxu0 0
        %1286 = vmatpush.bf16.msra.mxu0 0
        %1287 = vmatpush.bf16.msra.mxu0 0
        %1288 = vmatpush.bf16.msra.mxu0 0
        %1289 = vmatpush.bf16.msra.mxu0 %v1280
        %1290 = vmatmul.bf16.gmra.mxu0 %v1276
        %v1291 = vpop.f32.mrf.mxu0
        %v1292 = vadd.f32 0.0, %v1291
        %v1293 = vpop.f32.mrf.mxu0
        %1294 = vdwg.mxu0
        %v1296 = vsel %vm1222, %v1268, 0
        %v1299 = vsel %vm1278, %v1272, 0
        %1301 = vmatpush.bf16.msra.mxu0 0
        %1302 = vmatpush.bf16.msra.mxu0 0
        %1303 = vmatpush.bf16.msra.mxu0 0
        %1304 = vmatpush.bf16.msra.mxu0 0
        %1305 = vmatpush.bf16.msra.mxu0 0
        %1306 = vmatpush.bf16.msra.mxu0 0
        %1307 = vmatpush.bf16.msra.mxu0 0
        %1308 = vmatpush.bf16.msra.mxu0 %v1299
        %1309 = vmatmul.bf16.gmra.mxu0 %v1296
        %v1310 = vpop.f32.mrf.mxu0
        %v1311 = vadd.f32 0.0, %v1310
        %v1312 = vpop.f32.mrf.mxu0
        %1313 = vdwg.mxu0
        %v1315 = vsel %vm1222, %v1269, 0
        %v1318 = vsel %vm1278, %v1273, 0
        %1320 = vmatpush.bf16.msra.mxu0 0
        %1321 = vmatpush.bf16.msra.mxu0 0
        %1322 = vmatpush.bf16.msra.mxu0 0
        %1323 = vmatpush.bf16.msra.mxu0 0
        %1324 = vmatpush.bf16.msra.mxu0 0
        %1325 = vmatpush.bf16.msra.mxu0 0
        %1326 = vmatpush.bf16.msra.mxu0 0
        %1327 = vmatpush.bf16.msra.mxu0 %v1318
        %1328 = vmatmul.bf16.gmra.mxu0 %v1315
        %v1329 = vpop.f32.mrf.mxu0
        %v1330 = vadd.f32 0.0, %v1329
        %v1331 = vpop.f32.mrf.mxu0
        %1332 = vdwg.mxu0
        %v1334 = vsel %vm1222, %v1270, 0
        %v1337 = vsel %vm1278, %v1274, 0
        %1339 = vmatpush.bf16.msra.mxu0 0
        %1340 = vmatpush.bf16.msra.mxu0 0
        %1341 = vmatpush.bf16.msra.mxu0 0
        %1342 = vmatpush.bf16.msra.mxu0 0
        %1343 = vmatpush.bf16.msra.mxu0 0
        %1344 = vmatpush.bf16.msra.mxu0 0
        %1345 = vmatpush.bf16.msra.mxu0 0
        %1346 = vmatpush.bf16.msra.mxu0 %v1337
        %1347 = vmatmul.bf16.gmra.mxu0 %v1334
        %v1348 = vpop.f32.mrf.mxu0
        %v1349 = vadd.f32 0.0, %v1348
        %v1350 = vpop.f32.mrf.mxu0
        %1351 = vdwg.mxu0
        %v1352 = vpack.c.bf16 %v1292, %v1292
        %v1353 = vpack.c.bf16 %v1311, %v1311
        %v1354 = vpack.c.bf16 %v1330, %v1330
        %v1355 = vpack.c.bf16 %v1349, %v1349
        %v1356 = vld [vmem:[%s5] sm:$0xf]
        %v1357 = vld [vmem:[%s5 + $0x4] sm:$0xf]
        %v1358 = vld [vmem:[%s5 + $0x8] sm:$0xf]
        %v1359 = vld [vmem:[%s5 + $0xc] sm:$0xf]
        %v1360 = vld [vmem:[%s5 + $0x10] sm:$0xf]
        %v1361 = vld [vmem:[%s5 + $0x14] sm:$0xf]
        %v1362 = vld [vmem:[%s5 + $0x18] sm:$0xf]
        %v1363 = vld [vmem:[%s5 + $0x1c] sm:$0xf]
        %v1366 = vunpack.c.l.b16 %v1356
        %v1367 = vunpack.c.l.b16 %v1357
        %v1368 = vpack.c.b16 %v1367, %v1366
        %v1371 = vsel %vm1145, %v1352, 0
        %1373 = vmatpush.bf16.msra.mxu0 0
        %1374 = vmatpush.bf16.msra.mxu0 0
        %1375 = vmatpush.bf16.msra.mxu0 0
        %1376 = vmatpush.bf16.msra.mxu0 0
        %1377 = vmatpush.bf16.msra.mxu0 0
        %1378 = vmatpush.bf16.msra.mxu0 0
        %1379 = vmatpush.bf16.msra.mxu0 0
        %1380 = vmatpush.bf16.msra.mxu0 %v1368
        %1381 = vmatmul.bf16.gmra.mxu0 %v1371
        %v1382 = vpop.f32.mrf.mxu0
        %v1383 = vadd.f32 0.0, %v1382
        %v1384 = vpop.f32.mrf.mxu0
        %1385 = vdwg.mxu0
        %v1388 = vunpack.c.l.b16 %v1358
        %v1389 = vunpack.c.l.b16 %v1359
        %v1390 = vpack.c.b16 %v1389, %v1388
        %v1393 = vsel %vm1145, %v1353, 0
        %1395 = vmatpush.bf16.msra.mxu0 0
        %1396 = vmatpush.bf16.msra.mxu0 0
        %1397 = vmatpush.bf16.msra.mxu0 0
        %1398 = vmatpush.bf16.msra.mxu0 0
        %1399 = vmatpush.bf16.msra.mxu0 0
        %1400 = vmatpush.bf16.msra.mxu0 0
        %1401 = vmatpush.bf16.msra.mxu0 0
        %1402 = vmatpush.bf16.msra.mxu0 %v1390
        %1403 = vmatmul.bf16.gmra.mxu0 %v1393
        %v1404 = vpop.f32.mrf.mxu0
        %v1405 = vadd.f32 0.0, %v1404
        %v1406 = vpop.f32.mrf.mxu0
        %1407 = vdwg.mxu0
        %v1410 = vunpack.c.l.b16 %v1360
        %v1411 = vunpack.c.l.b16 %v1361
        %v1412 = vpack.c.b16 %v1411, %v1410
        %v1415 = vsel %vm1145, %v1354, 0
        %1417 = vmatpush.bf16.msra.mxu0 0
        %1418 = vmatpush.bf16.msra.mxu0 0
        %1419 = vmatpush.bf16.msra.mxu0 0
        %1420 = vmatpush.bf16.msra.mxu0 0
        %1421 = vmatpush.bf16.msra.mxu0 0
        %1422 = vmatpush.bf16.msra.mxu0 0
        %1423 = vmatpush.bf16.msra.mxu0 0
        %1424 = vmatpush.bf16.msra.mxu0 %v1412
        %1425 = vmatmul.bf16.gmra.mxu0 %v1415
        %v1426 = vpop.f32.mrf.mxu0
        %v1427 = vadd.f32 0.0, %v1426
        %v1428 = vpop.f32.mrf.mxu0
        %1429 = vdwg.mxu0
        %v1432 = vunpack.c.l.b16 %v1362
        %v1433 = vunpack.c.l.b16 %v1363
        %v1434 = vpack.c.b16 %v1433, %v1432
        %v1437 = vsel %vm1145, %v1355, 0
        %1439 = vmatpush.bf16.msra.mxu0 0
        %1440 = vmatpush.bf16.msra.mxu0 0
        %1441 = vmatpush.bf16.msra.mxu0 0
        %1442 = vmatpush.bf16.msra.mxu0 0
        %1443 = vmatpush.bf16.msra.mxu0 0
        %1444 = vmatpush.bf16.msra.mxu0 0
        %1445 = vmatpush.bf16.msra.mxu0 0
        %1446 = vmatpush.bf16.msra.mxu0 %v1434
        %1447 = vmatmul.bf16.gmra.mxu0 %v1437
        %v1448 = vpop.f32.mrf.mxu0
        %v1449 = vadd.f32 0.0, %v1448
        %v1450 = vpop.f32.mrf.mxu0
        %1451 = vdwg.mxu0
        %v1452 = vsel %vm539, %v1383, 0.0
        %v1453 = vsel %vm539, %v1405, 0.0
        %v1454 = vadd.f32 %v1452, %v1453
        %v1455 = vsel %vm539, %v1427, 0.0
        %v1456 = vadd.f32 %v1454, %v1455
        %v1457 = vsel %vm539, %v1449, 0.0
        %v1458 = vadd.f32 %v1456, %v1457
        %v1459 = vld [vmem:[%s6] sm:$0x1]
        %v1461 = vperm.slane %v1459, 0
        %v1463 = vadd.f32 %v1458, %v1461
        %v1464 = vadd.f32 %v535, %v1463
        %v1465 = vld [vmem:[%s7] sm:$0x1]
        %v1466 = vld [vmem:[%s8] sm:$0x1]
        %v1467 = vsel %vm539, %v1464, 0.0
        %1468 = vadd.xlane.f32.xlu0 %v1467
        %v1469 = vpop.xlane.xlu0 %1468
        %v1470 = vmul.f32 %v1469, %v549
        %v1471 = vsub.f32 %v1464, %v1470
        %v1472 = vmul.f32 %v1471, %v1471
        %v1473 = vsel %vm539, %v1472, 0.0
        %1474 = vadd.xlane.f32.xlu0 %v1473
        %v1475 = vpop.xlane.xlu0 %1474
        %v1476 = vmul.f32 %v1475, %v549
        %v1477 = vrsqrt.pop %v1476
        %v1478 = vmul.f32 %v1477, %v1476
        %v1479 = vmul.f32 %v1478, %v1477
        %v1480 = vmul.f32 0.5, %v1479
        %v1481 = vsub.f32 1.5, %v1480
        %v1482 = vmul.f32 %v1477, %v1481
        %v1483 = vmul.f32 %v1476, %v1482
        %vm1484 = vcmp.eq.f32.partialorder %v1476, inf
        %v1485 = vsel %vm1484, %v1476, %v1483
        %vm1486 = vcmp.eq.f32.partialorder %v1476, 0.0
        %v1487 = vand.u32 %v1476, 2147483648
        %v1488 = vsel %vm1486, %v1487, %v1485
        %v1489 = vadd.f32 %v1488, 1e-05
        %v1490 = vrcp.pop %v1489
        %v1491 = vmul.f32 %v1489, %v1490
        %v1492 = vsub.f32 1.0, %v1491
        %v1493 = vmul.f32 %v1490, %v1492
        %v1494 = vadd.f32 %v1490, %v1493
        %vm1495 = vweird.f32 %v1489
        %vm1496 = vweird.f32 %v1490
        %vm1497 = vmor %vm1495, %vm1496
        %v1498 = vsel %vm1497, %v1490, %v1494
        %v1499 = vand.u32 2147483647, %v1489
        %vm1500 = vcmp.eq.f32.partialorder %v1499, 8.507059e+37
        %v1501 = vand.u32 %v1489, 2147483648
        %v1502 = vor.u32 1.1754944e-38, %v1501
        %v1503 = vsel %vm1500, %v1502, %v1498
        %v1504 = vmul.f32 %v1471, %v1503
        %v1506 = vperm.slane %v1465, 0
        %v1508 = vmul.f32 %v1504, %v1506
        %v1510 = vperm.slane %v1466, 0
        %v1512 = vadd.f32 %v1508, %v1510
        %v1513 = vpack.c.bf16 %v1512, %v1512
        %v1514 = vld [vmem:[%s9] sm:$0xf]
        %v1515 = vld [vmem:[%s9 + $0x4] sm:$0xf]
        %v1516 = vld [vmem:[%s9 + $0x8] sm:$0xf]
        %v1517 = vld [vmem:[%s9 + $0xc] sm:$0xf]
        %v1518 = vld [vmem:[%s9 + $0x10] sm:$0xf]
        %v1519 = vld [vmem:[%s9 + $0x14] sm:$0xf]
        %v1520 = vld [vmem:[%s9 + $0x18] sm:$0xf]
        %v1521 = vld [vmem:[%s9 + $0x1c] sm:$0xf]
        %v1522 = vld [vmem:[%s10] sm:$0x1]
        %v1524 = vperm.slane %v1522, 0
        %v1534 = vunpack.c.l.b16 %v1514
        %v1535 = vunpack.c.l.b16 %v1515
        %v1536 = vunpack.c.l.b16 %v1516
        %v1537 = vunpack.c.l.b16 %v1517
        %v1538 = vunpack.c.l.b16 %v1518
        %v1539 = vunpack.c.l.b16 %v1519
        %v1540 = vunpack.c.l.b16 %v1520
        %v1541 = vunpack.c.l.b16 %v1521
        %v1542 = vpack.c.b16 %v1535, %v1534
        %v1543 = vpack.c.b16 %v1537, %v1536
        %v1544 = vpack.c.b16 %v1539, %v1538
        %v1545 = vpack.c.b16 %v1541, %v1540
        %v1551 = vsel %vm539, %v1513, 0
        %1553 = vmatpush.bf16.msra.mxu0 0
        %1554 = vmatpush.bf16.msra.mxu0 0
        %1555 = vmatpush.bf16.msra.mxu0 0
        %1556 = vmatpush.bf16.msra.mxu0 0
        %1557 = vmatpush.bf16.msra.mxu0 %v1545
        %1558 = vmatpush.bf16.msra.mxu0 %v1544
        %1559 = vmatpush.bf16.msra.mxu0 %v1543
        %1560 = vmatpush.bf16.msra.mxu0 %v1542
        %1561 = vmatmul.bf16.gmra.mxu0 %v1551
        %v1562 = vpop.f32.mrf.mxu0
        %v1563 = vadd.f32 %v1524, %v1562
        %v1564 = vpop.f32.mrf.mxu0
        %1565 = vdwg.mxu0
        %v1566 = vmul.f32 %v1563, 0.5
        %v1567 = vmul.f32 %v1563, %v1563
        %v1568 = vmul.f32 %v1563, %v1567
        %v1569 = vmul.f32 %v1568, 0.044715
        %v1570 = vadd.f32 %v1563, %v1569
        %v1571 = vmul.f32 %v1570, 0.797885
        %v1572 = vtanh.pop %v1571
        %v1573 = vadd.f32 %v1572, 1.0
        %v1574 = vmul.f32 %v1566, %v1573
        %v1575 = vpack.c.bf16 %v1574, %v1574
        %v1576 = vld [vmem:[%s11] sm:$0xf]
        %v1577 = vld [vmem:[%s11 + $0x4] sm:$0xf]
        %v1578 = vld [vmem:[%s11 + $0x8] sm:$0xf]
        %v1579 = vld [vmem:[%s11 + $0xc] sm:$0xf]
        %v1580 = vld [vmem:[%s11 + $0x10] sm:$0xf]
        %v1581 = vld [vmem:[%s11 + $0x14] sm:$0xf]
        %v1582 = vld [vmem:[%s11 + $0x18] sm:$0xf]
        %v1583 = vld [vmem:[%s11 + $0x1c] sm:$0xf]
        %v1584 = vld [vmem:[%s11 + $0x20] sm:$0xf]
        %v1585 = vld [vmem:[%s11 + $0x24] sm:$0xf]
        %v1586 = vld [vmem:[%s11 + $0x28] sm:$0xf]
        %v1587 = vld [vmem:[%s11 + $0x2c] sm:$0xf]
        %v1588 = vld [vmem:[%s11 + $0x30] sm:$0xf]
        %v1589 = vld [vmem:[%s11 + $0x34] sm:$0xf]
        %v1590 = vld [vmem:[%s11 + $0x38] sm:$0xf]
        %v1591 = vld [vmem:[%s11 + $0x3c] sm:$0xf]
        %v1592 = vld [vmem:[%s12] sm:$0x1]
        %v1594 = vperm.slane %v1592, 0
        %v1612 = vunpack.c.l.b16 %v1576
        %v1613 = vunpack.c.l.b16 %v1577
        %v1614 = vunpack.c.l.b16 %v1578
        %v1615 = vunpack.c.l.b16 %v1579
        %v1616 = vunpack.c.l.b16 %v1580
        %v1617 = vunpack.c.l.b16 %v1581
        %v1618 = vunpack.c.l.b16 %v1582
        %v1619 = vunpack.c.l.b16 %v1583
        %v1620 = vunpack.c.l.b16 %v1584
        %v1621 = vunpack.c.l.b16 %v1585
        %v1622 = vunpack.c.l.b16 %v1586
        %v1623 = vunpack.c.l.b16 %v1587
        %v1624 = vunpack.c.l.b16 %v1588
        %v1625 = vunpack.c.l.b16 %v1589
        %v1626 = vunpack.c.l.b16 %v1590
        %v1627 = vunpack.c.l.b16 %v1591
        %v1628 = vpack.c.b16 %v1613, %v1612
        %v1629 = vpack.c.b16 %v1615, %v1614
        %v1630 = vpack.c.b16 %v1617, %v1616
        %v1631 = vpack.c.b16 %v1619, %v1618
        %v1632 = vpack.c.b16 %v1621, %v1620
        %v1633 = vpack.c.b16 %v1623, %v1622
        %v1634 = vpack.c.b16 %v1625, %v1624
        %v1635 = vpack.c.b16 %v1627, %v1626
        %1644 = vmatpush.bf16.msra.mxu0 %v1635
        %1645 = vmatpush.bf16.msra.mxu0 %v1634
        %1646 = vmatpush.bf16.msra.mxu0 %v1633
        %1647 = vmatpush.bf16.msra.mxu0 %v1632
        %1648 = vmatpush.bf16.msra.mxu0 %v1631
        %1649 = vmatpush.bf16.msra.mxu0 %v1630
        %1650 = vmatpush.bf16.msra.mxu0 %v1629
        %1651 = vmatpush.bf16.msra.mxu0 %v1628
        %1652 = vmatmul.bf16.gmra.mxu0 %v1575
        %v1653 = vpop.f32.mrf.mxu0
        %v1654 = vadd.f32 %v1594, %v1653
        %v1655 = vpop.f32.mrf.mxu0
        %1656 = vdwg.mxu0
        %v1657 = vadd.f32 %v1464, %v1654
        %s1658 = scalar_lea.vmem %s2, 1
        %v1659 = vld [vmem:[%s1658] sm:$0x1]
        %s1660 = scalar_lea.vmem %s3, 1
        %v1661 = vld [vmem:[%s1660] sm:$0x1]
        %v1662 = vsel %vm539, %v1657, 0.0
        %1663 = vadd.xlane.f32.xlu0 %v1662
        %v1664 = vpop.xlane.xlu0 %1663
        %v1665 = vmul.f32 %v1664, %v549
        %v1666 = vsub.f32 %v1657, %v1665
        %v1667 = vmul.f32 %v1666, %v1666
        %v1668 = vsel %vm539, %v1667, 0.0
        %1669 = vadd.xlane.f32.xlu0 %v1668
        %v1670 = vpop.xlane.xlu0 %1669
        %v1671 = vmul.f32 %v1670, %v549
        %v1672 = vrsqrt.pop %v1671
        %v1673 = vmul.f32 %v1672, %v1671
        %v1674 = vmul.f32 %v1673, %v1672
        %v1675 = vmul.f32 0.5, %v1674
        %v1676 = vsub.f32 1.5, %v1675
        %v1677 = vmul.f32 %v1672, %v1676
        %v1678 = vmul.f32 %v1671, %v1677
        %vm1679 = vcmp.eq.f32.partialorder %v1671, inf
        %v1680 = vsel %vm1679, %v1671, %v1678
        %vm1681 = vcmp.eq.f32.partialorder %v1671, 0.0
        %v1682 = vand.u32 %v1671, 2147483648
        %v1683 = vsel %vm1681, %v1682, %v1680
        %v1684 = vadd.f32 %v1683, 1e-05
        %v1685 = vrcp.pop %v1684
        %v1686 = vmul.f32 %v1684, %v1685
        %v1687 = vsub.f32 1.0, %v1686
        %v1688 = vmul.f32 %v1685, %v1687
        %v1689 = vadd.f32 %v1685, %v1688
        %vm1690 = vweird.f32 %v1684
        %vm1691 = vweird.f32 %v1685
        %vm1692 = vmor %vm1690, %vm1691
        %v1693 = vsel %vm1692, %v1685, %v1689
        %v1694 = vand.u32 2147483647, %v1684
        %vm1695 = vcmp.eq.f32.partialorder %v1694, 8.507059e+37
        %v1696 = vand.u32 %v1684, 2147483648
        %v1697 = vor.u32 1.1754944e-38, %v1696
        %v1698 = vsel %vm1695, %v1697, %v1693
        %v1699 = vmul.f32 %v1666, %v1698
        %v1701 = vperm.slane %v1659, 0
        %v1703 = vmul.f32 %v1699, %v1701
        %v1705 = vperm.slane %v1661, 0
        %v1707 = vadd.f32 %v1703, %v1705
        %v1708 = vpack.c.bf16 %v1707, %v1707
        %s1709 = scalar_lea.vmem %s4, 384
        %v1710 = vld [vmem:[%s1709] sm:$0xf]
        %v1711 = vld [vmem:[%s1709 + $0x4] sm:$0xf]
        %v1712 = vld [vmem:[%s1709 + $0x8] sm:$0xf]
        %v1713 = vld [vmem:[%s1709 + $0xc] sm:$0xf]
        %v1714 = vld [vmem:[%s1709 + $0x10] sm:$0xf]
        %v1715 = vld [vmem:[%s1709 + $0x14] sm:$0xf]
        %v1716 = vld [vmem:[%s1709 + $0x18] sm:$0xf]
        %v1717 = vld [vmem:[%s1709 + $0x1c] sm:$0xf]
        %v1718 = vld [vmem:[%s1709 + $0x20] sm:$0xf]
        %v1719 = vld [vmem:[%s1709 + $0x24] sm:$0xf]
        %v1720 = vld [vmem:[%s1709 + $0x28] sm:$0xf]
        %v1721 = vld [vmem:[%s1709 + $0x2c] sm:$0xf]
        %v1722 = vld [vmem:[%s1709 + $0x30] sm:$0xf]
        %v1723 = vld [vmem:[%s1709 + $0x34] sm:$0xf]
        %v1724 = vld [vmem:[%s1709 + $0x38] sm:$0xf]
        %v1725 = vld [vmem:[%s1709 + $0x3c] sm:$0xf]
        %v1726 = vld [vmem:[%s1709 + $0x40] sm:$0xf]
        %v1727 = vld [vmem:[%s1709 + $0x44] sm:$0xf]
        %v1728 = vld [vmem:[%s1709 + $0x48] sm:$0xf]
        %v1729 = vld [vmem:[%s1709 + $0x4c] sm:$0xf]
        %v1730 = vld [vmem:[%s1709 + $0x50] sm:$0xf]
        %v1731 = vld [vmem:[%s1709 + $0x54] sm:$0xf]
        %v1732 = vld [vmem:[%s1709 + $0x58] sm:$0xf]
        %v1733 = vld [vmem:[%s1709 + $0x5c] sm:$0xf]
        %v1734 = vld [vmem:[%s1709 + $0x60] sm:$0xf]
        %v1735 = vld [vmem:[%s1709 + $0x64] sm:$0xf]
        %v1736 = vld [vmem:[%s1709 + $0x68] sm:$0xf]
        %v1737 = vld [vmem:[%s1709 + $0x6c] sm:$0xf]
        %v1738 = vld [vmem:[%s1709 + $0x70] sm:$0xf]
        %v1739 = vld [vmem:[%s1709 + $0x74] sm:$0xf]
        %v1740 = vld [vmem:[%s1709 + $0x78] sm:$0xf]
        %v1741 = vld [vmem:[%s1709 + $0x7c] sm:$0xf]
        %v1742 = vld [vmem:[%s1709 + $0x80] sm:$0xf]
        %v1743 = vld [vmem:[%s1709 + $0x84] sm:$0xf]
        %v1744 = vld [vmem:[%s1709 + $0x88] sm:$0xf]
        %v1745 = vld [vmem:[%s1709 + $0x8c] sm:$0xf]
        %v1746 = vld [vmem:[%s1709 + $0x90] sm:$0xf]
        %v1747 = vld [vmem:[%s1709 + $0x94] sm:$0xf]
        %v1748 = vld [vmem:[%s1709 + $0x98] sm:$0xf]
        %v1749 = vld [vmem:[%s1709 + $0x9c] sm:$0xf]
        %v1750 = vld [vmem:[%s1709 + $0xa0] sm:$0xf]
        %v1751 = vld [vmem:[%s1709 + $0xa4] sm:$0xf]
        %v1752 = vld [vmem:[%s1709 + $0xa8] sm:$0xf]
        %v1753 = vld [vmem:[%s1709 + $0xac] sm:$0xf]
        %v1754 = vld [vmem:[%s1709 + $0xb0] sm:$0xf]
        %v1755 = vld [vmem:[%s1709 + $0xb4] sm:$0xf]
        %v1756 = vld [vmem:[%s1709 + $0xb8] sm:$0xf]
        %v1757 = vld [vmem:[%s1709 + $0xbc] sm:$0xf]
        %v1758 = vld [vmem:[%s1709 + $0xc0] sm:$0xf]
        %v1759 = vld [vmem:[%s1709 + $0xc4] sm:$0xf]
        %v1760 = vld [vmem:[%s1709 + $0xc8] sm:$0xf]
        %v1761 = vld [vmem:[%s1709 + $0xcc] sm:$0xf]
        %v1762 = vld [vmem:[%s1709 + $0xd0] sm:$0xf]
        %v1763 = vld [vmem:[%s1709 + $0xd4] sm:$0xf]
        %v1764 = vld [vmem:[%s1709 + $0xd8] sm:$0xf]
        %v1765 = vld [vmem:[%s1709 + $0xdc] sm:$0xf]
        %v1766 = vld [vmem:[%s1709 + $0xe0] sm:$0xf]
        %v1767 = vld [vmem:[%s1709 + $0xe4] sm:$0xf]
        %v1768 = vld [vmem:[%s1709 + $0xe8] sm:$0xf]
        %v1769 = vld [vmem:[%s1709 + $0xec] sm:$0xf]
        %v1770 = vld [vmem:[%s1709 + $0xf0] sm:$0xf]
        %v1771 = vld [vmem:[%s1709 + $0xf4] sm:$0xf]
        %v1772 = vld [vmem:[%s1709 + $0xf8] sm:$0xf]
        %v1773 = vld [vmem:[%s1709 + $0xfc] sm:$0xf]
        %v1774 = vld [vmem:[%s1709 + $0x100] sm:$0xf]
        %v1775 = vld [vmem:[%s1709 + $0x104] sm:$0xf]
        %v1776 = vld [vmem:[%s1709 + $0x108] sm:$0xf]
        %v1777 = vld [vmem:[%s1709 + $0x10c] sm:$0xf]
        %v1778 = vld [vmem:[%s1709 + $0x110] sm:$0xf]
        %v1779 = vld [vmem:[%s1709 + $0x114] sm:$0xf]
        %v1780 = vld [vmem:[%s1709 + $0x118] sm:$0xf]
        %v1781 = vld [vmem:[%s1709 + $0x11c] sm:$0xf]
        %v1782 = vld [vmem:[%s1709 + $0x120] sm:$0xf]
        %v1783 = vld [vmem:[%s1709 + $0x124] sm:$0xf]
        %v1784 = vld [vmem:[%s1709 + $0x128] sm:$0xf]
        %v1785 = vld [vmem:[%s1709 + $0x12c] sm:$0xf]
        %v1786 = vld [vmem:[%s1709 + $0x130] sm:$0xf]
        %v1787 = vld [vmem:[%s1709 + $0x134] sm:$0xf]
        %v1788 = vld [vmem:[%s1709 + $0x138] sm:$0xf]
        %v1789 = vld [vmem:[%s1709 + $0x13c] sm:$0xf]
        %v1790 = vld [vmem:[%s1709 + $0x140] sm:$0xf]
        %v1791 = vld [vmem:[%s1709 + $0x144] sm:$0xf]
        %v1792 = vld [vmem:[%s1709 + $0x148] sm:$0xf]
        %v1793 = vld [vmem:[%s1709 + $0x14c] sm:$0xf]
        %v1794 = vld [vmem:[%s1709 + $0x150] sm:$0xf]
        %v1795 = vld [vmem:[%s1709 + $0x154] sm:$0xf]
        %v1796 = vld [vmem:[%s1709 + $0x158] sm:$0xf]
        %v1797 = vld [vmem:[%s1709 + $0x15c] sm:$0xf]
        %v1798 = vld [vmem:[%s1709 + $0x160] sm:$0xf]
        %v1799 = vld [vmem:[%s1709 + $0x164] sm:$0xf]
        %v1800 = vld [vmem:[%s1709 + $0x168] sm:$0xf]
        %v1801 = vld [vmem:[%s1709 + $0x16c] sm:$0xf]
        %v1802 = vld [vmem:[%s1709 + $0x170] sm:$0xf]
        %v1803 = vld [vmem:[%s1709 + $0x174] sm:$0xf]
        %v1804 = vld [vmem:[%s1709 + $0x178] sm:$0xf]
        %v1805 = vld [vmem:[%s1709 + $0x17c] sm:$0xf]
        %v1814 = vunpack.c.l.b16 %v1710
        %v1815 = vunpack.c.l.b16 %v1711
        %v1816 = vunpack.c.l.b16 %v1712
        %v1817 = vunpack.c.l.b16 %v1713
        %v1818 = vunpack.c.l.b16 %v1714
        %v1819 = vunpack.c.l.b16 %v1715
        %v1820 = vunpack.c.l.b16 %v1716
        %v1821 = vunpack.c.l.b16 %v1717
        %v1822 = vpack.c.b16 %v1815, %v1814
        %v1823 = vpack.c.b16 %v1817, %v1816
        %v1824 = vpack.c.b16 %v1819, %v1818
        %v1825 = vpack.c.b16 %v1821, %v1820
        %v1831 = vsel %vm539, %v1708, 0
        %1833 = vmatpush.bf16.msra.mxu0 0
        %1834 = vmatpush.bf16.msra.mxu0 0
        %1835 = vmatpush.bf16.msra.mxu0 0
        %1836 = vmatpush.bf16.msra.mxu0 0
        %1837 = vmatpush.bf16.msra.mxu0 %v1825
        %1838 = vmatpush.bf16.msra.mxu0 %v1824
        %1839 = vmatpush.bf16.msra.mxu0 %v1823
        %1840 = vmatpush.bf16.msra.mxu0 %v1822
        %1841 = vmatmul.bf16.gmra.mxu0 %v1831
        %v1842 = vpop.f32.mrf.mxu0
        %v1843 = vadd.f32 0.0, %v1842
        %v1844 = vpop.f32.mrf.mxu0
        %1845 = vdwg.mxu0
        %v1854 = vunpack.c.l.b16 %v1718
        %v1855 = vunpack.c.l.b16 %v1719
        %v1856 = vunpack.c.l.b16 %v1720
        %v1857 = vunpack.c.l.b16 %v1721
        %v1858 = vunpack.c.l.b16 %v1722
        %v1859 = vunpack.c.l.b16 %v1723
        %v1860 = vunpack.c.l.b16 %v1724
        %v1861 = vunpack.c.l.b16 %v1725
        %v1862 = vpack.c.b16 %v1855, %v1854
        %v1863 = vpack.c.b16 %v1857, %v1856
        %v1864 = vpack.c.b16 %v1859, %v1858
        %v1865 = vpack.c.b16 %v1861, %v1860
        %1870 = vmatpush.bf16.msra.mxu0 0
        %1871 = vmatpush.bf16.msra.mxu0 0
        %1872 = vmatpush.bf16.msra.mxu0 0
        %1873 = vmatpush.bf16.msra.mxu0 0
        %1874 = vmatpush.bf16.msra.mxu0 %v1865
        %1875 = vmatpush.bf16.msra.mxu0 %v1864
        %1876 = vmatpush.bf16.msra.mxu0 %v1863
        %1877 = vmatpush.bf16.msra.mxu0 %v1862
        %1878 = vmatmul.bf16.gmra.mxu0 %v1831
        %v1879 = vpop.f32.mrf.mxu0
        %v1880 = vadd.f32 0.0, %v1879
        %v1881 = vpop.f32.mrf.mxu0
        %1882 = vdwg.mxu0
        %v1891 = vunpack.c.l.b16 %v1726
        %v1892 = vunpack.c.l.b16 %v1727
        %v1893 = vunpack.c.l.b16 %v1728
        %v1894 = vunpack.c.l.b16 %v1729
        %v1895 = vunpack.c.l.b16 %v1730
        %v1896 = vunpack.c.l.b16 %v1731
        %v1897 = vunpack.c.l.b16 %v1732
        %v1898 = vunpack.c.l.b16 %v1733
        %v1899 = vpack.c.b16 %v1892, %v1891
        %v1900 = vpack.c.b16 %v1894, %v1893
        %v1901 = vpack.c.b16 %v1896, %v1895
        %v1902 = vpack.c.b16 %v1898, %v1897
        %1907 = vmatpush.bf16.msra.mxu0 0
        %1908 = vmatpush.bf16.msra.mxu0 0
        %1909 = vmatpush.bf16.msra.mxu0 0
        %1910 = vmatpush.bf16.msra.mxu0 0
        %1911 = vmatpush.bf16.msra.mxu0 %v1902
        %1912 = vmatpush.bf16.msra.mxu0 %v1901
        %1913 = vmatpush.bf16.msra.mxu0 %v1900
        %1914 = vmatpush.bf16.msra.mxu0 %v1899
        %1915 = vmatmul.bf16.gmra.mxu0 %v1831
        %v1916 = vpop.f32.mrf.mxu0
        %v1917 = vadd.f32 0.0, %v1916
        %v1918 = vpop.f32.mrf.mxu0
        %1919 = vdwg.mxu0
        %v1928 = vunpack.c.l.b16 %v1734
        %v1929 = vunpack.c.l.b16 %v1735
        %v1930 = vunpack.c.l.b16 %v1736
        %v1931 = vunpack.c.l.b16 %v1737
        %v1932 = vunpack.c.l.b16 %v1738
        %v1933 = vunpack.c.l.b16 %v1739
        %v1934 = vunpack.c.l.b16 %v1740
        %v1935 = vunpack.c.l.b16 %v1741
        %v1936 = vpack.c.b16 %v1929, %v1928
        %v1937 = vpack.c.b16 %v1931, %v1930
        %v1938 = vpack.c.b16 %v1933, %v1932
        %v1939 = vpack.c.b16 %v1935, %v1934
        %1944 = vmatpush.bf16.msra.mxu0 0
        %1945 = vmatpush.bf16.msra.mxu0 0
        %1946 = vmatpush.bf16.msra.mxu0 0
        %1947 = vmatpush.bf16.msra.mxu0 0
        %1948 = vmatpush.bf16.msra.mxu0 %v1939
        %1949 = vmatpush.bf16.msra.mxu0 %v1938
        %1950 = vmatpush.bf16.msra.mxu0 %v1937
        %1951 = vmatpush.bf16.msra.mxu0 %v1936
        %1952 = vmatmul.bf16.gmra.mxu0 %v1831
        %v1953 = vpop.f32.mrf.mxu0
        %v1954 = vadd.f32 0.0, %v1953
        %v1955 = vpop.f32.mrf.mxu0
        %1956 = vdwg.mxu0
        %v1965 = vunpack.c.l.b16 %v1742
        %v1966 = vunpack.c.l.b16 %v1743
        %v1967 = vunpack.c.l.b16 %v1744
        %v1968 = vunpack.c.l.b16 %v1745
        %v1969 = vunpack.c.l.b16 %v1746
        %v1970 = vunpack.c.l.b16 %v1747
        %v1971 = vunpack.c.l.b16 %v1748
        %v1972 = vunpack.c.l.b16 %v1749
        %v1973 = vpack.c.b16 %v1966, %v1965
        %v1974 = vpack.c.b16 %v1968, %v1967
        %v1975 = vpack.c.b16 %v1970, %v1969
        %v1976 = vpack.c.b16 %v1972, %v1971
        %1981 = vmatpush.bf16.msra.mxu0 0
        %1982 = vmatpush.bf16.msra.mxu0 0
        %1983 = vmatpush.bf16.msra.mxu0 0
        %1984 = vmatpush.bf16.msra.mxu0 0
        %1985 = vmatpush.bf16.msra.mxu0 %v1976
        %1986 = vmatpush.bf16.msra.mxu0 %v1975
        %1987 = vmatpush.bf16.msra.mxu0 %v1974
        %1988 = vmatpush.bf16.msra.mxu0 %v1973
        %1989 = vmatmul.bf16.gmra.mxu0 %v1831
        %v1990 = vpop.f32.mrf.mxu0
        %v1991 = vadd.f32 0.0, %v1990
        %v1992 = vpop.f32.mrf.mxu0
        %1993 = vdwg.mxu0
        %v2002 = vunpack.c.l.b16 %v1750
        %v2003 = vunpack.c.l.b16 %v1751
        %v2004 = vunpack.c.l.b16 %v1752
        %v2005 = vunpack.c.l.b16 %v1753
        %v2006 = vunpack.c.l.b16 %v1754
        %v2007 = vunpack.c.l.b16 %v1755
        %v2008 = vunpack.c.l.b16 %v1756
        %v2009 = vunpack.c.l.b16 %v1757
        %v2010 = vpack.c.b16 %v2003, %v2002
        %v2011 = vpack.c.b16 %v2005, %v2004
        %v2012 = vpack.c.b16 %v2007, %v2006
        %v2013 = vpack.c.b16 %v2009, %v2008
        %2018 = vmatpush.bf16.msra.mxu0 0
        %2019 = vmatpush.bf16.msra.mxu0 0
        %2020 = vmatpush.bf16.msra.mxu0 0
        %2021 = vmatpush.bf16.msra.mxu0 0
        %2022 = vmatpush.bf16.msra.mxu0 %v2013
        %2023 = vmatpush.bf16.msra.mxu0 %v2012
        %2024 = vmatpush.bf16.msra.mxu0 %v2011
        %2025 = vmatpush.bf16.msra.mxu0 %v2010
        %2026 = vmatmul.bf16.gmra.mxu0 %v1831
        %v2027 = vpop.f32.mrf.mxu0
        %v2028 = vadd.f32 0.0, %v2027
        %v2029 = vpop.f32.mrf.mxu0
        %2030 = vdwg.mxu0
        %v2039 = vunpack.c.l.b16 %v1758
        %v2040 = vunpack.c.l.b16 %v1759
        %v2041 = vunpack.c.l.b16 %v1760
        %v2042 = vunpack.c.l.b16 %v1761
        %v2043 = vunpack.c.l.b16 %v1762
        %v2044 = vunpack.c.l.b16 %v1763
        %v2045 = vunpack.c.l.b16 %v1764
        %v2046 = vunpack.c.l.b16 %v1765
        %v2047 = vpack.c.b16 %v2040, %v2039
        %v2048 = vpack.c.b16 %v2042, %v2041
        %v2049 = vpack.c.b16 %v2044, %v2043
        %v2050 = vpack.c.b16 %v2046, %v2045
        %2055 = vmatpush.bf16.msra.mxu0 0
        %2056 = vmatpush.bf16.msra.mxu0 0
        %2057 = vmatpush.bf16.msra.mxu0 0
        %2058 = vmatpush.bf16.msra.mxu0 0
        %2059 = vmatpush.bf16.msra.mxu0 %v2050
        %2060 = vmatpush.bf16.msra.mxu0 %v2049
        %2061 = vmatpush.bf16.msra.mxu0 %v2048
        %2062 = vmatpush.bf16.msra.mxu0 %v2047
        %2063 = vmatmul.bf16.gmra.mxu0 %v1831
        %v2064 = vpop.f32.mrf.mxu0
        %v2065 = vadd.f32 0.0, %v2064
        %v2066 = vpop.f32.mrf.mxu0
        %2067 = vdwg.mxu0
        %v2076 = vunpack.c.l.b16 %v1766
        %v2077 = vunpack.c.l.b16 %v1767
        %v2078 = vunpack.c.l.b16 %v1768
        %v2079 = vunpack.c.l.b16 %v1769
        %v2080 = vunpack.c.l.b16 %v1770
        %v2081 = vunpack.c.l.b16 %v1771
        %v2082 = vunpack.c.l.b16 %v1772
        %v2083 = vunpack.c.l.b16 %v1773
        %v2084 = vpack.c.b16 %v2077, %v2076
        %v2085 = vpack.c.b16 %v2079, %v2078
        %v2086 = vpack.c.b16 %v2081, %v2080
        %v2087 = vpack.c.b16 %v2083, %v2082
        %2092 = vmatpush.bf16.msra.mxu0 0
        %2093 = vmatpush.bf16.msra.mxu0 0
        %2094 = vmatpush.bf16.msra.mxu0 0
        %2095 = vmatpush.bf16.msra.mxu0 0
        %2096 = vmatpush.bf16.msra.mxu0 %v2087
        %2097 = vmatpush.bf16.msra.mxu0 %v2086
        %2098 = vmatpush.bf16.msra.mxu0 %v2085
        %2099 = vmatpush.bf16.msra.mxu0 %v2084
        %2100 = vmatmul.bf16.gmra.mxu0 %v1831
        %v2101 = vpop.f32.mrf.mxu0
        %v2102 = vadd.f32 0.0, %v2101
        %v2103 = vpop.f32.mrf.mxu0
        %2104 = vdwg.mxu0
        %v2113 = vunpack.c.l.b16 %v1774
        %v2114 = vunpack.c.l.b16 %v1775
        %v2115 = vunpack.c.l.b16 %v1776
        %v2116 = vunpack.c.l.b16 %v1777
        %v2117 = vunpack.c.l.b16 %v1778
        %v2118 = vunpack.c.l.b16 %v1779
        %v2119 = vunpack.c.l.b16 %v1780
        %v2120 = vunpack.c.l.b16 %v1781
        %v2121 = vpack.c.b16 %v2114, %v2113
        %v2122 = vpack.c.b16 %v2116, %v2115
        %v2123 = vpack.c.b16 %v2118, %v2117
        %v2124 = vpack.c.b16 %v2120, %v2119
        %2129 = vmatpush.bf16.msra.mxu0 0
        %2130 = vmatpush.bf16.msra.mxu0 0
        %2131 = vmatpush.bf16.msra.mxu0 0
        %2132 = vmatpush.bf16.msra.mxu0 0
        %2133 = vmatpush.bf16.msra.mxu0 %v2124
        %2134 = vmatpush.bf16.msra.mxu0 %v2123
        %2135 = vmatpush.bf16.msra.mxu0 %v2122
        %2136 = vmatpush.bf16.msra.mxu0 %v2121
        %2137 = vmatmul.bf16.gmra.mxu0 %v1831
        %v2138 = vpop.f32.mrf.mxu0
        %v2139 = vadd.f32 0.0, %v2138
        %v2140 = vpop.f32.mrf.mxu0
        %2141 = vdwg.mxu0
        %v2150 = vunpack.c.l.b16 %v1782
        %v2151 = vunpack.c.l.b16 %v1783
        %v2152 = vunpack.c.l.b16 %v1784
        %v2153 = vunpack.c.l.b16 %v1785
        %v2154 = vunpack.c.l.b16 %v1786
        %v2155 = vunpack.c.l.b16 %v1787
        %v2156 = vunpack.c.l.b16 %v1788
        %v2157 = vunpack.c.l.b16 %v1789
        %v2158 = vpack.c.b16 %v2151, %v2150
        %v2159 = vpack.c.b16 %v2153, %v2152
        %v2160 = vpack.c.b16 %v2155, %v2154
        %v2161 = vpack.c.b16 %v2157, %v2156
        %2166 = vmatpush.bf16.msra.mxu0 0
        %2167 = vmatpush.bf16.msra.mxu0 0
        %2168 = vmatpush.bf16.msra.mxu0 0
        %2169 = vmatpush.bf16.msra.mxu0 0
        %2170 = vmatpush.bf16.msra.mxu0 %v2161
        %2171 = vmatpush.bf16.msra.mxu0 %v2160
        %2172 = vmatpush.bf16.msra.mxu0 %v2159
        %2173 = vmatpush.bf16.msra.mxu0 %v2158
        %2174 = vmatmul.bf16.gmra.mxu0 %v1831
        %v2175 = vpop.f32.mrf.mxu0
        %v2176 = vadd.f32 0.0, %v2175
        %v2177 = vpop.f32.mrf.mxu0
        %2178 = vdwg.mxu0
        %v2187 = vunpack.c.l.b16 %v1790
        %v2188 = vunpack.c.l.b16 %v1791
        %v2189 = vunpack.c.l.b16 %v1792
        %v2190 = vunpack.c.l.b16 %v1793
        %v2191 = vunpack.c.l.b16 %v1794
        %v2192 = vunpack.c.l.b16 %v1795
        %v2193 = vunpack.c.l.b16 %v1796
        %v2194 = vunpack.c.l.b16 %v1797
        %v2195 = vpack.c.b16 %v2188, %v2187
        %v2196 = vpack.c.b16 %v2190, %v2189
        %v2197 = vpack.c.b16 %v2192, %v2191
        %v2198 = vpack.c.b16 %v2194, %v2193
        %2203 = vmatpush.bf16.msra.mxu0 0
        %2204 = vmatpush.bf16.msra.mxu0 0
        %2205 = vmatpush.bf16.msra.mxu0 0
        %2206 = vmatpush.bf16.msra.mxu0 0
        %2207 = vmatpush.bf16.msra.mxu0 %v2198
        %2208 = vmatpush.bf16.msra.mxu0 %v2197
        %2209 = vmatpush.bf16.msra.mxu0 %v2196
        %2210 = vmatpush.bf16.msra.mxu0 %v2195
        %2211 = vmatmul.bf16.gmra.mxu0 %v1831
        %v2212 = vpop.f32.mrf.mxu0
        %v2213 = vadd.f32 0.0, %v2212
        %v2214 = vpop.f32.mrf.mxu0
        %2215 = vdwg.mxu0
        %v2224 = vunpack.c.l.b16 %v1798
        %v2225 = vunpack.c.l.b16 %v1799
        %v2226 = vunpack.c.l.b16 %v1800
        %v2227 = vunpack.c.l.b16 %v1801
        %v2228 = vunpack.c.l.b16 %v1802
        %v2229 = vunpack.c.l.b16 %v1803
        %v2230 = vunpack.c.l.b16 %v1804
        %v2231 = vunpack.c.l.b16 %v1805
        %v2232 = vpack.c.b16 %v2225, %v2224
        %v2233 = vpack.c.b16 %v2227, %v2226
        %v2234 = vpack.c.b16 %v2229, %v2228
        %v2235 = vpack.c.b16 %v2231, %v2230
        %2240 = vmatpush.bf16.msra.mxu0 0
        %2241 = vmatpush.bf16.msra.mxu0 0
        %2242 = vmatpush.bf16.msra.mxu0 0
        %2243 = vmatpush.bf16.msra.mxu0 0
        %2244 = vmatpush.bf16.msra.mxu0 %v2235
        %2245 = vmatpush.bf16.msra.mxu0 %v2234
        %2246 = vmatpush.bf16.msra.mxu0 %v2233
        %2247 = vmatpush.bf16.msra.mxu0 %v2232
        %2248 = vmatmul.bf16.gmra.mxu0 %v1831
        %v2249 = vpop.f32.mrf.mxu0
        %v2250 = vadd.f32 0.0, %v2249
        %v2251 = vpop.f32.mrf.mxu0
        %2252 = vdwg.mxu0
        %v2253 = vpack.c.bf16 %v1843, %v1843
        %v2254 = vpack.c.bf16 %v1880, %v1880
        %v2255 = vpack.c.bf16 %v1917, %v1917
        %v2256 = vpack.c.bf16 %v1954, %v1954
        %v2257 = vpack.c.bf16 %v1991, %v1991
        %v2258 = vpack.c.bf16 %v2028, %v2028
        %v2259 = vpack.c.bf16 %v2065, %v2065
        %v2260 = vpack.c.bf16 %v2102, %v2102
        %v2262 = vsel %vm1145, %v2253, 0
        %v2265 = vsel %vm1145, %v2257, 0
        %2267 = vmatpush.bf16.xpose.msra.mxu0 0
        %2268 = vmatpush.bf16.xpose.msra.mxu0 0
        %2269 = vmatpush.bf16.xpose.msra.mxu0 0
        %2270 = vmatpush.bf16.xpose.msra.mxu0 0
        %2271 = vmatpush.bf16.xpose.msra.mxu0 0
        %2272 = vmatpush.bf16.xpose.msra.mxu0 0
        %2273 = vmatpush.bf16.xpose.msra.mxu0 0
        %2274 = vmatpush.bf16.xpose.msra.mxu0 %v2265
        %2275 = vmatmul.bf16.gmra.mxu0 %v2262
        %v2276 = vpop.f32.mrf.mxu0
        %v2277 = vadd.f32 %v536, %v2276
        %v2278 = vpop.f32.mrf.mxu0
        %2279 = vdwg.mxu0
        %v2281 = vsel %vm1145, %v2254, 0
        %v2284 = vsel %vm1145, %v2258, 0
        %2286 = vmatpush.bf16.xpose.msra.mxu0 0
        %2287 = vmatpush.bf16.xpose.msra.mxu0 0
        %2288 = vmatpush.bf16.xpose.msra.mxu0 0
        %2289 = vmatpush.bf16.xpose.msra.mxu0 0
        %2290 = vmatpush.bf16.xpose.msra.mxu0 0
        %2291 = vmatpush.bf16.xpose.msra.mxu0 0
        %2292 = vmatpush.bf16.xpose.msra.mxu0 0
        %2293 = vmatpush.bf16.xpose.msra.mxu0 %v2284
        %2294 = vmatmul.bf16.gmra.mxu0 %v2281
        %v2295 = vpop.f32.mrf.mxu0
        %v2296 = vadd.f32 %v536, %v2295
        %v2297 = vpop.f32.mrf.mxu0
        %2298 = vdwg.mxu0
        %v2300 = vsel %vm1145, %v2255, 0
        %v2303 = vsel %vm1145, %v2259, 0
        %2305 = vmatpush.bf16.xpose.msra.mxu0 0
        %2306 = vmatpush.bf16.xpose.msra.mxu0 0
        %2307 = vmatpush.bf16.xpose.msra.mxu0 0
        %2308 = vmatpush.bf16.xpose.msra.mxu0 0
        %2309 = vmatpush.bf16.xpose.msra.mxu0 0
        %2310 = vmatpush.bf16.xpose.msra.mxu0 0
        %2311 = vmatpush.bf16.xpose.msra.mxu0 0
        %2312 = vmatpush.bf16.xpose.msra.mxu0 %v2303
        %2313 = vmatmul.bf16.gmra.mxu0 %v2300
        %v2314 = vpop.f32.mrf.mxu0
        %v2315 = vadd.f32 %v536, %v2314
        %v2316 = vpop.f32.mrf.mxu0
        %2317 = vdwg.mxu0
        %v2319 = vsel %vm1145, %v2256, 0
        %v2322 = vsel %vm1145, %v2260, 0
        %2324 = vmatpush.bf16.xpose.msra.mxu0 0
        %2325 = vmatpush.bf16.xpose.msra.mxu0 0
        %2326 = vmatpush.bf16.xpose.msra.mxu0 0
        %2327 = vmatpush.bf16.xpose.msra.mxu0 0
        %2328 = vmatpush.bf16.xpose.msra.mxu0 0
        %2329 = vmatpush.bf16.xpose.msra.mxu0 0
        %2330 = vmatpush.bf16.xpose.msra.mxu0 0
        %2331 = vmatpush.bf16.xpose.msra.mxu0 %v2322
        %2332 = vmatmul.bf16.gmra.mxu0 %v2319
        %v2333 = vpop.f32.mrf.mxu0
        %v2334 = vadd.f32 %v536, %v2333
        %v2335 = vpop.f32.mrf.mxu0
        %2336 = vdwg.mxu0
        %v2337 = vsel %vm1222, %v2277, -inf
        %2338 = vmax.xlane.f32.xlu0 %v2337
        %v2339 = vpop.xlane.xlu0 %2338
        %v2340 = vsel %vm1222, %v2296, -inf
        %2341 = vmax.xlane.f32.xlu0 %v2340
        %v2342 = vpop.xlane.xlu0 %2341
        %v2343 = vsel %vm1222, %v2315, -inf
        %2344 = vmax.xlane.f32.xlu0 %v2343
        %v2345 = vpop.xlane.xlu0 %2344
        %v2346 = vsel %vm1222, %v2334, -inf
        %2347 = vmax.xlane.f32.xlu0 %v2346
        %v2348 = vpop.xlane.xlu0 %2347
        %v2349 = vsub.f32 %v2277, %v2339
        %v2350 = vsub.f32 %v2296, %v2342
        %v2351 = vsub.f32 %v2315, %v2345
        %v2352 = vsub.f32 %v2334, %v2348
        %v2353 = vmul.f32 %v2349, 1.442695
        %v2354 = vpow.pop %v2353
        %v2355 = vmul.f32 %v2350, 1.442695
        %v2356 = vpow.pop %v2355
        %v2357 = vmul.f32 %v2351, 1.442695
        %v2358 = vpow.pop %v2357
        %v2359 = vmul.f32 %v2352, 1.442695
        %v2360 = vpow.pop %v2359
        %v2361 = vsel %vm1222, %v2354, 0.0
        %2362 = vadd.xlane.f32.xlu0 %v2361
        %v2363 = vpop.xlane.xlu0 %2362
        %v2364 = vsel %vm1222, %v2356, 0.0
        %2365 = vadd.xlane.f32.xlu0 %v2364
        %v2366 = vpop.xlane.xlu0 %2365
        %v2367 = vsel %vm1222, %v2358, 0.0
        %2368 = vadd.xlane.f32.xlu0 %v2367
        %v2369 = vpop.xlane.xlu0 %2368
        %v2370 = vsel %vm1222, %v2360, 0.0
        %2371 = vadd.xlane.f32.xlu0 %v2370
        %v2372 = vpop.xlane.xlu0 %2371
        %v2373 = vrcp.pop %v2363
        %v2374 = vrcp.pop %v2366
        %v2375 = vrcp.pop %v2369
        %v2376 = vrcp.pop %v2372
        %v2377 = vmul.f32 %v2354, %v2373
        %v2378 = vmul.f32 %v2356, %v2374
        %v2379 = vmul.f32 %v2358, %v2375
        %v2380 = vmul.f32 %v2360, %v2376
        %v2381 = vpack.c.bf16 %v2377, %v2377
        %v2382 = vpack.c.bf16 %v2378, %v2378
        %v2383 = vpack.c.bf16 %v2379, %v2379
        %v2384 = vpack.c.bf16 %v2380, %v2380
        %v2385 = vpack.c.bf16 %v2139, %v2139
        %v2386 = vpack.c.bf16 %v2176, %v2176
        %v2387 = vpack.c.bf16 %v2213, %v2213
        %v2388 = vpack.c.bf16 %v2250, %v2250
        %v2390 = vsel %vm1222, %v2381, 0
        %v2393 = vsel %vm1278, %v2385, 0
        %2395 = vmatpush.bf16.msra.mxu0 0
        %2396 = vmatpush.bf16.msra.mxu0 0
        %2397 = vmatpush.bf16.msra.mxu0 0
        %2398 = vmatpush.bf16.msra.mxu0 0
        %2399 = vmatpush.bf16.msra.mxu0 0
        %2400 = vmatpush.bf16.msra.mxu0 0
        %2401 = vmatpush.bf16.msra.mxu0 0
        %2402 = vmatpush.bf16.msra.mxu0 %v2393
        %2403 = vmatmul.bf16.gmra.mxu0 %v2390
        %v2404 = vpop.f32.mrf.mxu0
        %v2405 = vadd.f32 0.0, %v2404
        %v2406 = vpop.f32.mrf.mxu0
        %2407 = vdwg.mxu0
        %v2409 = vsel %vm1222, %v2382, 0
        %v2412 = vsel %vm1278, %v2386, 0
        %2414 = vmatpush.bf16.msra.mxu0 0
        %2415 = vmatpush.bf16.msra.mxu0 0
        %2416 = vmatpush.bf16.msra.mxu0 0
        %2417 = vmatpush.bf16.msra.mxu0 0
        %2418 = vmatpush.bf16.msra.mxu0 0
        %2419 = vmatpush.bf16.msra.mxu0 0
        %2420 = vmatpush.bf16.msra.mxu0 0
        %2421 = vmatpush.bf16.msra.mxu0 %v2412
        %2422 = vmatmul.bf16.gmra.mxu0 %v2409
        %v2423 = vpop.f32.mrf.mxu0
        %v2424 = vadd.f32 0.0, %v2423
        %v2425 = vpop.f32.mrf.mxu0
        %2426 = vdwg.mxu0
        %v2428 = vsel %vm1222, %v2383, 0
        %v2431 = vsel %vm1278, %v2387, 0
        %2433 = vmatpush.bf16.msra.mxu0 0
        %2434 = vmatpush.bf16.msra.mxu0 0
        %2435 = vmatpush.bf16.msra.mxu0 0
        %2436 = vmatpush.bf16.msra.mxu0 0
        %2437 = vmatpush.bf16.msra.mxu0 0
        %2438 = vmatpush.bf16.msra.mxu0 0
        %2439 = vmatpush.bf16.msra.mxu0 0
        %2440 = vmatpush.bf16.msra.mxu0 %v2431
        %2441 = vmatmul.bf16.gmra.mxu0 %v2428
        %v2442 = vpop.f32.mrf.mxu0
        %v2443 = vadd.f32 0.0, %v2442
        %v2444 = vpop.f32.mrf.mxu0
        %2445 = vdwg.mxu0
        %v2447 = vsel %vm1222, %v2384, 0
        %v2450 = vsel %vm1278, %v2388, 0
        %2452 = vmatpush.bf16.msra.mxu0 0
        %2453 = vmatpush.bf16.msra.mxu0 0
        %2454 = vmatpush.bf16.msra.mxu0 0
        %2455 = vmatpush.bf16.msra.mxu0 0
        %2456 = vmatpush.bf16.msra.mxu0 0
        %2457 = vmatpush.bf16.msra.mxu0 0
        %2458 = vmatpush.bf16.msra.mxu0 0
        %2459 = vmatpush.bf16.msra.mxu0 %v2450
        %2460 = vmatmul.bf16.gmra.mxu0 %v2447
        %v2461 = vpop.f32.mrf.mxu0
        %v2462 = vadd.f32 0.0, %v2461
        %v2463 = vpop.f32.mrf.mxu0
        %2464 = vdwg.mxu0
        %v2465 = vpack.c.bf16 %v2405, %v2405
        %v2466 = vpack.c.bf16 %v2424, %v2424
        %v2467 = vpack.c.bf16 %v2443, %v2443
        %v2468 = vpack.c.bf16 %v2462, %v2462
        %s2469 = scalar_lea.vmem %s5, 32
        %v2470 = vld [vmem:[%s2469] sm:$0xf]
        %v2471 = vld [vmem:[%s2469 + $0x4] sm:$0xf]
        %v2472 = vld [vmem:[%s2469 + $0x8] sm:$0xf]
        %v2473 = vld [vmem:[%s2469 + $0xc] sm:$0xf]
        %v2474 = vld [vmem:[%s2469 + $0x10] sm:$0xf]
        %v2475 = vld [vmem:[%s2469 + $0x14] sm:$0xf]
        %v2476 = vld [vmem:[%s2469 + $0x18] sm:$0xf]
        %v2477 = vld [vmem:[%s2469 + $0x1c] sm:$0xf]
        %v2480 = vunpack.c.l.b16 %v2470
        %v2481 = vunpack.c.l.b16 %v2471
        %v2482 = vpack.c.b16 %v2481, %v2480
        %v2485 = vsel %vm1145, %v2465, 0
        %2487 = vmatpush.bf16.msra.mxu0 0
        %2488 = vmatpush.bf16.msra.mxu0 0
        %2489 = vmatpush.bf16.msra.mxu0 0
        %2490 = vmatpush.bf16.msra.mxu0 0
        %2491 = vmatpush.bf16.msra.mxu0 0
        %2492 = vmatpush.bf16.msra.mxu0 0
        %2493 = vmatpush.bf16.msra.mxu0 0
        %2494 = vmatpush.bf16.msra.mxu0 %v2482
        %2495 = vmatmul.bf16.gmra.mxu0 %v2485
        %v2496 = vpop.f32.mrf.mxu0
        %v2497 = vadd.f32 0.0, %v2496
        %v2498 = vpop.f32.mrf.mxu0
        %2499 = vdwg.mxu0
        %v2502 = vunpack.c.l.b16 %v2472
        %v2503 = vunpack.c.l.b16 %v2473
        %v2504 = vpack.c.b16 %v2503, %v2502
        %v2507 = vsel %vm1145, %v2466, 0
        %2509 = vmatpush.bf16.msra.mxu0 0
        %2510 = vmatpush.bf16.msra.mxu0 0
        %2511 = vmatpush.bf16.msra.mxu0 0
        %2512 = vmatpush.bf16.msra.mxu0 0
        %2513 = vmatpush.bf16.msra.mxu0 0
        %2514 = vmatpush.bf16.msra.mxu0 0
        %2515 = vmatpush.bf16.msra.mxu0 0
        %2516 = vmatpush.bf16.msra.mxu0 %v2504
        %2517 = vmatmul.bf16.gmra.mxu0 %v2507
        %v2518 = vpop.f32.mrf.mxu0
        %v2519 = vadd.f32 0.0, %v2518
        %v2520 = vpop.f32.mrf.mxu0
        %2521 = vdwg.mxu0
        %v2524 = vunpack.c.l.b16 %v2474
        %v2525 = vunpack.c.l.b16 %v2475
        %v2526 = vpack.c.b16 %v2525, %v2524
        %v2529 = vsel %vm1145, %v2467, 0
        %2531 = vmatpush.bf16.msra.mxu0 0
        %2532 = vmatpush.bf16.msra.mxu0 0
        %2533 = vmatpush.bf16.msra.mxu0 0
        %2534 = vmatpush.bf16.msra.mxu0 0
        %2535 = vmatpush.bf16.msra.mxu0 0
        %2536 = vmatpush.bf16.msra.mxu0 0
        %2537 = vmatpush.bf16.msra.mxu0 0
        %2538 = vmatpush.bf16.msra.mxu0 %v2526
        %2539 = vmatmul.bf16.gmra.mxu0 %v2529
        %v2540 = vpop.f32.mrf.mxu0
        %v2541 = vadd.f32 0.0, %v2540
        %v2542 = vpop.f32.mrf.mxu0
        %2543 = vdwg.mxu0
        %v2546 = vunpack.c.l.b16 %v2476
        %v2547 = vunpack.c.l.b16 %v2477
        %v2548 = vpack.c.b16 %v2547, %v2546
        %v2551 = vsel %vm1145, %v2468, 0
        %2553 = vmatpush.bf16.msra.mxu0 0
        %2554 = vmatpush.bf16.msra.mxu0 0
        %2555 = vmatpush.bf16.msra.mxu0 0
        %2556 = vmatpush.bf16.msra.mxu0 0
        %2557 = vmatpush.bf16.msra.mxu0 0
        %2558 = vmatpush.bf16.msra.mxu0 0
        %2559 = vmatpush.bf16.msra.mxu0 0
        %2560 = vmatpush.bf16.msra.mxu0 %v2548
        %2561 = vmatmul.bf16.gmra.mxu0 %v2551
        %v2562 = vpop.f32.mrf.mxu0
        %v2563 = vadd.f32 0.0, %v2562
        %v2564 = vpop.f32.mrf.mxu0
        %2565 = vdwg.mxu0
        %v2566 = vsel %vm539, %v2497, 0.0
        %v2567 = vsel %vm539, %v2519, 0.0
        %v2568 = vadd.f32 %v2566, %v2567
        %v2569 = vsel %vm539, %v2541, 0.0
        %v2570 = vadd.f32 %v2568, %v2569
        %v2571 = vsel %vm539, %v2563, 0.0
        %v2572 = vadd.f32 %v2570, %v2571
        %s2573 = scalar_lea.vmem %s6, 1
        %v2574 = vld [vmem:[%s2573] sm:$0x1]
        %v2576 = vperm.slane %v2574, 0
        %v2578 = vadd.f32 %v2572, %v2576
        %v2579 = vadd.f32 %v1657, %v2578
        %s2580 = scalar_lea.vmem %s7, 1
        %v2581 = vld [vmem:[%s2580] sm:$0x1]
        %s2582 = scalar_lea.vmem %s8, 1
        %v2583 = vld [vmem:[%s2582] sm:$0x1]
        %v2584 = vsel %vm539, %v2579, 0.0
        %2585 = vadd.xlane.f32.xlu0 %v2584
        %v2586 = vpop.xlane.xlu0 %2585
        %v2587 = vmul.f32 %v2586, %v549
        %v2588 = vsub.f32 %v2579, %v2587
        %v2589 = vmul.f32 %v2588, %v2588
        %v2590 = vsel %vm539, %v2589, 0.0
        %2591 = vadd.xlane.f32.xlu0 %v2590
        %v2592 = vpop.xlane.xlu0 %2591
        %v2593 = vmul.f32 %v2592, %v549
        %v2594 = vrsqrt.pop %v2593
        %v2595 = vmul.f32 %v2594, %v2593
        %v2596 = vmul.f32 %v2595, %v2594
        %v2597 = vmul.f32 0.5, %v2596
        %v2598 = vsub.f32 1.5, %v2597
        %v2599 = vmul.f32 %v2594, %v2598
        %v2600 = vmul.f32 %v2593, %v2599
        %vm2601 = vcmp.eq.f32.partialorder %v2593, inf
        %v2602 = vsel %vm2601, %v2593, %v2600
        %vm2603 = vcmp.eq.f32.partialorder %v2593, 0.0
        %v2604 = vand.u32 %v2593, 2147483648
        %v2605 = vsel %vm2603, %v2604, %v2602
        %v2606 = vadd.f32 %v2605, 1e-05
        %v2607 = vrcp.pop %v2606
        %v2608 = vmul.f32 %v2606, %v2607
        %v2609 = vsub.f32 1.0, %v2608
        %v2610 = vmul.f32 %v2607, %v2609
        %v2611 = vadd.f32 %v2607, %v2610
        %vm2612 = vweird.f32 %v2606
        %vm2613 = vweird.f32 %v2607
        %vm2614 = vmor %vm2612, %vm2613
        %v2615 = vsel %vm2614, %v2607, %v2611
        %v2616 = vand.u32 2147483647, %v2606
        %vm2617 = vcmp.eq.f32.partialorder %v2616, 8.507059e+37
        %v2618 = vand.u32 %v2606, 2147483648
        %v2619 = vor.u32 1.1754944e-38, %v2618
        %v2620 = vsel %vm2617, %v2619, %v2615
        %v2621 = vmul.f32 %v2588, %v2620
        %v2623 = vperm.slane %v2581, 0
        %v2625 = vmul.f32 %v2621, %v2623
        %v2627 = vperm.slane %v2583, 0
        %v2629 = vadd.f32 %v2625, %v2627
        %v2630 = vpack.c.bf16 %v2629, %v2629
        %s2631 = scalar_lea.vmem %s9, 32
        %v2632 = vld [vmem:[%s2631] sm:$0xf]
        %v2633 = vld [vmem:[%s2631 + $0x4] sm:$0xf]
        %v2634 = vld [vmem:[%s2631 + $0x8] sm:$0xf]
        %v2635 = vld [vmem:[%s2631 + $0xc] sm:$0xf]
        %v2636 = vld [vmem:[%s2631 + $0x10] sm:$0xf]
        %v2637 = vld [vmem:[%s2631 + $0x14] sm:$0xf]
        %v2638 = vld [vmem:[%s2631 + $0x18] sm:$0xf]
        %v2639 = vld [vmem:[%s2631 + $0x1c] sm:$0xf]
        %s2640 = scalar_lea.vmem %s10, 1
        %v2641 = vld [vmem:[%s2640] sm:$0x1]
        %v2643 = vperm.slane %v2641, 0
        %v2653 = vunpack.c.l.b16 %v2632
        %v2654 = vunpack.c.l.b16 %v2633
        %v2655 = vunpack.c.l.b16 %v2634
        %v2656 = vunpack.c.l.b16 %v2635
        %v2657 = vunpack.c.l.b16 %v2636
        %v2658 = vunpack.c.l.b16 %v2637
        %v2659 = vunpack.c.l.b16 %v2638
        %v2660 = vunpack.c.l.b16 %v2639
        %v2661 = vpack.c.b16 %v2654, %v2653
        %v2662 = vpack.c.b16 %v2656, %v2655
        %v2663 = vpack.c.b16 %v2658, %v2657
        %v2664 = vpack.c.b16 %v2660, %v2659
        %v2670 = vsel %vm539, %v2630, 0
        %2672 = vmatpush.bf16.msra.mxu0 0
        %2673 = vmatpush.bf16.msra.mxu0 0
        %2674 = vmatpush.bf16.msra.mxu0 0
        %2675 = vmatpush.bf16.msra.mxu0 0
        %2676 = vmatpush.bf16.msra.mxu0 %v2664
        %2677 = vmatpush.bf16.msra.mxu0 %v2663
        %2678 = vmatpush.bf16.msra.mxu0 %v2662
        %2679 = vmatpush.bf16.msra.mxu0 %v2661
        %2680 = vmatmul.bf16.gmra.mxu0 %v2670
        %v2681 = vpop.f32.mrf.mxu0
        %v2682 = vadd.f32 %v2643, %v2681
        %v2683 = vpop.f32.mrf.mxu0
        %2684 = vdwg.mxu0
        %v2685 = vmul.f32 %v2682, 0.5
        %v2686 = vmul.f32 %v2682, %v2682
        %v2687 = vmul.f32 %v2682, %v2686
        %v2688 = vmul.f32 %v2687, 0.044715
        %v2689 = vadd.f32 %v2682, %v2688
        %v2690 = vmul.f32 %v2689, 0.797885
        %v2691 = vtanh.pop %v2690
        %v2692 = vadd.f32 %v2691, 1.0
        %v2693 = vmul.f32 %v2685, %v2692
        %v2694 = vpack.c.bf16 %v2693, %v2693
        %s2695 = scalar_lea.vmem %s11, 64
        %v2696 = vld [vmem:[%s2695] sm:$0xf]
        %v2697 = vld [vmem:[%s2695 + $0x4] sm:$0xf]
        %v2698 = vld [vmem:[%s2695 + $0x8] sm:$0xf]
        %v2699 = vld [vmem:[%s2695 + $0xc] sm:$0xf]
        %v2700 = vld [vmem:[%s2695 + $0x10] sm:$0xf]
        %v2701 = vld [vmem:[%s2695 + $0x14] sm:$0xf]
        %v2702 = vld [vmem:[%s2695 + $0x18] sm:$0xf]
        %v2703 = vld [vmem:[%s2695 + $0x1c] sm:$0xf]
        %v2704 = vld [vmem:[%s2695 + $0x20] sm:$0xf]
        %v2705 = vld [vmem:[%s2695 + $0x24] sm:$0xf]
        %v2706 = vld [vmem:[%s2695 + $0x28] sm:$0xf]
        %v2707 = vld [vmem:[%s2695 + $0x2c] sm:$0xf]
        %v2708 = vld [vmem:[%s2695 + $0x30] sm:$0xf]
        %v2709 = vld [vmem:[%s2695 + $0x34] sm:$0xf]
        %v2710 = vld [vmem:[%s2695 + $0x38] sm:$0xf]
        %v2711 = vld [vmem:[%s2695 + $0x3c] sm:$0xf]
        %s2712 = scalar_lea.vmem %s12, 1
        %v2713 = vld [vmem:[%s2712] sm:$0x1]
        %v2715 = vperm.slane %v2713, 0
        %v2733 = vunpack.c.l.b16 %v2696
        %v2734 = vunpack.c.l.b16 %v2697
        %v2735 = vunpack.c.l.b16 %v2698
        %v2736 = vunpack.c.l.b16 %v2699
        %v2737 = vunpack.c.l.b16 %v2700
        %v2738 = vunpack.c.l.b16 %v2701
        %v2739 = vunpack.c.l.b16 %v2702
        %v2740 = vunpack.c.l.b16 %v2703
        %v2741 = vunpack.c.l.b16 %v2704
        %v2742 = vunpack.c.l.b16 %v2705
        %v2743 = vunpack.c.l.b16 %v2706
        %v2744 = vunpack.c.l.b16 %v2707
        %v2745 = vunpack.c.l.b16 %v2708
        %v2746 = vunpack.c.l.b16 %v2709
        %v2747 = vunpack.c.l.b16 %v2710
        %v2748 = vunpack.c.l.b16 %v2711
        %v2749 = vpack.c.b16 %v2734, %v2733
        %v2750 = vpack.c.b16 %v2736, %v2735
        %v2751 = vpack.c.b16 %v2738, %v2737
        %v2752 = vpack.c.b16 %v2740, %v2739
        %v2753 = vpack.c.b16 %v2742, %v2741
        %v2754 = vpack.c.b16 %v2744, %v2743
        %v2755 = vpack.c.b16 %v2746, %v2745
        %v2756 = vpack.c.b16 %v2748, %v2747
        %2765 = vmatpush.bf16.msra.mxu0 %v2756
        %2766 = vmatpush.bf16.msra.mxu0 %v2755
        %2767 = vmatpush.bf16.msra.mxu0 %v2754
        %2768 = vmatpush.bf16.msra.mxu0 %v2753
        %2769 = vmatpush.bf16.msra.mxu0 %v2752
        %2770 = vmatpush.bf16.msra.mxu0 %v2751
        %2771 = vmatpush.bf16.msra.mxu0 %v2750
        %2772 = vmatpush.bf16.msra.mxu0 %v2749
        %2773 = vmatmul.bf16.gmra.mxu0 %v2694
        %v2774 = vpop.f32.mrf.mxu0
        %v2775 = vadd.f32 %v2715, %v2774
        %v2776 = vpop.f32.mrf.mxu0
        %2777 = vdwg.mxu0
        %v2778 = vadd.f32 %v2579, %v2775
        %v2779 = vsel %vm539, %v2778, 0.0
        %2780 = vadd.xlane.f32.xlu0 %v2779
        %v2781 = vpop.xlane.xlu0 %2780
        %v2782 = vmul.f32 %v2781, %v549
        %v2783 = vsub.f32 %v2778, %v2782
        %v2784 = vmul.f32 %v2783, %v2783
        %v2785 = vsel %vm539, %v2784, 0.0
        %2786 = vadd.xlane.f32.xlu0 %v2785
        %v2787 = vpop.xlane.xlu0 %2786
        %v2788 = vmul.f32 %v2787, %v549
        %v2789 = vadd.f32 %v2788, 1e-05
        %v2790 = vrsqrt.pop %v2789
        %v2791 = vmul.f32 %v2790, %v2789
        %v2792 = vmul.f32 %v2791, %v2790
        %v2793 = vmul.f32 0.5, %v2792
        %v2794 = vsub.f32 1.5, %v2793
        %v2795 = vmul.f32 %v2790, %v2794
        %vm2796 = vweird.f32 %v2789
        %vm2797 = vweird.f32 %v2790
        %vm2798 = vmor %vm2796, %vm2797
        %v2799 = vsel %vm2798, %v2790, %v2795
        %v2800 = vmul.f32 %v2783, %v2799
        %v2801 = vld [vmem:[%s13] sm:$0x1]
        %v2803 = vperm.slane %v2801, 0
        %v2805 = vmul.f32 %v2800, %v2803
        %v2806 = vld [vmem:[%s14] sm:$0x1]
        %v2808 = vperm.slane %v2806, 0
        %v2810 = vadd.f32 %v2805, %v2808
        %v2811 = vpack.c.bf16 %v2810, %v2810
        %v2812 = vld [vmem:[%s15] sm:$0xff]
        %v2813 = vld [vmem:[%s15 + $0x8] sm:$0xff]
        %v2814 = vld [vmem:[%s15 + $0x10] sm:$0xff]
        %v2815 = vld [vmem:[%s15 + $0x18] sm:$0xff]
        %v2816 = vld [vmem:[%s15 + $0x20] sm:$0xff]
        %v2817 = vld [vmem:[%s15 + $0x28] sm:$0xff]
        %v2818 = vld [vmem:[%s15 + $0x30] sm:$0xff]
        %v2819 = vld [vmem:[%s15 + $0x38] sm:$0xff]
        %v2828 = vunpack.c.l.b16 %v2812
        %v2829 = vunpack.c.h.b16 %v2812
        %v2830 = vunpack.c.l.b16 %v2813
        %v2831 = vunpack.c.h.b16 %v2813
        %v2832 = vunpack.c.l.b16 %v2814
        %v2833 = vunpack.c.h.b16 %v2814
        %v2834 = vunpack.c.l.b16 %v2815
        %v2835 = vunpack.c.h.b16 %v2815
        %v2836 = vunpack.c.l.b16 %v2816
        %v2837 = vunpack.c.h.b16 %v2816
        %v2838 = vunpack.c.l.b16 %v2817
        %v2839 = vunpack.c.h.b16 %v2817
        %v2840 = vunpack.c.l.b16 %v2818
        %v2841 = vunpack.c.h.b16 %v2818
        %v2842 = vunpack.c.l.b16 %v2819
        %v2843 = vunpack.c.h.b16 %v2819
        %v2844 = vpack.c.b16 %v2830, %v2828
        %v2845 = vpack.c.b16 %v2831, %v2829
        %v2846 = vpack.c.b16 %v2834, %v2832
        %v2847 = vpack.c.b16 %v2835, %v2833
        %v2848 = vpack.c.b16 %v2838, %v2836
        %v2849 = vpack.c.b16 %v2839, %v2837
        %v2850 = vpack.c.b16 %v2842, %v2840
        %v2851 = vpack.c.b16 %v2843, %v2841
        %v2861 = vsel %vm539, %v2811, 0
        %2863 = vmatpush.bf16.msra.mxu0 0
        %2864 = vmatpush.bf16.msra.mxu0 0
        %2865 = vmatpush.bf16.msra.mxu0 0
        %2866 = vmatpush.bf16.msra.mxu0 0
        %2867 = vmatpush.bf16.msra.mxu0 %v2850
        %2868 = vmatpush.bf16.msra.mxu0 %v2848
        %2869 = vmatpush.bf16.msra.mxu0 %v2846
        %2870 = vmatpush.bf16.msra.mxu0 %v2844
        %2871 = vmatmul.bf16.gmra.mxu0 %v2861
        %v2872 = vpop.f32.mrf.mxu0
        %v2873 = vadd.f32 0.0, %v2872
        %v2874 = vpop.f32.mrf.mxu0
        %2875 = vdwg.mxu0
        %2876 = vmatpush.bf16.msra.mxu0 0
        %2877 = vmatpush.bf16.msra.mxu0 0
        %2878 = vmatpush.bf16.msra.mxu0 0
        %2879 = vmatpush.bf16.msra.mxu0 0
        %2880 = vmatpush.bf16.msra.mxu0 %v2851
        %2881 = vmatpush.bf16.msra.mxu0 %v2849
        %2882 = vmatpush.bf16.msra.mxu0 %v2847
        %2883 = vmatpush.bf16.msra.mxu0 %v2845
        %2884 = vmatmul.bf16.gmra.mxu0 %v2861
        %v2885 = vpop.f32.mrf.mxu0
        %v2886 = vadd.f32 0.0, %v2885
        %v2887 = vpop.f32.mrf.mxu0
        %2888 = vdwg.mxu0
        %2889 = vst [vmem:[%s525] sm:$0xff] %v2873
        %2890 = vst [vmem:[%s525 + $0x8] sm:$0xff] %v2886
        %s2891 = sand.u32 %s384, 1
        %s2892 = scalar_lea.sflag [#allocation3], %s2891
        %s2893 = sand.u32 %s384, 1
        %s2894 = smul.addr %s2893, 16
        %s2895 = scalar_lea.vmem [#allocation2], %s2894
        // Predicated region
        $region85: #{gptneo_pallas_forward.1} parent=83 // pred_check
          %p2896 = pneg %p394
        $region86: #{gptneo_pallas_forward.1} parent=83 // pred_check_branch
          %2898 = sbr.rel (%p2896) target = $region88
        $region87: #{gptneo_pallas_forward.1} parent=83 // pred_region
          %2900 = vsyncadd %s2892, 0
          %s2901 = smul.addr %s30, 2
          %s2902 = smul.addr %s2901, 8
          %s2903 = scalar_lea.hbm %s16, %s2902
          %s2905 = sshll.u32 %s2895, 4
          %s2906 = int_to_ptr.vmem [resolvable:$true] %s2905
          %s2907 = sshll.u32 %s2903, 4
          %s2908 = int_to_ptr.hbm [resolvable:$true] %s2907
          %2910 = dma.vmem_to_hbm [thread:$0]  %s2906, 256, %s2908, %s2892
        $region88: #{gptneo_pallas_forward.1} parent=83 // pred_fallthru
          _
      $region84: #{gptneo_pallas_forward.1} parent=5 // pred_fallthru
        _
      %p2911 = scmp.le.s32.totalorder 2, %s25
      // Predicated region
      $region89: #{gptneo_pallas_forward.1} parent=5 // pred_check
        %p2912 = pneg %p2911
      $region90: #{gptneo_pallas_forward.1} parent=5 // pred_check_branch
        %2914 = sbr.rel (%p2912) target = $region92
      $region91: #{gptneo_pallas_forward.1} parent=5 // pred_region
        %s2915 = ssub.s32 %s25, 2
        // Predicated region
        $region93: #{gptneo_pallas_forward.1} parent=91 // pred_check
          %p2916 = pneg %p400
        $region94: #{gptneo_pallas_forward.1} parent=91 // pred_check_branch
          %2918 = sbr.rel (%p2916) target = $region96
        $region95: #{gptneo_pallas_forward.1} parent=91 // pred_region
          %s2919 = sand.u32 %s385, 1
          %s2920 = scalar_lea.sflag [#allocation3], %s2919
          %s2921 = sand.u32 %s385, 1
          %s2922 = smul.addr %s2921, 16
          %s2923 = scalar_lea.vmem [#allocation2], %s2922
          %2925 = dma.done %s2920, 256
        $region96: #{gptneo_pallas_forward.1} parent=91 // pred_fallthru
          _
      $region92: #{gptneo_pallas_forward.1} parent=5 // pred_fallthru
        _
    $region6: #{gptneo_pallas_forward.1} parent=1 // loop_footer
      %s29 = sadd.s32 1, %s25
    $region7: #{gptneo_pallas_forward.1} parent=1 // loop_footer_branch
      %24 = sbr.rel target = $region3
    $region8: #{gptneo_pallas_forward.1} parent=1 // loop_exit
      _
    %2926 = vsyncpa [#allocation3], 1
    %s2927 = scalar_lea.sflag [#allocation3], 1
    %2928 = vsyncpa %s2927, 1

</llo_original>
